<compile_context>
chip_gen: v6e
topology: v6e:2x2x1
jax: 0.10.0
libtpu: 0.0.40
codegen_flags: <defaults>
</compile_context>

<pallas_src>
import jax
import jax.numpy as jnp
from jax import lax
from jax.experimental import pallas as pl
from jax.experimental.pallas import tpu as pltpu

EPS = 1e-5  # PyTorch BatchNorm2d default eps


def _pick_tile_h(H):
    """Largest divisor of H that is <= 8 (toy sizes exercise the multi-strip path).

    TODO(synk): for real image sizes sweep TH upward so TH*W is ~512-1024 rows of M
    (v6e roofline guidance) while keeping the double-buffered per-tile footprint
    comfortably under v7x's 64 MiB VMEM / v5e's 16 MiB scoped default.
    """
    th = 1
    for d in range(1, min(H, 8) + 1):
        if H % d == 0:
            th = d
    return th


# ----------------------------------------------------------------- pass 1: conv + BN stats

def _conv_stats_kernel(xm_ref, xh0_ref, xh1_ref, w_ref, y_ref, s1_ref, s2_ref, xs_ref):
    """3x3 conv (pad=1, no bias) on one (image, row-strip) tile + per-tile BN partial sums.

    xm_ref:  (1, TH, W+2, Cin)  bf16  padded rows [s*TH, s*TH+TH) of image n
    xh0_ref: (1, 1,  W+2, Cin)  bf16  padded row s*TH+TH      (halo)
    xh1_ref: (1, 1,  W+2, Cin)  bf16  padded row s*TH+TH+1    (halo)
    w_ref:   (9, Cin, Cout)     bf16  tap-major weights (resident across the whole grid)
    y_ref:   (1, TH, W, Cout)   f32   pre-BN conv output tile
    s1_ref:  (1, 1, 1, Cout)    f32   per-tile channel sums
    s2_ref:  (1, 1, 1, Cout)    f32   per-tile channel sums of squares
    xs_ref:  (TH+2, W+2, Cin)   bf16  VMEM scratch: strip + bottom halo rows
    """
    _, TH, Wp2, Cin = xm_ref.shape
    W = Wp2 - 2
    Cout = w_ref.shape[-1]

    # Assemble the (TH+2)-row padded strip; every row is written exactly once
    # (no full-buffer zero-fill sweeps).
    xs_ref[0:TH] = xm_ref[0]
    xs_ref[TH] = xh0_ref[0, 0]
    xs_ref[TH + 1] = xh1_ref[0, 0]

    # 9 shifted bf16 matmuls accumulated in f32 on the MXU (no im2col materialization).
    acc = jnp.zeros((TH * W, Cout), jnp.float32)
    for t in range(9):
        dy, dx = divmod(t, 3)
        patch = xs_ref[dy:dy + TH, dx:dx + W, :].reshape(TH * W, Cin)
        acc = acc + jnp.dot(patch, w_ref[t], preferred_element_type=jnp.float32)

    y_ref[...] = acc.reshape(1, TH, W, Cout)

    # One-pass BN partial statistics while acc is live (var = E[x^2] - E[x]^2 in the wrapper).
    s1_ref[...] = jnp.sum(acc, axis=0, keepdims=True).reshape(1, 1, 1, Cout)
    s2_ref[...] = jnp.sum(acc * acc, axis=0, keepdims=True).reshape(1, 1, 1, Cout)


# ----------------------------------------------------------------- pass 2: BN affine + ReLU

def _bn_relu_kernel(y_ref, scale_ref, shift_ref, o_ref):
    o_ref[...] = jnp.maximum(y_ref[...] * scale_ref[...] + shift_ref[...], 0.0)


# --------------------------------------------------------------------------------- wrapper

def single_conv_forward(x_nchw, w_oihw, bias, gamma, beta):
    """PyTorch `single_conv` forward.  x_nchw: (N, Cin, H, W) -> (N, Cout, H, W)."""
    del bias  # per-channel constant: exactly cancelled by train-mode BN mean subtraction
    N, Cin, H, W = x_nchw.shape
    Cout = w_oihw.shape[0]
    TH = _pick_tile_h(H)
    S = H // TH
    grid = (N, S)

    # NCHW -> NHWC, halo pad (padding=1), bf16 operands (one fused XLA prologue pass).
    # TODO(synk): keep activations NHWC across consecutive layers to drop this transpose
    #             and the one at the end of this function.
    x = jnp.transpose(x_nchw, (0, 2, 3, 1))
    x_pad = jnp.pad(x, ((0, 0), (1, 1), (1, 1), (0, 0))).astype(jnp.bfloat16)

    # (Cout, Cin, 3, 3) -> (kh, kw, Cin, Cout) -> (9, Cin, Cout), tap-major, bf16.
    w = jnp.transpose(w_oihw, (2, 3, 1, 0)).reshape(9, Cin, Cout).astype(jnp.bfloat16)

    # --- Pass 1: conv + per-tile BN partial sums --------------------------------------
    y_conv, s1, s2 = pl.pallas_call(
        _conv_stats_kernel,
        out_shape=(
            jax.ShapeDtypeStruct((N, H, W, Cout), jnp.float32),
            jax.ShapeDtypeStruct((N, S, 1, Cout), jnp.float32),
            jax.ShapeDtypeStruct((N, S, 1, Cout), jnp.float32),
        ),
        grid=grid,
        in_specs=[
            # main TH-row strip (block index == strip index)
            pl.BlockSpec((1, TH, W + 2, Cin), lambda n, s: (n, s, 0, 0)),
            # two 1-row halo views (block size 1 => block index == element row offset)
            pl.BlockSpec((1, 1, W + 2, Cin), lambda n, s: (n, (s + 1) * TH, 0, 0)),
            pl.BlockSpec((1, 1, W + 2, Cin), lambda n, s: (n, (s + 1) * TH + 1, 0, 0)),
            # weights: constant index_map => stay resident in VMEM across the grid
            pl.BlockSpec((9, Cin, Cout), lambda n, s: (0, 0, 0)),
        ],
        out_specs=(
            pl.BlockSpec((1, TH, W, Cout), lambda n, s: (n, s, 0, 0)),
            pl.BlockSpec((1, 1, 1, Cout), lambda n, s: (n, s, 0, 0)),
            pl.BlockSpec((1, 1, 1, Cout), lambda n, s: (n, s, 0, 0)),
        ),
        scratch_shapes=[pltpu.VMEM((TH + 2, W + 2, Cin), jnp.bfloat16)],
        compiler_params=pltpu.CompilerParams(
            dimension_semantics=("parallel", "parallel")),
    )(x_pad, x_pad, x_pad, w)

    # --- Tiny cross-tile reduction + BN affine folding (O(Cout) work, plain XLA) -------
    M = N * H * W
    mean = jnp.sum(s1, axis=(0, 1, 2)) / M
    var = jnp.sum(s2, axis=(0, 1, 2)) / M - mean * mean    # biased variance (train mode)
    inv = lax.rsqrt(var + EPS)
    scale = (gamma * inv).reshape(1, 1, 1, Cout).astype(jnp.float32)
    shift = (beta - mean * gamma * inv).reshape(1, 1, 1, Cout).astype(jnp.float32)

    # --- Pass 2: fused normalize + ReLU -------------------------------------------------
    y = pl.pallas_call(
        _bn_relu_kernel,
        out_shape=jax.ShapeDtypeStruct((N, H, W, Cout), jnp.float32),
        grid=grid,
        in_specs=[
            pl.BlockSpec((1, TH, W, Cout), lambda n, s: (n, s, 0, 0)),
            pl.BlockSpec((1, 1, 1, Cout), lambda n, s: (0, 0, 0, 0)),
            pl.BlockSpec((1, 1, 1, Cout), lambda n, s: (0, 0, 0, 0)),
        ],
        out_specs=pl.BlockSpec((1, TH, W, Cout), lambda n, s: (n, s, 0, 0)),
        compiler_params=pltpu.CompilerParams(
            dimension_semantics=("parallel", "parallel")),
    )(y_conv, scale, shift)

    # NHWC -> NCHW (PyTorch layout at the module boundary).
    return jnp.transpose(y, (0, 3, 1, 2))


# ------------------------------------------------------------------------------- reference

def _reference_forward(x_nchw, w_oihw, bias, gamma, beta):
    """Pure-JAX reference with identical train-mode BatchNorm semantics."""
    y = lax.conv_general_dilated(
        x_nchw, w_oihw, window_strides=(1, 1), padding=((1, 1), (1, 1)),
        dimension_numbers=("NCHW", "OIHW", "NCHW"),
        precision=lax.Precision.HIGHEST)
    y = y + bias[None, :, None, None]
    mean = jnp.mean(y, axis=(0, 2, 3), keepdims=True)
    var = jnp.mean((y - mean) ** 2, axis=(0, 2, 3), keepdims=True)
    y = (y - mean) * lax.rsqrt(var + EPS)
    y = y * gamma[None, :, None, None] + beta[None, :, None, None]
    return jnp.maximum(y, 0.0)


# ------------------------------------------------------------------------------------ main

if __name__ == "__main__":
    key = jax.random.PRNGKey(0)
    kx, kw, kb = jax.random.split(key, 3)

    N, Cin, H, W, Cout = 2, 4, 16, 16, 32
    x = jax.random.normal(kx, (N, Cin, H, W), jnp.float32)

    # Conv2d params (PyTorch layout: weight (Cout, Cin, 3, 3), bias (Cout,)).
    w = jax.random.normal(kw, (Cout, Cin, 3, 3), jnp.float32) * 0.1
    b = jax.random.normal(kb, (Cout,), jnp.float32) * 0.1
    # BatchNorm2d default init: weight=1, bias=0.
    gamma = jnp.ones((Cout,), jnp.float32)
    beta = jnp.zeros((Cout,), jnp.float32)

    fwd = jax.jit(single_conv_forward)
    out = fwd(x, w, b, gamma, beta)
    jax.block_until_ready(out)

    assert out.shape == (N, Cout, H, W)

    ref = _reference_forward(x, w, b, gamma, beta)
    max_err = float(jnp.max(jnp.abs(out - ref)))
    assert max_err < 2e-2, f"max abs error vs reference: {max_err}"

    print("KERNEL_OK")
</pallas_src>

<mosaic_0001>
module attributes {stable_mosaic.version = 11 : i64} {
  func.func @_conv_stats_kernel(%arg0: i32, %arg1: i32, %arg2: memref<1x8x18x4xbf16, #tpu.memory_space<vmem>>, %arg3: memref<1x1x18x4xbf16, #tpu.memory_space<vmem>>, %arg4: memref<1x1x18x4xbf16, #tpu.memory_space<vmem>>, %arg5: memref<9x4x32xbf16, #tpu.memory_space<vmem>>, %arg6: memref<1x8x16x32xf32, #tpu.memory_space<vmem>>, %arg7: memref<1x1x1x32xf32, #tpu.memory_space<vmem>>, %arg8: memref<1x1x1x32xf32, #tpu.memory_space<vmem>>, %arg9: memref<10x18x4xbf16, #tpu.memory_space<vmem>>) attributes {dimension_semantics = [#tpu.dimension_semantics<parallel>, #tpu.dimension_semantics<parallel>], iteration_bounds = array<i64: 2, 2>, scalar_prefetch = 0 : i64, scratch_operands = 1 : i64, tpu.core_type = #tpu.core_type<tc>, window_params = [{transform_indices = @transform_0, window_bounds = array<i64: 1, 8, 18, 4>}, {transform_indices = @transform_1, window_bounds = array<i64: 1, 1, 18, 4>}, {transform_indices = @transform_2, window_bounds = array<i64: 1, 1, 18, 4>}, {pipeline_mode = #tpu.pipeline_mode<synchronous>, transform_indices = @transform_3, window_bounds = array<i64: 9, 4, 32>}, {transform_indices = @transform_4, window_bounds = array<i64: 1, 8, 16, 32>}, {transform_indices = @transform_5, window_bounds = array<i64: 1, 1, 1, 32>}, {transform_indices = @transform_6, window_bounds = array<i64: 1, 1, 1, 32>}]} {
    %c0 = arith.constant 0 : index
    %c0_0 = arith.constant 0 : index
    %c0_1 = arith.constant 0 : index
    %c0_2 = arith.constant 0 : index
    %0 = vector.load %arg2[%c0, %c0_0, %c0_1, %c0_2] : memref<1x8x18x4xbf16, #tpu.memory_space<vmem>>, vector<1x8x18x4xbf16>
    %1 = vector.shape_cast %0 : vector<1x8x18x4xbf16> to vector<8x18x4xbf16>
    %c0_3 = arith.constant 0 : index
    %c0_4 = arith.constant 0 : index
    %c0_5 = arith.constant 0 : index
    %2 = vector.load %arg9[%c0_3, %c0_4, %c0_5] : memref<10x18x4xbf16, #tpu.memory_space<vmem>>, vector<8x18x4xbf16>
    tpu.vector_store %arg9[%c0_3, %c0_4, %c0_5], %1 {strides = array<i32>} : memref<10x18x4xbf16, #tpu.memory_space<vmem>>, vector<8x18x4xbf16>,
    %c0_6 = arith.constant 0 : index
    %c0_7 = arith.constant 0 : index
    %c0_8 = arith.constant 0 : index
    %c0_9 = arith.constant 0 : index
    %3 = vector.load %arg3[%c0_6, %c0_7, %c0_8, %c0_9] : memref<1x1x18x4xbf16, #tpu.memory_space<vmem>>, vector<1x1x18x4xbf16>
    %4 = vector.shape_cast %3 : vector<1x1x18x4xbf16> to vector<18x4xbf16>
    %c8 = arith.constant 8 : index
    %c0_10 = arith.constant 0 : index
    %c0_11 = arith.constant 0 : index
    %5 = vector.load %arg9[%c8, %c0_10, %c0_11] : memref<10x18x4xbf16, #tpu.memory_space<vmem>>, vector<1x18x4xbf16>
    %6 = vector.shape_cast %5 : vector<1x18x4xbf16> to vector<18x4xbf16>
    %7 = vector.shape_cast %4 : vector<18x4xbf16> to vector<1x18x4xbf16>
    tpu.vector_store %arg9[%c8, %c0_10, %c0_11], %7 {strides = array<i32>} : memref<10x18x4xbf16, #tpu.memory_space<vmem>>, vector<1x18x4xbf16>,
    %c0_12 = arith.constant 0 : index
    %c0_13 = arith.constant 0 : index
    %c0_14 = arith.constant 0 : index
    %c0_15 = arith.constant 0 : index
    %8 = vector.load %arg4[%c0_12, %c0_13, %c0_14, %c0_15] : memref<1x1x18x4xbf16, #tpu.memory_space<vmem>>, vector<1x1x18x4xbf16>
    %9 = vector.shape_cast %8 : vector<1x1x18x4xbf16> to vector<18x4xbf16>
    %c9 = arith.constant 9 : index
    %c0_16 = arith.constant 0 : index
    %c0_17 = arith.constant 0 : index
    %10 = vector.load %arg9[%c9, %c0_16, %c0_17] : memref<10x18x4xbf16, #tpu.memory_space<vmem>>, vector<1x18x4xbf16>
    %11 = vector.shape_cast %10 : vector<1x18x4xbf16> to vector<18x4xbf16>
    %12 = vector.shape_cast %9 : vector<18x4xbf16> to vector<1x18x4xbf16>
    tpu.vector_store %arg9[%c9, %c0_16, %c0_17], %12 {strides = array<i32>} : memref<10x18x4xbf16, #tpu.memory_space<vmem>>, vector<1x18x4xbf16>,
    %cst = arith.constant 0.000000e+00 : f32
    %13 = vector.broadcast %cst : f32 to vector<128x32xf32>
    %c0_18 = arith.constant 0 : index
    %c0_19 = arith.constant 0 : index
    %c0_20 = arith.constant 0 : index
    %14 = vector.load %arg9[%c0_18, %c0_19, %c0_20] : memref<10x18x4xbf16, #tpu.memory_space<vmem>>, vector<8x16x4xbf16>
    %15 = vector.shape_cast %14 : vector<8x16x4xbf16> to vector<128x4xbf16>
    %c0_21 = arith.constant 0 : index
    %c0_22 = arith.constant 0 : index
    %c0_23 = arith.constant 0 : index
    %16 = vector.load %arg5[%c0_21, %c0_22, %c0_23] : memref<9x4x32xbf16, #tpu.memory_space<vmem>>, vector<1x4x32xbf16>
    %17 = vector.shape_cast %16 : vector<1x4x32xbf16> to vector<4x32xbf16>
    %cst_24 = arith.constant dense<0.000000e+00> : vector<128x32xf32>
    %18 = tpu.matmul %15, %17, %cst_24 {dimension_numbers = #tpu.dot_dimension_numbers<[1], [0], [0], [1], [0, 0, 1, 1], [], []>} : vector<128x4xbf16>, vector<4x32xbf16>, vector<128x32xf32> -> vector<128x32xf32>
    %19 = arith.addf %13, %18 : vector<128x32xf32>
    %c0_25 = arith.constant 0 : index
    %c1 = arith.constant 1 : index
    %c0_26 = arith.constant 0 : index
    %20 = vector.load %arg9[%c0_25, %c1, %c0_26] : memref<10x18x4xbf16, #tpu.memory_space<vmem>>, vector<8x16x4xbf16>
    %21 = vector.shape_cast %20 : vector<8x16x4xbf16> to vector<128x4xbf16>
    %c1_27 = arith.constant 1 : index
    %c0_28 = arith.constant 0 : index
    %c0_29 = arith.constant 0 : index
    %22 = vector.load %arg5[%c1_27, %c0_28, %c0_29] : memref<9x4x32xbf16, #tpu.memory_space<vmem>>, vector<1x4x32xbf16>
    %23 = vector.shape_cast %22 : vector<1x4x32xbf16> to vector<4x32xbf16>
    %cst_30 = arith.constant dense<0.000000e+00> : vector<128x32xf32>
    %24 = tpu.matmul %21, %23, %cst_30 {dimension_numbers = #tpu.dot_dimension_numbers<[1], [0], [0], [1], [0, 0, 1, 1], [], []>} : vector<128x4xbf16>, vector<4x32xbf16>, vector<128x32xf32> -> vector<128x32xf32>
    %25 = arith.addf %19, %24 : vector<128x32xf32>
    %c0_31 = arith.constant 0 : index
    %c2 = arith.constant 2 : index
    %c0_32 = arith.constant 0 : index
    %26 = vector.load %arg9[%c0_31, %c2, %c0_32] : memref<10x18x4xbf16, #tpu.memory_space<vmem>>, vector<8x16x4xbf16>
    %27 = vector.shape_cast %26 : vector<8x16x4xbf16> to vector<128x4xbf16>
    %c2_33 = arith.constant 2 : index
    %c0_34 = arith.constant 0 : index
    %c0_35 = arith.constant 0 : index
    %28 = vector.load %arg5[%c2_33, %c0_34, %c0_35] : memref<9x4x32xbf16, #tpu.memory_space<vmem>>, vector<1x4x32xbf16>
    %29 = vector.shape_cast %28 : vector<1x4x32xbf16> to vector<4x32xbf16>
    %cst_36 = arith.constant dense<0.000000e+00> : vector<128x32xf32>
    %30 = tpu.matmul %27, %29, %cst_36 {dimension_numbers = #tpu.dot_dimension_numbers<[1], [0], [0], [1], [0, 0, 1, 1], [], []>} : vector<128x4xbf16>, vector<4x32xbf16>, vector<128x32xf32> -> vector<128x32xf32>
    %31 = arith.addf %25, %30 : vector<128x32xf32>
    %c1_37 = arith.constant 1 : index
    %c0_38 = arith.constant 0 : index
    %c0_39 = arith.constant 0 : index
    %32 = vector.load %arg9[%c1_37, %c0_38, %c0_39] : memref<10x18x4xbf16, #tpu.memory_space<vmem>>, vector<8x16x4xbf16>
    %33 = vector.shape_cast %32 : vector<8x16x4xbf16> to vector<128x4xbf16>
    %c3 = arith.constant 3 : index
    %c0_40 = arith.constant 0 : index
    %c0_41 = arith.constant 0 : index
    %34 = vector.load %arg5[%c3, %c0_40, %c0_41] : memref<9x4x32xbf16, #tpu.memory_space<vmem>>, vector<1x4x32xbf16>
    %35 = vector.shape_cast %34 : vector<1x4x32xbf16> to vector<4x32xbf16>
    %cst_42 = arith.constant dense<0.000000e+00> : vector<128x32xf32>
    %36 = tpu.matmul %33, %35, %cst_42 {dimension_numbers = #tpu.dot_dimension_numbers<[1], [0], [0], [1], [0, 0, 1, 1], [], []>} : vector<128x4xbf16>, vector<4x32xbf16>, vector<128x32xf32> -> vector<128x32xf32>
    %37 = arith.addf %31, %36 : vector<128x32xf32>
    %c1_43 = arith.constant 1 : index
    %c1_44 = arith.constant 1 : index
    %c0_45 = arith.constant 0 : index
    %38 = vector.load %arg9[%c1_43, %c1_44, %c0_45] : memref<10x18x4xbf16, #tpu.memory_space<vmem>>, vector<8x16x4xbf16>
    %39 = vector.shape_cast %38 : vector<8x16x4xbf16> to vector<128x4xbf16>
    %c4 = arith.constant 4 : index
    %c0_46 = arith.constant 0 : index
    %c0_47 = arith.constant 0 : index
    %40 = vector.load %arg5[%c4, %c0_46, %c0_47] : memref<9x4x32xbf16, #tpu.memory_space<vmem>>, vector<1x4x32xbf16>
    %41 = vector.shape_cast %40 : vector<1x4x32xbf16> to vector<4x32xbf16>
    %cst_48 = arith.constant dense<0.000000e+00> : vector<128x32xf32>
    %42 = tpu.matmul %39, %41, %cst_48 {dimension_numbers = #tpu.dot_dimension_numbers<[1], [0], [0], [1], [0, 0, 1, 1], [], []>} : vector<128x4xbf16>, vector<4x32xbf16>, vector<128x32xf32> -> vector<128x32xf32>
    %43 = arith.addf %37, %42 : vector<128x32xf32>
    %c1_49 = arith.constant 1 : index
    %c2_50 = arith.constant 2 : index
    %c0_51 = arith.constant 0 : index
    %44 = vector.load %arg9[%c1_49, %c2_50, %c0_51] : memref<10x18x4xbf16, #tpu.memory_space<vmem>>, vector<8x16x4xbf16>
    %45 = vector.shape_cast %44 : vector<8x16x4xbf16> to vector<128x4xbf16>
    %c5 = arith.constant 5 : index
    %c0_52 = arith.constant 0 : index
    %c0_53 = arith.constant 0 : index
    %46 = vector.load %arg5[%c5, %c0_52, %c0_53] : memref<9x4x32xbf16, #tpu.memory_space<vmem>>, vector<1x4x32xbf16>
    %47 = vector.shape_cast %46 : vector<1x4x32xbf16> to vector<4x32xbf16>
    %cst_54 = arith.constant dense<0.000000e+00> : vector<128x32xf32>
    %48 = tpu.matmul %45, %47, %cst_54 {dimension_numbers = #tpu.dot_dimension_numbers<[1], [0], [0], [1], [0, 0, 1, 1], [], []>} : vector<128x4xbf16>, vector<4x32xbf16>, vector<128x32xf32> -> vector<128x32xf32>
    %49 = arith.addf %43, %48 : vector<128x32xf32>
    %c2_55 = arith.constant 2 : index
    %c0_56 = arith.constant 0 : index
    %c0_57 = arith.constant 0 : index
    %50 = vector.load %arg9[%c2_55, %c0_56, %c0_57] : memref<10x18x4xbf16, #tpu.memory_space<vmem>>, vector<8x16x4xbf16>
    %51 = vector.shape_cast %50 : vector<8x16x4xbf16> to vector<128x4xbf16>
    %c6 = arith.constant 6 : index
    %c0_58 = arith.constant 0 : index
    %c0_59 = arith.constant 0 : index
    %52 = vector.load %arg5[%c6, %c0_58, %c0_59] : memref<9x4x32xbf16, #tpu.memory_space<vmem>>, vector<1x4x32xbf16>
    %53 = vector.shape_cast %52 : vector<1x4x32xbf16> to vector<4x32xbf16>
    %cst_60 = arith.constant dense<0.000000e+00> : vector<128x32xf32>
    %54 = tpu.matmul %51, %53, %cst_60 {dimension_numbers = #tpu.dot_dimension_numbers<[1], [0], [0], [1], [0, 0, 1, 1], [], []>} : vector<128x4xbf16>, vector<4x32xbf16>, vector<128x32xf32> -> vector<128x32xf32>
    %55 = arith.addf %49, %54 : vector<128x32xf32>
    %c2_61 = arith.constant 2 : index
    %c1_62 = arith.constant 1 : index
    %c0_63 = arith.constant 0 : index
    %56 = vector.load %arg9[%c2_61, %c1_62, %c0_63] : memref<10x18x4xbf16, #tpu.memory_space<vmem>>, vector<8x16x4xbf16>
    %57 = vector.shape_cast %56 : vector<8x16x4xbf16> to vector<128x4xbf16>
    %c7 = arith.constant 7 : index
    %c0_64 = arith.constant 0 : index
    %c0_65 = arith.constant 0 : index
    %58 = vector.load %arg5[%c7, %c0_64, %c0_65] : memref<9x4x32xbf16, #tpu.memory_space<vmem>>, vector<1x4x32xbf16>
    %59 = vector.shape_cast %58 : vector<1x4x32xbf16> to vector<4x32xbf16>
    %cst_66 = arith.constant dense<0.000000e+00> : vector<128x32xf32>
    %60 = tpu.matmul %57, %59, %cst_66 {dimension_numbers = #tpu.dot_dimension_numbers<[1], [0], [0], [1], [0, 0, 1, 1], [], []>} : vector<128x4xbf16>, vector<4x32xbf16>, vector<128x32xf32> -> vector<128x32xf32>
    %61 = arith.addf %55, %60 : vector<128x32xf32>
    %c2_67 = arith.constant 2 : index
    %c2_68 = arith.constant 2 : index
    %c0_69 = arith.constant 0 : index
    %62 = vector.load %arg9[%c2_67, %c2_68, %c0_69] : memref<10x18x4xbf16, #tpu.memory_space<vmem>>, vector<8x16x4xbf16>
    %63 = vector.shape_cast %62 : vector<8x16x4xbf16> to vector<128x4xbf16>
    %c8_70 = arith.constant 8 : index
    %c0_71 = arith.constant 0 : index
    %c0_72 = arith.constant 0 : index
    %64 = vector.load %arg5[%c8_70, %c0_71, %c0_72] : memref<9x4x32xbf16, #tpu.memory_space<vmem>>, vector<1x4x32xbf16>
    %65 = vector.shape_cast %64 : vector<1x4x32xbf16> to vector<4x32xbf16>
    %cst_73 = arith.constant dense<0.000000e+00> : vector<128x32xf32>
    %66 = tpu.matmul %63, %65, %cst_73 {dimension_numbers = #tpu.dot_dimension_numbers<[1], [0], [0], [1], [0, 0, 1, 1], [], []>} : vector<128x4xbf16>, vector<4x32xbf16>, vector<128x32xf32> -> vector<128x32xf32>
    %67 = arith.addf %61, %66 : vector<128x32xf32>
    %68 = vector.shape_cast %67 : vector<128x32xf32> to vector<1x8x16x32xf32>
    %c0_74 = arith.constant 0 : index
    %c0_75 = arith.constant 0 : index
    %c0_76 = arith.constant 0 : index
    %c0_77 = arith.constant 0 : index
    %69 = vector.load %arg6[%c0_74, %c0_75, %c0_76, %c0_77] : memref<1x8x16x32xf32, #tpu.memory_space<vmem>>, vector<1x8x16x32xf32>
    tpu.vector_store %arg6[%c0_74, %c0_75, %c0_76, %c0_77], %68 {strides = array<i32>} : memref<1x8x16x32xf32, #tpu.memory_space<vmem>>, vector<1x8x16x32xf32>,
    %cst_78 = arith.constant dense<0.000000e+00> : vector<32xf32>
    %70 = vector.multi_reduction <add>, %67, %cst_78 [0] : vector<128x32xf32> to vector<32xf32>
    %71 = vector.shape_cast %70 : vector<32xf32> to vector<1x32xf32>
    %72 = vector.shape_cast %71 : vector<1x32xf32> to vector<1x1x1x32xf32>
    %c0_79 = arith.constant 0 : index
    %c0_80 = arith.constant 0 : index
    %c0_81 = arith.constant 0 : index
    %c0_82 = arith.constant 0 : index
    %73 = vector.load %arg7[%c0_79, %c0_80, %c0_81, %c0_82] : memref<1x1x1x32xf32, #tpu.memory_space<vmem>>, vector<1x1x1x32xf32>
    tpu.vector_store %arg7[%c0_79, %c0_80, %c0_81, %c0_82], %72 {strides = array<i32>} : memref<1x1x1x32xf32, #tpu.memory_space<vmem>>, vector<1x1x1x32xf32>,
    %74 = arith.mulf %67, %67 : vector<128x32xf32>
    %cst_83 = arith.constant dense<0.000000e+00> : vector<32xf32>
    %75 = vector.multi_reduction <add>, %74, %cst_83 [0] : vector<128x32xf32> to vector<32xf32>
    %76 = vector.shape_cast %75 : vector<32xf32> to vector<1x32xf32>
    %77 = vector.shape_cast %76 : vector<1x32xf32> to vector<1x1x1x32xf32>
    %c0_84 = arith.constant 0 : index
    %c0_85 = arith.constant 0 : index
    %c0_86 = arith.constant 0 : index
    %c0_87 = arith.constant 0 : index
    %78 = vector.load %arg8[%c0_84, %c0_85, %c0_86, %c0_87] : memref<1x1x1x32xf32, #tpu.memory_space<vmem>>, vector<1x1x1x32xf32>
    tpu.vector_store %arg8[%c0_84, %c0_85, %c0_86, %c0_87], %77 {strides = array<i32>} : memref<1x1x1x32xf32, #tpu.memory_space<vmem>>, vector<1x1x1x32xf32>,
    return
  }
  func.func @transform_0(%arg0: i32, %arg1: i32) -> (i32, i32, i32, i32) {
    %c0_i32 = arith.constant 0 : i32
    %c0_i32_0 = arith.constant 0 : i32
    %c0_i32_1 = arith.constant 0 : i32
    return %arg0, %arg1, %c0_i32, %c0_i32_0 : i32, i32, i32, i32
  }
  func.func @transform_1(%arg0: i32, %arg1: i32) -> (i32, i32, i32, i32) {
    %c1_i32 = arith.constant 1 : i32
    %0 = arith.addi %arg1, %c1_i32 : i32
    %c8_i32 = arith.constant 8 : i32
    %1 = arith.muli %0, %c8_i32 : i32
    %c0_i32 = arith.constant 0 : i32
    %c0_i32_0 = arith.constant 0 : i32
    %c0_i32_1 = arith.constant 0 : i32
    return %arg0, %1, %c0_i32, %c0_i32_0 : i32, i32, i32, i32
  }
  func.func @transform_2(%arg0: i32, %arg1: i32) -> (i32, i32, i32, i32) {
    %c1_i32 = arith.constant 1 : i32
    %0 = arith.addi %arg1, %c1_i32 : i32
    %c8_i32 = arith.constant 8 : i32
    %1 = arith.muli %0, %c8_i32 : i32
    %c1_i32_0 = arith.constant 1 : i32
    %2 = arith.addi %1, %c1_i32_0 : i32
    %c0_i32 = arith.constant 0 : i32
    %c0_i32_1 = arith.constant 0 : i32
    %c0_i32_2 = arith.constant 0 : i32
    return %arg0, %2, %c0_i32, %c0_i32_1 : i32, i32, i32, i32
  }
  func.func @transform_3(%arg0: i32, %arg1: i32) -> (i32, i32, i32) {
    %c0_i32 = arith.constant 0 : i32
    %c0_i32_0 = arith.constant 0 : i32
    %c0_i32_1 = arith.constant 0 : i32
    %c0_i32_2 = arith.constant 0 : i32
    return %c0_i32, %c0_i32_0, %c0_i32_1 : i32, i32, i32
  }
  func.func @transform_4(%arg0: i32, %arg1: i32) -> (i32, i32, i32, i32) {
    %c0_i32 = arith.constant 0 : i32
    %c0_i32_0 = arith.constant 0 : i32
    %c0_i32_1 = arith.constant 0 : i32
    return %arg0, %arg1, %c0_i32, %c0_i32_0 : i32, i32, i32, i32
  }
  func.func @transform_5(%arg0: i32, %arg1: i32) -> (i32, i32, i32, i32) {
    %c0_i32 = arith.constant 0 : i32
    %c0_i32_0 = arith.constant 0 : i32
    %c0_i32_1 = arith.constant 0 : i32
    return %arg0, %arg1, %c0_i32, %c0_i32_0 : i32, i32, i32, i32
  }
  func.func @transform_6(%arg0: i32, %arg1: i32) -> (i32, i32, i32, i32) {
    %c0_i32 = arith.constant 0 : i32
    %c0_i32_0 = arith.constant 0 : i32
    %c0_i32_1 = arith.constant 0 : i32
    return %arg0, %arg1, %c0_i32, %c0_i32_0 : i32, i32, i32, i32
  }
}

module attributes {stable_mosaic.version = 11 : i64} {
  func.func @_bn_relu_kernel(%arg0: i32, %arg1: i32, %arg2: memref<1x8x16x32xf32, #tpu.memory_space<vmem>>, %arg3: memref<1x1x1x32xf32, #tpu.memory_space<vmem>>, %arg4: memref<1x1x1x32xf32, #tpu.memory_space<vmem>>, %arg5: memref<1x8x16x32xf32, #tpu.memory_space<vmem>>) attributes {dimension_semantics = [#tpu.dimension_semantics<parallel>, #tpu.dimension_semantics<parallel>], iteration_bounds = array<i64: 2, 2>, scalar_prefetch = 0 : i64, scratch_operands = 0 : i64, tpu.core_type = #tpu.core_type<tc>, window_params = [{transform_indices = @transform_0, window_bounds = array<i64: 1, 8, 16, 32>}, {pipeline_mode = #tpu.pipeline_mode<synchronous>, transform_indices = @transform_1, window_bounds = array<i64: 1, 1, 1, 32>}, {pipeline_mode = #tpu.pipeline_mode<synchronous>, transform_indices = @transform_2, window_bounds = array<i64: 1, 1, 1, 32>}, {transform_indices = @transform_3, window_bounds = array<i64: 1, 8, 16, 32>}]} {
    %c0 = arith.constant 0 : index
    %c0_0 = arith.constant 0 : index
    %c0_1 = arith.constant 0 : index
    %c0_2 = arith.constant 0 : index
    %0 = vector.load %arg2[%c0, %c0_0, %c0_1, %c0_2] : memref<1x8x16x32xf32, #tpu.memory_space<vmem>>, vector<1x8x16x32xf32>
    %c0_3 = arith.constant 0 : index
    %c0_4 = arith.constant 0 : index
    %c0_5 = arith.constant 0 : index
    %c0_6 = arith.constant 0 : index
    %1 = vector.load %arg3[%c0_3, %c0_4, %c0_5, %c0_6] : memref<1x1x1x32xf32, #tpu.memory_space<vmem>>, vector<1x1x1x32xf32>
    %2 = vector.broadcast %1 : vector<1x1x1x32xf32> to vector<1x8x16x32xf32>
    %3 = arith.mulf %0, %2 : vector<1x8x16x32xf32>
    %c0_7 = arith.constant 0 : index
    %c0_8 = arith.constant 0 : index
    %c0_9 = arith.constant 0 : index
    %c0_10 = arith.constant 0 : index
    %4 = vector.load %arg4[%c0_7, %c0_8, %c0_9, %c0_10] : memref<1x1x1x32xf32, #tpu.memory_space<vmem>>, vector<1x1x1x32xf32>
    %5 = vector.broadcast %4 : vector<1x1x1x32xf32> to vector<1x8x16x32xf32>
    %6 = arith.addf %3, %5 : vector<1x8x16x32xf32>
    %cst = arith.constant 0.000000e+00 : f32
    %7 = vector.broadcast %cst : f32 to vector<1x8x16x32xf32>
    %8 = arith.maximumf %6, %7 : vector<1x8x16x32xf32>
    %c0_11 = arith.constant 0 : index
    %c0_12 = arith.constant 0 : index
    %c0_13 = arith.constant 0 : index
    %c0_14 = arith.constant 0 : index
    %9 = vector.load %arg5[%c0_11, %c0_12, %c0_13, %c0_14] : memref<1x8x16x32xf32, #tpu.memory_space<vmem>>, vector<1x8x16x32xf32>
    tpu.vector_store %arg5[%c0_11, %c0_12, %c0_13, %c0_14], %8 {strides = array<i32>} : memref<1x8x16x32xf32, #tpu.memory_space<vmem>>, vector<1x8x16x32xf32>,
    return
  }
  func.func @transform_0(%arg0: i32, %arg1: i32) -> (i32, i32, i32, i32) {
    %c0_i32 = arith.constant 0 : i32
    %c0_i32_0 = arith.constant 0 : i32
    %c0_i32_1 = arith.constant 0 : i32
    return %arg0, %arg1, %c0_i32, %c0_i32_0 : i32, i32, i32, i32
  }
  func.func @transform_1(%arg0: i32, %arg1: i32) -> (i32, i32, i32, i32) {
    %c0_i32 = arith.constant 0 : i32
    %c0_i32_0 = arith.constant 0 : i32
    %c0_i32_1 = arith.constant 0 : i32
    %c0_i32_2 = arith.constant 0 : i32
    %c0_i32_3 = arith.constant 0 : i32
    return %c0_i32, %c0_i32_0, %c0_i32_1, %c0_i32_2 : i32, i32, i32, i32
  }
  func.func @transform_2(%arg0: i32, %arg1: i32) -> (i32, i32, i32, i32) {
    %c0_i32 = arith.constant 0 : i32
    %c0_i32_0 = arith.constant 0 : i32
    %c0_i32_1 = arith.constant 0 : i32
    %c0_i32_2 = arith.constant 0 : i32
    %c0_i32_3 = arith.constant 0 : i32
    return %c0_i32, %c0_i32_0, %c0_i32_1, %c0_i32_2 : i32, i32, i32, i32
  }
  func.func @transform_3(%arg0: i32, %arg1: i32) -> (i32, i32, i32, i32) {
    %c0_i32 = arith.constant 0 : i32
    %c0_i32_0 = arith.constant 0 : i32
    %c0_i32_1 = arith.constant 0 : i32
    return %arg0, %arg1, %c0_i32, %c0_i32_0 : i32, i32, i32, i32
  }
}

</mosaic_0001>

<llo_original>
// kernel: single_conv_forward.3
$region0: #{single_conv_forward.3}
  #allocation0 [shape = 'u32[]', space=smem, size = 0x4, offset = 0x4, fixed_abs, tag = 'smem constant byte address 0x4 - core index']
  #allocation1 [shape = 'u32[144,128]{1,0:T(1,128)}', space=vmem, size = 0x12000, scoped, tag = 'internal scratch']
  %s0 = inlined_call_operand.vmem [shape: f32[2,16,16,32], index: 0, kind: input, shape index: {}]
  %s1 = inlined_call_operand.vmem [shape: f32[1,1,1,32], index: 1, kind: input, shape index: {}]
  %s2 = inlined_call_operand.vmem [shape: f32[1,1,1,32], index: 2, kind: input, shape index: {}]
  %s3 = inlined_call_operand.hbm [shape: f32[2,16,16,32], index: 3, kind: output, shape index: {}]
  %s4 = sld [smem:[#allocation0]]
  $region45: #{single_conv_forward.3} parent=0
    _
  %s6 = ssub.s32 1, %s4
  %s7 = scalar_select 0, %s6, %s4
  $region1: #{single_conv_forward.3} parent=0
    #allocation2 [shape = 'u8[131072]{0}', space=vmem, size = 0x20000, scoped, tag = 'output window, operand 0']
    #allocation3 [shape = 's32[2]{0}', space=sflag, size = 0x8, scoped, tag = 'scoped memory for single_conv_forward.3']
    %8 = vsyncpa [#allocation3], 0
    %s9 = scalar_lea.sflag [#allocation3], 1
    %10 = vsyncpa %s9, 0
    loop: start=0, step=1, limit=6
    $region2: #{single_conv_forward.3} parent=1 // loop_pre_header
      _
    $region3: #{single_conv_forward.3} parent=1 // loop_header
      %s12 = sphi 0, %s16
      %p13 = scmp.ge.s32.totalorder %s12, 6
      %s19 = sphi 0, %s31
      %s20 = sphi 0, %s27
      %s21 = sphi 0, %s19
      %s22 = sphi 0, %s20
      %s23 = sphi 0, %s21
      %s24 = sphi 0, %s22
      %s36 = sphi 0, %s38
      %s39 = sphi 0, %s36
      %s40 = sphi 0, %s39
      %s56 = sphi 0, %s40
      %s60 = sphi 0, %s60
      %s62 = sphi 0, %s60
      %s63 = sphi 0, %s62
      %s77 = sphi 0, %s63
      %s81 = sphi 0, %s81
      %s83 = sphi 0, %s81
      %s84 = sphi 0, %s83
      %s98 = sphi 0, %s84
      %s106 = sphi 0, %s108
      %s109 = sphi 0, %s106
      %s110 = sphi 0, %s109
      %s126 = sphi 0, %s110
    $region4: #{single_conv_forward.3} parent=1 // loop_header_branch
      %15 = sbr.rel (%p13) target = $region8
    $region5: #{single_conv_forward.3} parent=1 // loop_body
      %s17 = ssub.s32 %s12, 1
      %s18 = ssub.s32 %s12, 2
      %s25 = sadd.s32 1, %s20
      %p26 = scmp.ge.s32.totalorder %s25, 2
      %s27 = scalar_select %p26, 0, %s25
      %s28 = sadd.s32 1, %s19
      %s29 = scalar_select %p26, %s28, %s19
      %p30 = scmp.ge.s32.totalorder %s29, 2
      %s31 = scalar_select %p30, 0, %s29
      %s32 = ssub.s32 %s19, %s31
      %s33 = ssub.s32 %s20, %s27
      %s34 = sor.u32 %s32, %s33
      %p35 = scmp.eq.s32.totalorder %s34, 0
      %s37 = sadd.s32 %s36, 1
      %s38 = scalar_select %p35, %s36, %s37
      %p41 = pneg %p35
      %p42 = scmp.eq.s32.totalorder %s12, 3
      %p43 = por %p41, %p42
      %p44 = scmp.ne.s32.totalorder %s36, %s39
      %p45 = scmp.eq.s32.totalorder %s12, 0
      %p46 = por %p44, %p45
      %p47 = scmp.ne.s32.totalorder %s36, %s39
      %p48 = scmp.eq.s32.totalorder %s17, 3
      %p49 = por %p47, %p48
      %p50 = scmp.ne.s32.totalorder %s39, %s40
      %p51 = scmp.eq.s32.totalorder %s17, 0
      %p52 = por %p50, %p51
      %p53 = scmp.ne.s32.totalorder %s39, %s40
      %p54 = scmp.eq.s32.totalorder %s18, 3
      %p55 = por %p53, %p54
      %p57 = scmp.ne.s32.totalorder %s40, %s56
      %p58 = scmp.eq.s32.totalorder %s18, 0
      %p59 = por %p57, %p58
      %s61 = sadd.s32 %s60, 1
      %p64 = scmp.eq.s32.totalorder %s12, 3
      %p65 = scmp.ne.s32.totalorder %s60, %s62
      %p66 = scmp.eq.s32.totalorder %s12, 0
      %p67 = por %p65, %p66
      %p68 = scmp.ne.s32.totalorder %s60, %s62
      %p69 = scmp.eq.s32.totalorder %s17, 3
      %p70 = por %p68, %p69
      %p71 = scmp.ne.s32.totalorder %s62, %s63
      %p72 = scmp.eq.s32.totalorder %s17, 0
      %p73 = por %p71, %p72
      %p74 = scmp.ne.s32.totalorder %s62, %s63
      %p75 = scmp.eq.s32.totalorder %s18, 3
      %p76 = por %p74, %p75
      %p78 = scmp.ne.s32.totalorder %s63, %s77
      %p79 = scmp.eq.s32.totalorder %s18, 0
      %p80 = por %p78, %p79
      %s82 = sadd.s32 %s81, 1
      %p85 = scmp.eq.s32.totalorder %s12, 3
      %p86 = scmp.ne.s32.totalorder %s81, %s83
      %p87 = scmp.eq.s32.totalorder %s12, 0
      %p88 = por %p86, %p87
      %p89 = scmp.ne.s32.totalorder %s81, %s83
      %p90 = scmp.eq.s32.totalorder %s17, 3
      %p91 = por %p89, %p90
      %p92 = scmp.ne.s32.totalorder %s83, %s84
      %p93 = scmp.eq.s32.totalorder %s17, 0
      %p94 = por %p92, %p93
      %p95 = scmp.ne.s32.totalorder %s83, %s84
      %p96 = scmp.eq.s32.totalorder %s18, 3
      %p97 = por %p95, %p96
      %p99 = scmp.ne.s32.totalorder %s84, %s98
      %p100 = scmp.eq.s32.totalorder %s18, 0
      %p101 = por %p99, %p100
      %s102 = ssub.s32 %s19, %s31
      %s103 = ssub.s32 %s20, %s27
      %s104 = sor.u32 %s102, %s103
      %p105 = scmp.eq.s32.totalorder %s104, 0
      %s107 = sadd.s32 %s106, 1
      %s108 = scalar_select %p105, %s106, %s107
      %p111 = pneg %p105
      %p112 = scmp.eq.s32.totalorder %s12, 3
      %p113 = por %p111, %p112
      %p114 = scmp.ne.s32.totalorder %s106, %s109
      %p115 = scmp.eq.s32.totalorder %s12, 0
      %p116 = por %p114, %p115
      %p117 = scmp.ne.s32.totalorder %s106, %s109
      %p118 = scmp.eq.s32.totalorder %s17, 3
      %p119 = por %p117, %p118
      %p120 = scmp.ne.s32.totalorder %s109, %s110
      %p121 = scmp.eq.s32.totalorder %s17, 0
      %p122 = por %p120, %p121
      %p123 = scmp.ne.s32.totalorder %s109, %s110
      %p124 = scmp.eq.s32.totalorder %s18, 3
      %p125 = por %p123, %p124
      %p127 = scmp.ne.s32.totalorder %s110, %s126
      %p128 = scmp.eq.s32.totalorder %s18, 0
      %p129 = por %p127, %p128
      %p130 = scmp.le.s32.totalorder 1, %s12
      %p131 = scmp.lt.s32.totalorder %s12, 5
      %p132 = pnand %p130, %p131
      %p133 = pneg %p132
      // Predicated region
      $region9: #{single_conv_forward.3} parent=5 // pred_check
        _
      $region10: #{single_conv_forward.3} parent=5 // pred_check_branch
        %135 = sbr.rel (%p132) target = $region12
      $region11: #{single_conv_forward.3} parent=5 // pred_region
        %s136 = ssub.s32 %s12, 1
        // Predicated region
        $region13: #{single_conv_forward.3} parent=11 // pred_check
          %p137 = pneg %p73
        $region14: #{single_conv_forward.3} parent=11 // pred_check_branch
          %139 = sbr.rel (%p137) target = $region16
        $region15: #{single_conv_forward.3} parent=11 // pred_region
          _
        $region16: #{single_conv_forward.3} parent=11 // pred_fallthru
          _
        // Predicated region
        $region17: #{single_conv_forward.3} parent=11 // pred_check
          %p140 = pneg %p94
        $region18: #{single_conv_forward.3} parent=11 // pred_check_branch
          %142 = sbr.rel (%p140) target = $region20
        $region19: #{single_conv_forward.3} parent=11 // pred_region
          _
        $region20: #{single_conv_forward.3} parent=11 // pred_fallthru
          _
      $region12: #{single_conv_forward.3} parent=5 // pred_fallthru
        _
      %p143 = scmp.lt.s32.totalorder %s12, 4
      // Predicated region
      $region21: #{single_conv_forward.3} parent=5 // pred_check
        %p144 = pneg %p143
      $region22: #{single_conv_forward.3} parent=5 // pred_check_branch
        %146 = sbr.rel (%p144) target = $region24
      $region23: #{single_conv_forward.3} parent=5 // pred_region
        // Predicated region
        $region25: #{single_conv_forward.3} parent=23 // pred_check
          %p147 = pneg %p46
        $region26: #{single_conv_forward.3} parent=23 // pred_check_branch
          %149 = sbr.rel (%p147) target = $region28
        $region27: #{single_conv_forward.3} parent=23 // pred_region
          %s150 = smul.u32 8, %s20
          %p151 = scmp.lt.s32.totalorder %s19, 1
          %s152 = scalar_select %p151, %s19, 1
          %p153 = scmp.lt.s32.totalorder %s150, 15
          %s154 = scalar_select %p153, %s150, 15
          %s155 = smul.addr %s154, 2
          %s156 = smul.addr %s152, 32
          %s157 = sadd.s32 %s155, %s156
          %s158 = smul.addr %s157, 8
          %s159 = scalar_lea.vmem %s0, %s158
          %s160 = smul.u32 8, %s20
        $region28: #{single_conv_forward.3} parent=23 // pred_fallthru
          _
      $region24: #{single_conv_forward.3} parent=5 // pred_fallthru
        _
      %p161 = scmp.le.s32.totalorder 1, %s12
      %p162 = scmp.lt.s32.totalorder %s12, 5
      %p163 = pnand %p161, %p162
      %p164 = pneg %p163
      // Predicated region
      $region29: #{single_conv_forward.3} parent=5 // pred_check
        _
      $region30: #{single_conv_forward.3} parent=5 // pred_check_branch
        %166 = sbr.rel (%p163) target = $region32
      $region31: #{single_conv_forward.3} parent=5 // pred_region
        %s167 = ssub.s32 %s12, 1
        %s168 = smul.u32 8, %s22
        %p169 = scmp.lt.s32.totalorder %s21, 1
        %s170 = scalar_select %p169, %s21, 1
        %p171 = scmp.lt.s32.totalorder %s168, 15
        %s172 = scalar_select %p171, %s168, 15
        %s173 = smul.addr %s172, 2
        %s174 = smul.addr %s170, 32
        %s175 = sadd.s32 %s173, %s174
        %s176 = smul.addr %s175, 8
        %s177 = scalar_lea.vmem %s0, %s176
        %p178 = pneg %p52
        %p179 = pneg %p49
        %p180 = pneg %p73
        %p181 = pneg %p70
        %p182 = pneg %p94
        %p183 = pneg %p91
        %p184 = pneg %p122
        %p185 = pneg %p119
        %s186 = sand.u32 %s109, 1
        %s187 = scalar_lea.sflag [#allocation3], %s186
        %s188 = sand.u32 %s109, 1
        %s189 = smul.addr %s188, 128
        %s190 = scalar_lea.vmem [#allocation2], %s189
        %s191 = smul.u32 8, %s22
        %p192 = scmp.lt.s32.totalorder %s21, 1
        %s193 = scalar_select %p192, %s21, 1
        %p194 = scmp.lt.s32.totalorder %s191, 15
        %s195 = scalar_select %p194, %s191, 15
        %s196 = smul.addr %s195, 2
        %s197 = smul.addr %s193, 32
        %s198 = sadd.s32 %s196, %s197
        %s199 = smul.addr %s198, 8
        %s200 = scalar_lea.vmem %s0, %s199
        %s201 = smul.u32 8, %s22
        %s202 = smul.u32 8, %s22
        %v203 = vld [vmem:[%s200] sm:$0xff]
        %v204 = vld [vmem:[%s200 + $0x8] sm:$0xff]
        %v205 = vld [vmem:[%s200 + $0x10] sm:$0xff]
        %v206 = vld [vmem:[%s200 + $0x18] sm:$0xff]
        %v207 = vld [vmem:[%s200 + $0x20] sm:$0xff]
        %v208 = vld [vmem:[%s200 + $0x28] sm:$0xff]
        %v209 = vld [vmem:[%s200 + $0x30] sm:$0xff]
        %v210 = vld [vmem:[%s200 + $0x38] sm:$0xff]
        %v211 = vld [vmem:[%s200 + $0x40] sm:$0xff]
        %v212 = vld [vmem:[%s200 + $0x48] sm:$0xff]
        %v213 = vld [vmem:[%s200 + $0x50] sm:$0xff]
        %v214 = vld [vmem:[%s200 + $0x58] sm:$0xff]
        %v215 = vld [vmem:[%s200 + $0x60] sm:$0xff]
        %v216 = vld [vmem:[%s200 + $0x68] sm:$0xff]
        %v217 = vld [vmem:[%s200 + $0x70] sm:$0xff]
        %v218 = vld [vmem:[%s200 + $0x78] sm:$0xff]
        %v219 = vld [vmem:[%s1] sm:$0x1]
        %v221 = vlaneseq
        %v222 = vshrl.u32 %v221, 7
        %v223 = vsub.s32 0, %v222
        %v224 = vrot.slane %v219, %v223
        %v226 = vmul.f32 %v203, %v224
        %v227 = vmul.f32 %v204, %v224
        %v228 = vmul.f32 %v205, %v224
        %v229 = vmul.f32 %v206, %v224
        %v230 = vmul.f32 %v207, %v224
        %v231 = vmul.f32 %v208, %v224
        %v232 = vmul.f32 %v209, %v224
        %v233 = vmul.f32 %v210, %v224
        %v234 = vmul.f32 %v211, %v224
        %v235 = vmul.f32 %v212, %v224
        %v236 = vmul.f32 %v213, %v224
        %v237 = vmul.f32 %v214, %v224
        %v238 = vmul.f32 %v215, %v224
        %v239 = vmul.f32 %v216, %v224
        %v240 = vmul.f32 %v217, %v224
        %v241 = vmul.f32 %v218, %v224
        %v242 = vld [vmem:[%s2] sm:$0x1]
        %v244 = vlaneseq
        %v245 = vshrl.u32 %v244, 7
        %v246 = vsub.s32 0, %v245
        %v247 = vrot.slane %v242, %v246
        %v249 = vadd.f32 %v226, %v247
        %v250 = vadd.f32 %v227, %v247
        %v251 = vadd.f32 %v228, %v247
        %v252 = vadd.f32 %v229, %v247
        %v253 = vadd.f32 %v230, %v247
        %v254 = vadd.f32 %v231, %v247
        %v255 = vadd.f32 %v232, %v247
        %v256 = vadd.f32 %v233, %v247
        %v257 = vadd.f32 %v234, %v247
        %v258 = vadd.f32 %v235, %v247
        %v259 = vadd.f32 %v236, %v247
        %v260 = vadd.f32 %v237, %v247
        %v261 = vadd.f32 %v238, %v247
        %v262 = vadd.f32 %v239, %v247
        %v263 = vadd.f32 %v240, %v247
        %v264 = vadd.f32 %v241, %v247
        %v265 = vmax.f32 %v249, 0.0
        %v266 = vmax.f32 %v250, 0.0
        %v267 = vmax.f32 %v251, 0.0
        %v268 = vmax.f32 %v252, 0.0
        %v269 = vmax.f32 %v253, 0.0
        %v270 = vmax.f32 %v254, 0.0
        %v271 = vmax.f32 %v255, 0.0
        %v272 = vmax.f32 %v256, 0.0
        %v273 = vmax.f32 %v257, 0.0
        %v274 = vmax.f32 %v258, 0.0
        %v275 = vmax.f32 %v259, 0.0
        %v276 = vmax.f32 %v260, 0.0
        %v277 = vmax.f32 %v261, 0.0
        %v278 = vmax.f32 %v262, 0.0
        %v279 = vmax.f32 %v263, 0.0
        %v280 = vmax.f32 %v264, 0.0
        %vm281 = vcmask 261120
        %282 = vst.msk [vmem:[%s190] sm:$0xff] %vm281, %v265
        %283 = vst.msk [vmem:[%s190 + $0x8] sm:$0xff] %vm281, %v266
        %284 = vst.msk [vmem:[%s190 + $0x10] sm:$0xff] %vm281, %v267
        %285 = vst.msk [vmem:[%s190 + $0x18] sm:$0xff] %vm281, %v268
        %286 = vst.msk [vmem:[%s190 + $0x20] sm:$0xff] %vm281, %v269
        %287 = vst.msk [vmem:[%s190 + $0x28] sm:$0xff] %vm281, %v270
        %288 = vst.msk [vmem:[%s190 + $0x30] sm:$0xff] %vm281, %v271
        %289 = vst.msk [vmem:[%s190 + $0x38] sm:$0xff] %vm281, %v272
        %290 = vst.msk [vmem:[%s190 + $0x40] sm:$0xff] %vm281, %v273
        %291 = vst.msk [vmem:[%s190 + $0x48] sm:$0xff] %vm281, %v274
        %292 = vst.msk [vmem:[%s190 + $0x50] sm:$0xff] %vm281, %v275
        %293 = vst.msk [vmem:[%s190 + $0x58] sm:$0xff] %vm281, %v276
        %294 = vst.msk [vmem:[%s190 + $0x60] sm:$0xff] %vm281, %v277
        %295 = vst.msk [vmem:[%s190 + $0x68] sm:$0xff] %vm281, %v278
        %296 = vst.msk [vmem:[%s190 + $0x70] sm:$0xff] %vm281, %v279
        %297 = vst.msk [vmem:[%s190 + $0x78] sm:$0xff] %vm281, %v280
        %s298 = sand.u32 %s109, 1
        %s299 = scalar_lea.sflag [#allocation3], %s298
        %s300 = sand.u32 %s109, 1
        %s301 = smul.addr %s300, 128
        %s302 = scalar_lea.vmem [#allocation2], %s301
        // Predicated region
        $region33: #{single_conv_forward.3} parent=31 // pred_check
          %p303 = pneg %p119
        $region34: #{single_conv_forward.3} parent=31 // pred_check_branch
          %305 = sbr.rel (%p303) target = $region36
        $region35: #{single_conv_forward.3} parent=31 // pred_region
          %s306 = smul.u32 8, %s22
          %s308 = ssub.s32 2048, 2048
          %309 = vsyncadd %s299, %s308
          %s310 = smul.addr %s306, 2
          %s311 = smul.addr %s21, 32
          %s312 = sadd.s32 %s310, %s311
          %s313 = smul.addr %s312, 128
          %s314 = scalar_lea.hbm %s3, %s313
          %s315 = sshll.u32 %s302, 4
          %s316 = int_to_ptr.vmem [resolvable:$true] %s315
          %321 = dma.vmem_to_hbm [thread:$0]  %s316, 2048, %s314, %s299, 128, 128, 8
        $region36: #{single_conv_forward.3} parent=31 // pred_fallthru
          _
      $region32: #{single_conv_forward.3} parent=5 // pred_fallthru
        _
      %p322 = scmp.le.s32.totalorder 2, %s12
      // Predicated region
      $region37: #{single_conv_forward.3} parent=5 // pred_check
        %p323 = pneg %p322
      $region38: #{single_conv_forward.3} parent=5 // pred_check_branch
        %325 = sbr.rel (%p323) target = $region40
      $region39: #{single_conv_forward.3} parent=5 // pred_region
        %s326 = ssub.s32 %s12, 2
        // Predicated region
        $region41: #{single_conv_forward.3} parent=39 // pred_check
          %p327 = pneg %p125
        $region42: #{single_conv_forward.3} parent=39 // pred_check_branch
          %329 = sbr.rel (%p327) target = $region44
        $region43: #{single_conv_forward.3} parent=39 // pred_region
          %s330 = sand.u32 %s110, 1
          %s331 = scalar_lea.sflag [#allocation3], %s330
          %s332 = sand.u32 %s110, 1
          %s333 = smul.addr %s332, 128
          %s334 = scalar_lea.vmem [#allocation2], %s333
          %335 = dma.done %s331, 2048
        $region44: #{single_conv_forward.3} parent=39 // pred_fallthru
          _
      $region40: #{single_conv_forward.3} parent=5 // pred_fallthru
        _
    $region6: #{single_conv_forward.3} parent=1 // loop_footer
      %s16 = sadd.s32 1, %s12
    $region7: #{single_conv_forward.3} parent=1 // loop_footer_branch
      %11 = sbr.rel target = $region3
    $region8: #{single_conv_forward.3} parent=1 // loop_exit
      _
    %336 = vsyncpa [#allocation3], 1
    %s337 = scalar_lea.sflag [#allocation3], 1
    %338 = vsyncpa %s337, 1

// kernel: single_conv_forward.2
$region0: #{single_conv_forward.2}
  #allocation0 [shape = 'u32[]', space=smem, size = 0x4, offset = 0x4, fixed_abs, tag = 'smem constant byte address 0x4 - core index']
  #allocation1 [shape = 'u32[144,128]{1,0:T(1,128)}', space=vmem, size = 0x12000, scoped, tag = 'internal scratch']
  #allocation2 [shape = 'bf16[10,18,4]{2,1,0:T(8,128)(2,1)}', space=vmem, size = 0xf000, scoped, tag = 'scratch operand']
  %s0 = inlined_call_operand.vmem [shape: bf16[2,18,18,4], index: 0, kind: input, shape index: {}, may-alias: {0,1,2}]
  %s1 = inlined_call_operand.vmem [shape: bf16[2,18,18,4], index: 1, kind: input, shape index: {}, may-alias: {0,1,2}]
  %s2 = inlined_call_operand.vmem [shape: bf16[2,18,18,4], index: 2, kind: input, shape index: {}, may-alias: {0,1,2}]
  %s3 = inlined_call_operand.vmem [shape: bf16[9,4,32], index: 3, kind: input, shape index: {}]
  %s4 = inlined_call_operand.vmem [shape: f32[2,16,16,32], index: 4, kind: output, shape index: {0}]
  %s5 = inlined_call_operand.vmem [shape: f32[2,2,1,32], index: 5, kind: output, shape index: {1}]
  %s6 = inlined_call_operand.vmem [shape: f32[2,2,1,32], index: 6, kind: output, shape index: {2}]
  %7 = xla_tuple %s4, %s5, %s6
  %s8 = sld [smem:[#allocation0]]
  $region65: #{single_conv_forward.2} parent=0
    _
  %s10 = ssub.s32 1, %s8
  %s11 = scalar_select 0, %s10, %s8
  loop: start=0, step=1, limit=6
  $region2: #{single_conv_forward.2} parent=0 // loop_pre_header
    _
  $region3: #{single_conv_forward.2} parent=0 // loop_header
    %s13 = sphi 0, %s17
    %p14 = scmp.ge.s32.totalorder %s13, 6
    %s20 = sphi 0, %s32
    %s21 = sphi 0, %s28
    %s22 = sphi 0, %s20
    %s23 = sphi 0, %s21
    %s24 = sphi 0, %s22
    %s25 = sphi 0, %s23
    %s37 = sphi 0, %s39
    %s40 = sphi 0, %s37
    %s41 = sphi 0, %s40
    %s57 = sphi 0, %s41
    %s69 = sphi 0, %s71
    %s72 = sphi 0, %s69
    %s73 = sphi 0, %s72
    %s89 = sphi 0, %s73
    %s103 = sphi 0, %s105
    %s106 = sphi 0, %s103
    %s107 = sphi 0, %s106
    %s123 = sphi 0, %s107
    %s127 = sphi 0, %s127
    %s129 = sphi 0, %s127
    %s130 = sphi 0, %s129
    %s144 = sphi 0, %s130
    %s152 = sphi 0, %s154
    %s155 = sphi 0, %s152
    %s156 = sphi 0, %s155
    %s172 = sphi 0, %s156
    %s180 = sphi 0, %s182
    %s183 = sphi 0, %s180
    %s184 = sphi 0, %s183
    %s200 = sphi 0, %s184
    %s208 = sphi 0, %s210
    %s211 = sphi 0, %s208
    %s212 = sphi 0, %s211
    %s228 = sphi 0, %s212
  $region4: #{single_conv_forward.2} parent=0 // loop_header_branch
    %16 = sbr.rel (%p14) target = $region8
  $region5: #{single_conv_forward.2} parent=0 // loop_body
    %s18 = ssub.s32 %s13, 1
    %s19 = ssub.s32 %s13, 2
    %s26 = sadd.s32 1, %s21
    %p27 = scmp.ge.s32.totalorder %s26, 2
    %s28 = scalar_select %p27, 0, %s26
    %s29 = sadd.s32 1, %s20
    %s30 = scalar_select %p27, %s29, %s20
    %p31 = scmp.ge.s32.totalorder %s30, 2
    %s32 = scalar_select %p31, 0, %s30
    %s33 = ssub.s32 %s20, %s32
    %s34 = ssub.s32 %s21, %s28
    %s35 = sor.u32 %s33, %s34
    %p36 = scmp.eq.s32.totalorder %s35, 0
    %s38 = sadd.s32 %s37, 1
    %s39 = scalar_select %p36, %s37, %s38
    %p42 = pneg %p36
    %p43 = scmp.eq.s32.totalorder %s13, 3
    %p44 = por %p42, %p43
    %p45 = scmp.ne.s32.totalorder %s37, %s40
    %p46 = scmp.eq.s32.totalorder %s13, 0
    %p47 = por %p45, %p46
    %p48 = scmp.ne.s32.totalorder %s37, %s40
    %p49 = scmp.eq.s32.totalorder %s18, 3
    %p50 = por %p48, %p49
    %p51 = scmp.ne.s32.totalorder %s40, %s41
    %p52 = scmp.eq.s32.totalorder %s18, 0
    %p53 = por %p51, %p52
    %p54 = scmp.ne.s32.totalorder %s40, %s41
    %p55 = scmp.eq.s32.totalorder %s19, 3
    %p56 = por %p54, %p55
    %p58 = scmp.ne.s32.totalorder %s41, %s57
    %p59 = scmp.eq.s32.totalorder %s19, 0
    %p60 = por %p58, %p59
    %s61 = sadd.s32 %s21, 1
    %s62 = smul.u32 %s61, 8
    %s63 = sadd.s32 %s28, 1
    %s64 = smul.u32 %s63, 8
    %s65 = ssub.s32 %s20, %s32
    %s66 = ssub.s32 %s62, %s64
    %s67 = sor.u32 %s65, %s66
    %p68 = scmp.eq.s32.totalorder %s67, 0
    %s70 = sadd.s32 %s69, 1
    %s71 = scalar_select %p68, %s69, %s70
    %p74 = pneg %p68
    %p75 = scmp.eq.s32.totalorder %s13, 3
    %p76 = por %p74, %p75
    %p77 = scmp.ne.s32.totalorder %s69, %s72
    %p78 = scmp.eq.s32.totalorder %s13, 0
    %p79 = por %p77, %p78
    %p80 = scmp.ne.s32.totalorder %s69, %s72
    %p81 = scmp.eq.s32.totalorder %s18, 3
    %p82 = por %p80, %p81
    %p83 = scmp.ne.s32.totalorder %s72, %s73
    %p84 = scmp.eq.s32.totalorder %s18, 0
    %p85 = por %p83, %p84
    %p86 = scmp.ne.s32.totalorder %s72, %s73
    %p87 = scmp.eq.s32.totalorder %s19, 3
    %p88 = por %p86, %p87
    %p90 = scmp.ne.s32.totalorder %s73, %s89
    %p91 = scmp.eq.s32.totalorder %s19, 0
    %p92 = por %p90, %p91
    %s93 = sadd.s32 %s21, 1
    %s94 = smul.u32 %s93, 8
    %s95 = sadd.s32 %s94, 1
    %s96 = sadd.s32 %s28, 1
    %s97 = smul.u32 %s96, 8
    %s98 = sadd.s32 %s97, 1
    %s99 = ssub.s32 %s20, %s32
    %s100 = ssub.s32 %s95, %s98
    %s101 = sor.u32 %s99, %s100
    %p102 = scmp.eq.s32.totalorder %s101, 0
    %s104 = sadd.s32 %s103, 1
    %s105 = scalar_select %p102, %s103, %s104
    %p108 = pneg %p102
    %p109 = scmp.eq.s32.totalorder %s13, 3
    %p110 = por %p108, %p109
    %p111 = scmp.ne.s32.totalorder %s103, %s106
    %p112 = scmp.eq.s32.totalorder %s13, 0
    %p113 = por %p111, %p112
    %p114 = scmp.ne.s32.totalorder %s103, %s106
    %p115 = scmp.eq.s32.totalorder %s18, 3
    %p116 = por %p114, %p115
    %p117 = scmp.ne.s32.totalorder %s106, %s107
    %p118 = scmp.eq.s32.totalorder %s18, 0
    %p119 = por %p117, %p118
    %p120 = scmp.ne.s32.totalorder %s106, %s107
    %p121 = scmp.eq.s32.totalorder %s19, 3
    %p122 = por %p120, %p121
    %p124 = scmp.ne.s32.totalorder %s107, %s123
    %p125 = scmp.eq.s32.totalorder %s19, 0
    %p126 = por %p124, %p125
    %s128 = sadd.s32 %s127, 1
    %p131 = scmp.eq.s32.totalorder %s13, 3
    %p132 = scmp.ne.s32.totalorder %s127, %s129
    %p133 = scmp.eq.s32.totalorder %s13, 0
    %p134 = por %p132, %p133
    %p135 = scmp.ne.s32.totalorder %s127, %s129
    %p136 = scmp.eq.s32.totalorder %s18, 3
    %p137 = por %p135, %p136
    %p138 = scmp.ne.s32.totalorder %s129, %s130
    %p139 = scmp.eq.s32.totalorder %s18, 0
    %p140 = por %p138, %p139
    %p141 = scmp.ne.s32.totalorder %s129, %s130
    %p142 = scmp.eq.s32.totalorder %s19, 3
    %p143 = por %p141, %p142
    %p145 = scmp.ne.s32.totalorder %s130, %s144
    %p146 = scmp.eq.s32.totalorder %s19, 0
    %p147 = por %p145, %p146
    %s148 = ssub.s32 %s20, %s32
    %s149 = ssub.s32 %s21, %s28
    %s150 = sor.u32 %s148, %s149
    %p151 = scmp.eq.s32.totalorder %s150, 0
    %s153 = sadd.s32 %s152, 1
    %s154 = scalar_select %p151, %s152, %s153
    %p157 = pneg %p151
    %p158 = scmp.eq.s32.totalorder %s13, 3
    %p159 = por %p157, %p158
    %p160 = scmp.ne.s32.totalorder %s152, %s155
    %p161 = scmp.eq.s32.totalorder %s13, 0
    %p162 = por %p160, %p161
    %p163 = scmp.ne.s32.totalorder %s152, %s155
    %p164 = scmp.eq.s32.totalorder %s18, 3
    %p165 = por %p163, %p164
    %p166 = scmp.ne.s32.totalorder %s155, %s156
    %p167 = scmp.eq.s32.totalorder %s18, 0
    %p168 = por %p166, %p167
    %p169 = scmp.ne.s32.totalorder %s155, %s156
    %p170 = scmp.eq.s32.totalorder %s19, 3
    %p171 = por %p169, %p170
    %p173 = scmp.ne.s32.totalorder %s156, %s172
    %p174 = scmp.eq.s32.totalorder %s19, 0
    %p175 = por %p173, %p174
    %s176 = ssub.s32 %s20, %s32
    %s177 = ssub.s32 %s21, %s28
    %s178 = sor.u32 %s176, %s177
    %p179 = scmp.eq.s32.totalorder %s178, 0
    %s181 = sadd.s32 %s180, 1
    %s182 = scalar_select %p179, %s180, %s181
    %p185 = pneg %p179
    %p186 = scmp.eq.s32.totalorder %s13, 3
    %p187 = por %p185, %p186
    %p188 = scmp.ne.s32.totalorder %s180, %s183
    %p189 = scmp.eq.s32.totalorder %s13, 0
    %p190 = por %p188, %p189
    %p191 = scmp.ne.s32.totalorder %s180, %s183
    %p192 = scmp.eq.s32.totalorder %s18, 3
    %p193 = por %p191, %p192
    %p194 = scmp.ne.s32.totalorder %s183, %s184
    %p195 = scmp.eq.s32.totalorder %s18, 0
    %p196 = por %p194, %p195
    %p197 = scmp.ne.s32.totalorder %s183, %s184
    %p198 = scmp.eq.s32.totalorder %s19, 3
    %p199 = por %p197, %p198
    %p201 = scmp.ne.s32.totalorder %s184, %s200
    %p202 = scmp.eq.s32.totalorder %s19, 0
    %p203 = por %p201, %p202
    %s204 = ssub.s32 %s20, %s32
    %s205 = ssub.s32 %s21, %s28
    %s206 = sor.u32 %s204, %s205
    %p207 = scmp.eq.s32.totalorder %s206, 0
    %s209 = sadd.s32 %s208, 1
    %s210 = scalar_select %p207, %s208, %s209
    %p213 = pneg %p207
    %p214 = scmp.eq.s32.totalorder %s13, 3
    %p215 = por %p213, %p214
    %p216 = scmp.ne.s32.totalorder %s208, %s211
    %p217 = scmp.eq.s32.totalorder %s13, 0
    %p218 = por %p216, %p217
    %p219 = scmp.ne.s32.totalorder %s208, %s211
    %p220 = scmp.eq.s32.totalorder %s18, 3
    %p221 = por %p219, %p220
    %p222 = scmp.ne.s32.totalorder %s211, %s212
    %p223 = scmp.eq.s32.totalorder %s18, 0
    %p224 = por %p222, %p223
    %p225 = scmp.ne.s32.totalorder %s211, %s212
    %p226 = scmp.eq.s32.totalorder %s19, 3
    %p227 = por %p225, %p226
    %p229 = scmp.ne.s32.totalorder %s212, %s228
    %p230 = scmp.eq.s32.totalorder %s19, 0
    %p231 = por %p229, %p230
    %p232 = scmp.le.s32.totalorder 1, %s13
    %p233 = scmp.lt.s32.totalorder %s13, 5
    %p234 = pnand %p232, %p233
    %p235 = pneg %p234
    // Predicated region
    $region9: #{single_conv_forward.2} parent=5 // pred_check
      _
    $region10: #{single_conv_forward.2} parent=5 // pred_check_branch
      %237 = sbr.rel (%p234) target = $region12
    $region11: #{single_conv_forward.2} parent=5 // pred_region
      %s238 = ssub.s32 %s13, 1
      // Predicated region
      $region13: #{single_conv_forward.2} parent=11 // pred_check
        %p239 = pneg %p140
      $region14: #{single_conv_forward.2} parent=11 // pred_check_branch
        %241 = sbr.rel (%p239) target = $region16
      $region15: #{single_conv_forward.2} parent=11 // pred_region
        _
      $region16: #{single_conv_forward.2} parent=11 // pred_fallthru
        _
    $region12: #{single_conv_forward.2} parent=5 // pred_fallthru
      _
    %p242 = scmp.lt.s32.totalorder %s13, 4
    // Predicated region
    $region17: #{single_conv_forward.2} parent=5 // pred_check
      %p243 = pneg %p242
    $region18: #{single_conv_forward.2} parent=5 // pred_check_branch
      %245 = sbr.rel (%p243) target = $region20
    $region19: #{single_conv_forward.2} parent=5 // pred_region
      // Predicated region
      $region21: #{single_conv_forward.2} parent=19 // pred_check
        %p246 = pneg %p47
      $region22: #{single_conv_forward.2} parent=19 // pred_check_branch
        %248 = sbr.rel (%p246) target = $region24
      $region23: #{single_conv_forward.2} parent=19 // pred_region
        %s249 = smul.u32 8, %s21
        %s250 = ssub.s32 18, %s249
        %p251 = scmp.lt.s32.totalorder %s250, 8
        %s252 = scalar_select %p251, %s250, 8
        %s253 = smul.u32 64, %s252
        %s254 = smul.u32 %s253, 3
        %p255 = scmp.lt.s32.totalorder %s20, 1
        %s256 = scalar_select %p255, %s20, 1
        %p257 = scmp.lt.s32.totalorder %s249, 17
        %s258 = scalar_select %p257, %s249, 17
        %s259 = smul.addr %s258, 3
        %s260 = smul.addr %s256, 54
        %s261 = sadd.s32 %s259, %s260
        %s262 = smul.addr %s261, 4
        %s263 = scalar_lea.vmem %s0, %s262
        %s264 = smul.u32 8, %s21
        %s265 = ssub.s32 18, %s264
        %p266 = scmp.lt.s32.totalorder %s265, 8
        %s267 = scalar_select %p266, %s265, 8
        %s268 = smul.u32 64, %s267
        %s269 = smul.u32 %s268, 3
      $region24: #{single_conv_forward.2} parent=19 // pred_fallthru
        _
      // Predicated region
      $region25: #{single_conv_forward.2} parent=19 // pred_check
        %p270 = pneg %p79
      $region26: #{single_conv_forward.2} parent=19 // pred_check_branch
        %272 = sbr.rel (%p270) target = $region28
      $region27: #{single_conv_forward.2} parent=19 // pred_region
        %s273 = sadd.s32 %s21, 1
        %s274 = smul.u32 %s273, 8
        %p275 = scmp.lt.s32.totalorder %s20, 1
        %s276 = scalar_select %p275, %s20, 1
        %p277 = scmp.lt.s32.totalorder %s274, 17
        %s278 = scalar_select %p277, %s274, 17
        %s279 = smul.addr %s278, 3
        %s280 = smul.addr %s276, 54
        %s281 = sadd.s32 %s279, %s280
        %s282 = smul.addr %s281, 4
        %s283 = scalar_lea.vmem %s1, %s282
        %s284 = sadd.s32 %s21, 1
        %s285 = smul.u32 %s284, 8
      $region28: #{single_conv_forward.2} parent=19 // pred_fallthru
        _
      // Predicated region
      $region29: #{single_conv_forward.2} parent=19 // pred_check
        %p286 = pneg %p113
      $region30: #{single_conv_forward.2} parent=19 // pred_check_branch
        %288 = sbr.rel (%p286) target = $region32
      $region31: #{single_conv_forward.2} parent=19 // pred_region
        %s289 = sadd.s32 %s21, 1
        %s290 = smul.u32 %s289, 8
        %s291 = sadd.s32 %s290, 1
        %p292 = scmp.lt.s32.totalorder %s20, 1
        %s293 = scalar_select %p292, %s20, 1
        %p294 = scmp.lt.s32.totalorder %s291, 17
        %s295 = scalar_select %p294, %s291, 17
        %s296 = smul.addr %s295, 3
        %s297 = smul.addr %s293, 54
        %s298 = sadd.s32 %s296, %s297
        %s299 = smul.addr %s298, 4
        %s300 = scalar_lea.vmem %s2, %s299
        %s301 = sadd.s32 %s21, 1
        %s302 = smul.u32 %s301, 8
        %s303 = sadd.s32 %s302, 1
      $region32: #{single_conv_forward.2} parent=19 // pred_fallthru
        _
    $region20: #{single_conv_forward.2} parent=5 // pred_fallthru
      _
    %p304 = scmp.le.s32.totalorder 1, %s13
    %p305 = scmp.lt.s32.totalorder %s13, 5
    %p306 = pnand %p304, %p305
    %p307 = pneg %p306
    // Predicated region
    $region33: #{single_conv_forward.2} parent=5 // pred_check
      _
    $region34: #{single_conv_forward.2} parent=5 // pred_check_branch
      %309 = sbr.rel (%p306) target = $region36
    $region35: #{single_conv_forward.2} parent=5 // pred_region
      %s310 = ssub.s32 %s13, 1
      %s311 = smul.u32 8, %s23
      %s312 = ssub.s32 18, %s311
      %p313 = scmp.lt.s32.totalorder %s312, 8
      %s314 = scalar_select %p313, %s312, 8
      %s315 = smul.u32 64, %s314
      %s316 = smul.u32 %s315, 3
      %p317 = scmp.lt.s32.totalorder %s22, 1
      %s318 = scalar_select %p317, %s22, 1
      %p319 = scmp.lt.s32.totalorder %s311, 17
      %s320 = scalar_select %p319, %s311, 17
      %s321 = smul.addr %s320, 3
      %s322 = smul.addr %s318, 54
      %s323 = sadd.s32 %s321, %s322
      %s324 = smul.addr %s323, 4
      %s325 = scalar_lea.vmem %s0, %s324
      %p326 = pneg %p53
      %p327 = pneg %p50
      %s328 = sadd.s32 %s23, 1
      %s329 = smul.u32 %s328, 8
      %p330 = scmp.lt.s32.totalorder %s22, 1
      %s331 = scalar_select %p330, %s22, 1
      %p332 = scmp.lt.s32.totalorder %s329, 17
      %s333 = scalar_select %p332, %s329, 17
      %s334 = smul.addr %s333, 3
      %s335 = smul.addr %s331, 54
      %s336 = sadd.s32 %s334, %s335
      %s337 = smul.addr %s336, 4
      %s338 = scalar_lea.vmem %s1, %s337
      %p339 = pneg %p85
      %p340 = pneg %p82
      %s341 = sadd.s32 %s23, 1
      %s342 = smul.u32 %s341, 8
      %s343 = sadd.s32 %s342, 1
      %p344 = scmp.lt.s32.totalorder %s22, 1
      %s345 = scalar_select %p344, %s22, 1
      %p346 = scmp.lt.s32.totalorder %s343, 17
      %s347 = scalar_select %p346, %s343, 17
      %s348 = smul.addr %s347, 3
      %s349 = smul.addr %s345, 54
      %s350 = sadd.s32 %s348, %s349
      %s351 = smul.addr %s350, 4
      %s352 = scalar_lea.vmem %s2, %s351
      %p353 = pneg %p119
      %p354 = pneg %p116
      %p355 = pneg %p140
      %p356 = pneg %p137
      %p357 = pneg %p168
      %p358 = pneg %p165
      %s359 = smul.u32 8, %s23
      %p360 = scmp.lt.s32.totalorder %s22, 1
      %s361 = scalar_select %p360, %s22, 1
      %p362 = scmp.lt.s32.totalorder %s359, 15
      %s363 = scalar_select %p362, %s359, 15
      %s364 = smul.addr %s363, 2
      %s365 = smul.addr %s361, 32
      %s366 = sadd.s32 %s364, %s365
      %s367 = smul.addr %s366, 8
      %s368 = scalar_lea.vmem %s4, %s367
      %p369 = pneg %p196
      %p370 = pneg %p193
      %p371 = scmp.lt.s32.totalorder %s22, 1
      %s372 = scalar_select %p371, %s22, 1
      %p373 = scmp.lt.s32.totalorder %s23, 1
      %s374 = scalar_select %p373, %s23, 1
      %s375 = smul.addr %s372, 2
      %s376 = sadd.s32 %s374, %s375
      %s377 = scalar_lea.vmem %s5, %s376
      %p378 = pneg %p224
      %p379 = pneg %p221
      %p380 = scmp.lt.s32.totalorder %s22, 1
      %s381 = scalar_select %p380, %s22, 1
      %p382 = scmp.lt.s32.totalorder %s23, 1
      %s383 = scalar_select %p382, %s23, 1
      %s384 = smul.addr %s381, 2
      %s385 = sadd.s32 %s383, %s384
      %s386 = scalar_lea.vmem %s6, %s385
      %s387 = smul.u32 8, %s23
      %s388 = ssub.s32 18, %s387
      %p389 = scmp.lt.s32.totalorder %s388, 8
      %s390 = scalar_select %p389, %s388, 8
      %s391 = smul.u32 64, %s390
      %s392 = smul.u32 %s391, 3
      %p393 = scmp.lt.s32.totalorder %s22, 1
      %s394 = scalar_select %p393, %s22, 1
      %p395 = scmp.lt.s32.totalorder %s387, 17
      %s396 = scalar_select %p395, %s387, 17
      %s397 = smul.addr %s396, 3
      %s398 = smul.addr %s394, 54
      %s399 = sadd.s32 %s397, %s398
      %s400 = smul.addr %s399, 4
      %s401 = scalar_lea.vmem %s0, %s400
      %s402 = smul.u32 8, %s23
      %s403 = ssub.s32 18, %s402
      %p404 = scmp.lt.s32.totalorder %s403, 8
      %s405 = scalar_select %p404, %s403, 8
      %s406 = smul.u32 64, %s405
      %s407 = smul.u32 %s406, 3
      %s408 = sadd.s32 %s23, 1
      %s409 = smul.u32 %s408, 8
      %p410 = scmp.lt.s32.totalorder %s22, 1
      %s411 = scalar_select %p410, %s22, 1
      %p412 = scmp.lt.s32.totalorder %s409, 17
      %s413 = scalar_select %p412, %s409, 17
      %s414 = smul.addr %s413, 3
      %s415 = smul.addr %s411, 54
      %s416 = sadd.s32 %s414, %s415
      %s417 = smul.addr %s416, 4
      %s418 = scalar_lea.vmem %s1, %s417
      %s419 = sadd.s32 %s23, 1
      %s420 = smul.u32 %s419, 8
      %s421 = sadd.s32 %s23, 1
      %s422 = smul.u32 %s421, 8
      %s423 = sadd.s32 %s422, 1
      %p424 = scmp.lt.s32.totalorder %s22, 1
      %s425 = scalar_select %p424, %s22, 1
      %p426 = scmp.lt.s32.totalorder %s423, 17
      %s427 = scalar_select %p426, %s423, 17
      %s428 = smul.addr %s427, 3
      %s429 = smul.addr %s425, 54
      %s430 = sadd.s32 %s428, %s429
      %s431 = smul.addr %s430, 4
      %s432 = scalar_lea.vmem %s2, %s431
      %s433 = sadd.s32 %s23, 1
      %s434 = smul.u32 %s433, 8
      %s435 = sadd.s32 %s434, 1
      %s436 = smul.u32 8, %s23
      %p437 = scmp.lt.s32.totalorder %s22, 1
      %s438 = scalar_select %p437, %s22, 1
      %p439 = scmp.lt.s32.totalorder %s436, 15
      %s440 = scalar_select %p439, %s436, 15
      %s441 = smul.addr %s440, 2
      %s442 = smul.addr %s438, 32
      %s443 = sadd.s32 %s441, %s442
      %s444 = smul.addr %s443, 8
      %s445 = scalar_lea.vmem %s4, %s444
      %s446 = smul.u32 8, %s23
      %p447 = scmp.lt.s32.totalorder %s22, 1
      %s448 = scalar_select %p447, %s22, 1
      %p449 = scmp.lt.s32.totalorder %s23, 1
      %s450 = scalar_select %p449, %s23, 1
      %s451 = smul.addr %s448, 2
      %s452 = sadd.s32 %s450, %s451
      %s453 = scalar_lea.vmem %s5, %s452
      %p454 = scmp.lt.s32.totalorder %s22, 1
      %s455 = scalar_select %p454, %s22, 1
      %p456 = scmp.lt.s32.totalorder %s23, 1
      %s457 = scalar_select %p456, %s23, 1
      %s458 = smul.addr %s455, 2
      %s459 = sadd.s32 %s457, %s458
      %s460 = scalar_lea.vmem %s6, %s459
      %v462 = vld [vmem:[%s401] sm:$0xf]
      %v463 = vld [vmem:[%s401 + $0x4] sm:$0xf]
      %v464 = vld [vmem:[%s401 + $0x8] sm:$0x1]
      %v465 = vld [vmem:[%s401 + $0xc] sm:$0xf]
      %v466 = vld [vmem:[%s401 + $0x10] sm:$0xf]
      %v467 = vld [vmem:[%s401 + $0x14] sm:$0x1]
      %v468 = vld [vmem:[%s401 + $0x18] sm:$0xf]
      %v469 = vld [vmem:[%s401 + $0x1c] sm:$0xf]
      %v470 = vld [vmem:[%s401 + $0x20] sm:$0x1]
      %v471 = vld [vmem:[%s401 + $0x24] sm:$0xf]
      %v472 = vld [vmem:[%s401 + $0x28] sm:$0xf]
      %v473 = vld [vmem:[%s401 + $0x2c] sm:$0x1]
      %v474 = vld [vmem:[%s401 + $0x30] sm:$0xf]
      %v475 = vld [vmem:[%s401 + $0x34] sm:$0xf]
      %v476 = vld [vmem:[%s401 + $0x38] sm:$0x1]
      %v477 = vld [vmem:[%s401 + $0x3c] sm:$0xf]
      %v478 = vld [vmem:[%s401 + $0x40] sm:$0xf]
      %v479 = vld [vmem:[%s401 + $0x44] sm:$0x1]
      %v480 = vld [vmem:[%s401 + $0x48] sm:$0xf]
      %v481 = vld [vmem:[%s401 + $0x4c] sm:$0xf]
      %v482 = vld [vmem:[%s401 + $0x50] sm:$0x1]
      %v483 = vld [vmem:[%s401 + $0x54] sm:$0xf]
      %v484 = vld [vmem:[%s401 + $0x58] sm:$0xf]
      %v485 = vld [vmem:[%s401 + $0x5c] sm:$0x1]
      %vm486 = vcmask 27648
      %487 = vst.msk [vmem:[#allocation2] sm:$0xf] %vm486, %v462
      %488 = vst.msk [vmem:[#allocation2 + $0x4] sm:$0xf] %vm486, %v463
      %vm489 = vcmask 24576
      %490 = vst.msk [vmem:[#allocation2 + $0x8] sm:$0x1] %vm489, %v464
      %491 = vst.msk [vmem:[#allocation2 + $0xc] sm:$0xf] %vm486, %v465
      %492 = vst.msk [vmem:[#allocation2 + $0x10] sm:$0xf] %vm486, %v466
      %493 = vst.msk [vmem:[#allocation2 + $0x14] sm:$0x1] %vm489, %v467
      %494 = vst.msk [vmem:[#allocation2 + $0x18] sm:$0xf] %vm486, %v468
      %495 = vst.msk [vmem:[#allocation2 + $0x1c] sm:$0xf] %vm486, %v469
      %496 = vst.msk [vmem:[#allocation2 + $0x20] sm:$0x1] %vm489, %v470
      %497 = vst.msk [vmem:[#allocation2 + $0x24] sm:$0xf] %vm486, %v471
      %498 = vst.msk [vmem:[#allocation2 + $0x28] sm:$0xf] %vm486, %v472
      %499 = vst.msk [vmem:[#allocation2 + $0x2c] sm:$0x1] %vm489, %v473
      %500 = vst.msk [vmem:[#allocation2 + $0x30] sm:$0xf] %vm486, %v474
      %501 = vst.msk [vmem:[#allocation2 + $0x34] sm:$0xf] %vm486, %v475
      %502 = vst.msk [vmem:[#allocation2 + $0x38] sm:$0x1] %vm489, %v476
      %503 = vst.msk [vmem:[#allocation2 + $0x3c] sm:$0xf] %vm486, %v477
      %504 = vst.msk [vmem:[#allocation2 + $0x40] sm:$0xf] %vm486, %v478
      %505 = vst.msk [vmem:[#allocation2 + $0x44] sm:$0x1] %vm489, %v479
      %506 = vst.msk [vmem:[#allocation2 + $0x48] sm:$0xf] %vm486, %v480
      %507 = vst.msk [vmem:[#allocation2 + $0x4c] sm:$0xf] %vm486, %v481
      %508 = vst.msk [vmem:[#allocation2 + $0x50] sm:$0x1] %vm489, %v482
      %509 = vst.msk [vmem:[#allocation2 + $0x54] sm:$0xf] %vm486, %v483
      %510 = vst.msk [vmem:[#allocation2 + $0x58] sm:$0xf] %vm486, %v484
      %511 = vst.msk [vmem:[#allocation2 + $0x5c] sm:$0x1] %vm489, %v485
      %v512 = vld [vmem:[%s418] sm:$0xf]
      %v513 = vld [vmem:[%s418 + $0x4] sm:$0xf]
      %v514 = vld [vmem:[%s418 + $0x8] sm:$0x1]
      %s515 = scalar_lea.vmem [#allocation2], 96
      %516 = vst.msk [vmem:[%s515] sm:$0xf] %vm486, %v512
      %517 = vst.msk [vmem:[%s515 + $0x4] sm:$0xf] %vm486, %v513
      %518 = vst.msk [vmem:[%s515 + $0x8] sm:$0x1] %vm489, %v514
      %v519 = vld [vmem:[%s432] sm:$0xf]
      %v520 = vld [vmem:[%s432 + $0x4] sm:$0xf]
      %v521 = vld [vmem:[%s432 + $0x8] sm:$0x1]
      %s522 = scalar_lea.vmem [#allocation2], 108
      %523 = vst.msk [vmem:[%s522] sm:$0xf] %vm486, %v519
      %524 = vst.msk [vmem:[%s522 + $0x4] sm:$0xf] %vm486, %v520
      %525 = vst.msk [vmem:[%s522 + $0x8] sm:$0x1] %vm489, %v521
      %v526 = vld [vmem:[#allocation2] sm:$0xf]
      %v527 = vld [vmem:[#allocation2 + $0x4] sm:$0xf]
      %v528 = vld [vmem:[#allocation2 + $0xc] sm:$0xf]
      %v529 = vld [vmem:[#allocation2 + $0x10] sm:$0xf]
      %v530 = vld [vmem:[#allocation2 + $0x18] sm:$0xf]
      %v531 = vld [vmem:[#allocation2 + $0x1c] sm:$0xf]
      %v532 = vld [vmem:[#allocation2 + $0x24] sm:$0xf]
      %v533 = vld [vmem:[#allocation2 + $0x28] sm:$0xf]
      %v534 = vld [vmem:[#allocation2 + $0x30] sm:$0xf]
      %v535 = vld [vmem:[#allocation2 + $0x34] sm:$0xf]
      %v536 = vld [vmem:[#allocation2 + $0x3c] sm:$0xf]
      %v537 = vld [vmem:[#allocation2 + $0x40] sm:$0xf]
      %v538 = vld [vmem:[#allocation2 + $0x48] sm:$0xf]
      %v539 = vld [vmem:[#allocation2 + $0x4c] sm:$0xf]
      %v540 = vld [vmem:[#allocation2 + $0x54] sm:$0xf]
      %v541 = vld [vmem:[#allocation2 + $0x58] sm:$0xf]
      %v542 = vld [vmem:[%s3] sm:$0x3]
      %v543 = vld [vmem:[#allocation2 + $0x8] sm:$0x1]
      %v544 = vld [vmem:[#allocation2 + $0x14] sm:$0x1]
      %v545 = vld [vmem:[#allocation2 + $0x20] sm:$0x1]
      %v546 = vld [vmem:[#allocation2 + $0x2c] sm:$0x1]
      %v547 = vld [vmem:[#allocation2 + $0x38] sm:$0x1]
      %v548 = vld [vmem:[#allocation2 + $0x44] sm:$0x1]
      %v549 = vld [vmem:[#allocation2 + $0x50] sm:$0x1]
      %v550 = vld [vmem:[#allocation2 + $0x5c] sm:$0x1]
      %vm551 = vsmask.f32 3328
      %vm552 = vsmask.f32 7440
      %vm553 = vmor %vm551, %vm552
      %v555 = vshrl.u32 %v526, 16
      %v557 = vrot.slane %v555, 4
      %v558 = vshll.u32 %v526, 16
      %v560 = vrot.slane %v558, 5
      %v561 = vor.u32 %v557, %v560
      %v562 = vrot.slane %v561, 4
      %v564 = vshll.u32 %v527, 16
      %v566 = vrot.slane %v564, 5
      %v567 = vsel %vm553, %v562, %v566
      %v568 = vshrl.u32 %v527, 16
      %v570 = vrot.slane %v568, 4
      %v571 = vor.u32 %v570, %v566
      %v572 = vrot.slane %v571, 4
      %v574 = vshll.u32 %v543, 16
      %v576 = vrot.slane %v574, 5
      %v577 = vsel %vm553, %v572, %v576
      %v579 = vshrl.u32 %v528, 16
      %v581 = vrot.slane %v579, 4
      %v582 = vshll.u32 %v528, 16
      %v584 = vrot.slane %v582, 5
      %v585 = vor.u32 %v581, %v584
      %v586 = vrot.slane %v585, 4
      %v588 = vshll.u32 %v529, 16
      %v590 = vrot.slane %v588, 5
      %v591 = vsel %vm553, %v586, %v590
      %v592 = vshrl.u32 %v529, 16
      %v594 = vrot.slane %v592, 4
      %v595 = vor.u32 %v594, %v590
      %v596 = vrot.slane %v595, 4
      %v598 = vshll.u32 %v544, 16
      %v600 = vrot.slane %v598, 5
      %v601 = vsel %vm553, %v596, %v600
      %v603 = vshrl.u32 %v530, 16
      %v605 = vrot.slane %v603, 4
      %v606 = vshll.u32 %v530, 16
      %v608 = vrot.slane %v606, 5
      %v609 = vor.u32 %v605, %v608
      %v610 = vrot.slane %v609, 4
      %v612 = vshll.u32 %v531, 16
      %v614 = vrot.slane %v612, 5
      %v615 = vsel %vm553, %v610, %v614
      %v616 = vshrl.u32 %v531, 16
      %v618 = vrot.slane %v616, 4
      %v619 = vor.u32 %v618, %v614
      %v620 = vrot.slane %v619, 4
      %v622 = vshll.u32 %v545, 16
      %v624 = vrot.slane %v622, 5
      %v625 = vsel %vm553, %v620, %v624
      %v627 = vshrl.u32 %v532, 16
      %v629 = vrot.slane %v627, 4
      %v630 = vshll.u32 %v532, 16
      %v632 = vrot.slane %v630, 5
      %v633 = vor.u32 %v629, %v632
      %v634 = vrot.slane %v633, 4
      %v636 = vshll.u32 %v533, 16
      %v638 = vrot.slane %v636, 5
      %v639 = vsel %vm553, %v634, %v638
      %v640 = vshrl.u32 %v533, 16
      %v642 = vrot.slane %v640, 4
      %v643 = vor.u32 %v642, %v638
      %v644 = vrot.slane %v643, 4
      %v646 = vshll.u32 %v546, 16
      %v648 = vrot.slane %v646, 5
      %v649 = vsel %vm553, %v644, %v648
      %v651 = vshrl.u32 %v534, 16
      %v653 = vrot.slane %v651, 4
      %v654 = vshll.u32 %v534, 16
      %v656 = vrot.slane %v654, 5
      %v657 = vor.u32 %v653, %v656
      %v658 = vrot.slane %v657, 4
      %v660 = vshll.u32 %v535, 16
      %v662 = vrot.slane %v660, 5
      %v663 = vsel %vm553, %v658, %v662
      %v664 = vshrl.u32 %v535, 16
      %v666 = vrot.slane %v664, 4
      %v667 = vor.u32 %v666, %v662
      %v668 = vrot.slane %v667, 4
      %v670 = vshll.u32 %v547, 16
      %v672 = vrot.slane %v670, 5
      %v673 = vsel %vm553, %v668, %v672
      %v675 = vshrl.u32 %v536, 16
      %v677 = vrot.slane %v675, 4
      %v678 = vshll.u32 %v536, 16
      %v680 = vrot.slane %v678, 5
      %v681 = vor.u32 %v677, %v680
      %v682 = vrot.slane %v681, 4
      %v684 = vshll.u32 %v537, 16
      %v686 = vrot.slane %v684, 5
      %v687 = vsel %vm553, %v682, %v686
      %v688 = vshrl.u32 %v537, 16
      %v690 = vrot.slane %v688, 4
      %v691 = vor.u32 %v690, %v686
      %v692 = vrot.slane %v691, 4
      %v694 = vshll.u32 %v548, 16
      %v696 = vrot.slane %v694, 5
      %v697 = vsel %vm553, %v692, %v696
      %v699 = vshrl.u32 %v538, 16
      %v701 = vrot.slane %v699, 4
      %v702 = vshll.u32 %v538, 16
      %v704 = vrot.slane %v702, 5
      %v705 = vor.u32 %v701, %v704
      %v706 = vrot.slane %v705, 4
      %v708 = vshll.u32 %v539, 16
      %v710 = vrot.slane %v708, 5
      %v711 = vsel %vm553, %v706, %v710
      %v712 = vshrl.u32 %v539, 16
      %v714 = vrot.slane %v712, 4
      %v715 = vor.u32 %v714, %v710
      %v716 = vrot.slane %v715, 4
      %v718 = vshll.u32 %v549, 16
      %v720 = vrot.slane %v718, 5
      %v721 = vsel %vm553, %v716, %v720
      %v723 = vshrl.u32 %v540, 16
      %v725 = vrot.slane %v723, 4
      %v726 = vshll.u32 %v540, 16
      %v728 = vrot.slane %v726, 5
      %v729 = vor.u32 %v725, %v728
      %v730 = vrot.slane %v729, 4
      %v732 = vshll.u32 %v541, 16
      %v734 = vrot.slane %v732, 5
      %v735 = vsel %vm553, %v730, %v734
      %v736 = vshrl.u32 %v541, 16
      %v738 = vrot.slane %v736, 4
      %v739 = vor.u32 %v738, %v734
      %v740 = vrot.slane %v739, 4
      %v742 = vshll.u32 %v550, 16
      %v744 = vrot.slane %v742, 5
      %v745 = vsel %vm553, %v740, %v744
      %s746 = scalar_lea.vmem %s3, 2
      %v747 = vld [vmem:[%s746] sm:$0x3]
      %v748 = vunpack.c.l.b16 %v567
      %v749 = vunpack.c.l.b16 %v577
      %v750 = vunpack.c.l.b16 %v591
      %v751 = vunpack.c.l.b16 %v601
      %v752 = vunpack.c.l.b16 %v615
      %v753 = vunpack.c.l.b16 %v625
      %v754 = vunpack.c.l.b16 %v639
      %v755 = vunpack.c.l.b16 %v649
      %v756 = vunpack.c.l.b16 %v663
      %v757 = vunpack.c.l.b16 %v673
      %v758 = vunpack.c.l.b16 %v687
      %v759 = vunpack.c.l.b16 %v697
      %v760 = vunpack.c.l.b16 %v711
      %v761 = vunpack.c.l.b16 %v721
      %v762 = vunpack.c.l.b16 %v735
      %v763 = vunpack.c.l.b16 %v745
      %v764 = vpack.c.b16 %v749, %v748
      %v765 = vpack.c.b16 %v751, %v750
      %v766 = vpack.c.b16 %v753, %v752
      %v767 = vpack.c.b16 %v755, %v754
      %v768 = vpack.c.b16 %v757, %v756
      %v769 = vpack.c.b16 %v759, %v758
      %v770 = vpack.c.b16 %v761, %v760
      %v771 = vpack.c.b16 %v763, %v762
      %vm772 = vcmask 31744
      %v774 = vsel %vm772, %v764, 0
      %v777 = vsel %vm772, %v765, 0
      %v780 = vsel %vm772, %v766, 0
      %v783 = vsel %vm772, %v767, 0
      %v786 = vsel %vm772, %v768, 0
      %v789 = vsel %vm772, %v769, 0
      %v792 = vsel %vm772, %v770, 0
      %v795 = vsel %vm772, %v771, 0
      %vm797 = vcmask 1041408
      %v799 = vsel %vm797, %v747, 0
      %801 = vmatprep.subr.bf16.mxu0 0
      %802 = vmatpush1.bf16.msra.mxu0 0
      %803 = vmatprep.subr.bf16.mxu0 0
      %804 = vmatpush1.bf16.msra.mxu0 0
      %805 = vmatprep.subr.bf16.mxu0 0
      %806 = vmatpush1.bf16.msra.mxu0 0
      %807 = vmatprep.subr.bf16.mxu0 0
      %808 = vmatpush1.bf16.msra.mxu0 0
      %809 = vmatprep.subr.bf16.mxu0 0
      %810 = vmatpush1.bf16.msra.mxu0 0
      %811 = vmatprep.subr.bf16.mxu0 0
      %812 = vmatpush1.bf16.msra.mxu0 0
      %813 = vmatprep.subr.bf16.mxu0 0
      %814 = vmatpush1.bf16.msra.mxu0 0
      %815 = vmatprep.subr.bf16.mxu0 0
      %816 = vmatpush1.bf16.msra.mxu0 %v799
      %817 = vmatprep.subr.bf16.mxu0 0
      %818 = vmatpush2.bf16.msra.mxu0 0
      %819 = vmatprep.subr.bf16.mxu0 0
      %820 = vmatpush2.bf16.msra.mxu0 0
      %821 = vmatprep.subr.bf16.mxu0 0
      %822 = vmatpush2.bf16.msra.mxu0 0
      %823 = vmatprep.subr.bf16.mxu0 0
      %824 = vmatpush2.bf16.msra.mxu0 0
      %825 = vmatprep.subr.bf16.mxu0 0
      %826 = vmatpush2.bf16.msra.mxu0 0
      %827 = vmatprep.subr.bf16.mxu0 0
      %828 = vmatpush2.bf16.msra.mxu0 0
      %829 = vmatprep.subr.bf16.mxu0 0
      %830 = vmatpush2.bf16.msra.mxu0 0
      %831 = vmatprep.subr.bf16.mxu0 0
      %832 = vmatpush2.bf16.msra.mxu0 0
      %833 = vmatprep.mubr.bf16.mxu0 0
      %834 = vmatmul.mubr.bf16.gmra.mxu0 %v774
      %v835 = vpop.f32.mrf.mxu0
      %v836 = vadd.f32 0.0, %v835
      %v837 = vpop.f32.mrf.mxu0
      %v838 = vpop.f32.mrf.mxu0
      %v839 = vadd.f32 0.0, %v838
      %v840 = vpop.f32.mrf.mxu0
      %841 = vmatprep.mubr.bf16.mxu0 0
      %842 = vmatmul.mubr.bf16.gmra.mxu0 %v777
      %v843 = vpop.f32.mrf.mxu0
      %v844 = vadd.f32 0.0, %v843
      %v845 = vpop.f32.mrf.mxu0
      %v846 = vpop.f32.mrf.mxu0
      %v847 = vadd.f32 0.0, %v846
      %v848 = vpop.f32.mrf.mxu0
      %849 = vmatprep.mubr.bf16.mxu0 0
      %850 = vmatmul.mubr.bf16.gmra.mxu0 %v780
      %v851 = vpop.f32.mrf.mxu0
      %v852 = vadd.f32 0.0, %v851
      %v853 = vpop.f32.mrf.mxu0
      %v854 = vpop.f32.mrf.mxu0
      %v855 = vadd.f32 0.0, %v854
      %v856 = vpop.f32.mrf.mxu0
      %857 = vmatprep.mubr.bf16.mxu0 0
      %858 = vmatmul.mubr.bf16.gmra.mxu0 %v783
      %v859 = vpop.f32.mrf.mxu0
      %v860 = vadd.f32 0.0, %v859
      %v861 = vpop.f32.mrf.mxu0
      %v862 = vpop.f32.mrf.mxu0
      %v863 = vadd.f32 0.0, %v862
      %v864 = vpop.f32.mrf.mxu0
      %865 = vmatprep.mubr.bf16.mxu0 0
      %866 = vmatmul.mubr.bf16.gmra.mxu0 %v786
      %v867 = vpop.f32.mrf.mxu0
      %v868 = vadd.f32 0.0, %v867
      %v869 = vpop.f32.mrf.mxu0
      %v870 = vpop.f32.mrf.mxu0
      %v871 = vadd.f32 0.0, %v870
      %v872 = vpop.f32.mrf.mxu0
      %873 = vmatprep.mubr.bf16.mxu0 0
      %874 = vmatmul.mubr.bf16.gmra.mxu0 %v789
      %v875 = vpop.f32.mrf.mxu0
      %v876 = vadd.f32 0.0, %v875
      %v877 = vpop.f32.mrf.mxu0
      %v878 = vpop.f32.mrf.mxu0
      %v879 = vadd.f32 0.0, %v878
      %v880 = vpop.f32.mrf.mxu0
      %881 = vmatprep.mubr.bf16.mxu0 0
      %882 = vmatmul.mubr.bf16.gmra.mxu0 %v792
      %v883 = vpop.f32.mrf.mxu0
      %v884 = vadd.f32 0.0, %v883
      %v885 = vpop.f32.mrf.mxu0
      %v886 = vpop.f32.mrf.mxu0
      %v887 = vadd.f32 0.0, %v886
      %v888 = vpop.f32.mrf.mxu0
      %889 = vmatprep.mubr.bf16.mxu0 0
      %890 = vmatmul.mubr.bf16.gmra.mxu0 %v795
      %v891 = vpop.f32.mrf.mxu0
      %v892 = vadd.f32 0.0, %v891
      %v893 = vpop.f32.mrf.mxu0
      %v894 = vpop.f32.mrf.mxu0
      %v895 = vadd.f32 0.0, %v894
      %v896 = vpop.f32.mrf.mxu0
      %897 = vdwg.mxu0
      %v914 = vunpack.c.l.b16 %v526
      %v915 = vunpack.c.l.b16 %v527
      %v916 = vunpack.c.l.b16 %v528
      %v917 = vunpack.c.l.b16 %v529
      %v918 = vunpack.c.l.b16 %v530
      %v919 = vunpack.c.l.b16 %v531
      %v920 = vunpack.c.l.b16 %v532
      %v921 = vunpack.c.l.b16 %v533
      %v922 = vunpack.c.l.b16 %v534
      %v923 = vunpack.c.l.b16 %v535
      %v924 = vunpack.c.l.b16 %v536
      %v925 = vunpack.c.l.b16 %v537
      %v926 = vunpack.c.l.b16 %v538
      %v927 = vunpack.c.l.b16 %v539
      %v928 = vunpack.c.l.b16 %v540
      %v929 = vunpack.c.l.b16 %v541
      %v930 = vpack.c.b16 %v915, %v914
      %v931 = vpack.c.b16 %v917, %v916
      %v932 = vpack.c.b16 %v919, %v918
      %v933 = vpack.c.b16 %v921, %v920
      %v934 = vpack.c.b16 %v923, %v922
      %v935 = vpack.c.b16 %v925, %v924
      %v936 = vpack.c.b16 %v927, %v926
      %v937 = vpack.c.b16 %v929, %v928
      %v939 = vsel %vm772, %v930, 0
      %v942 = vsel %vm772, %v931, 0
      %v945 = vsel %vm772, %v932, 0
      %v948 = vsel %vm772, %v933, 0
      %v951 = vsel %vm772, %v934, 0
      %v954 = vsel %vm772, %v935, 0
      %v957 = vsel %vm772, %v936, 0
      %v960 = vsel %vm772, %v937, 0
      %v963 = vsel %vm797, %v542, 0
      %965 = vmatprep.subr.bf16.mxu0 0
      %966 = vmatpush1.bf16.msra.mxu0 0
      %967 = vmatprep.subr.bf16.mxu0 0
      %968 = vmatpush1.bf16.msra.mxu0 0
      %969 = vmatprep.subr.bf16.mxu0 0
      %970 = vmatpush1.bf16.msra.mxu0 0
      %971 = vmatprep.subr.bf16.mxu0 0
      %972 = vmatpush1.bf16.msra.mxu0 0
      %973 = vmatprep.subr.bf16.mxu0 0
      %974 = vmatpush1.bf16.msra.mxu0 0
      %975 = vmatprep.subr.bf16.mxu0 0
      %976 = vmatpush1.bf16.msra.mxu0 0
      %977 = vmatprep.subr.bf16.mxu0 0
      %978 = vmatpush1.bf16.msra.mxu0 0
      %979 = vmatprep.subr.bf16.mxu0 0
      %980 = vmatpush1.bf16.msra.mxu0 %v963
      %981 = vmatprep.subr.bf16.mxu0 0
      %982 = vmatpush2.bf16.msra.mxu0 0
      %983 = vmatprep.subr.bf16.mxu0 0
      %984 = vmatpush2.bf16.msra.mxu0 0
      %985 = vmatprep.subr.bf16.mxu0 0
      %986 = vmatpush2.bf16.msra.mxu0 0
      %987 = vmatprep.subr.bf16.mxu0 0
      %988 = vmatpush2.bf16.msra.mxu0 0
      %989 = vmatprep.subr.bf16.mxu0 0
      %990 = vmatpush2.bf16.msra.mxu0 0
      %991 = vmatprep.subr.bf16.mxu0 0
      %992 = vmatpush2.bf16.msra.mxu0 0
      %993 = vmatprep.subr.bf16.mxu0 0
      %994 = vmatpush2.bf16.msra.mxu0 0
      %995 = vmatprep.subr.bf16.mxu0 0
      %996 = vmatpush2.bf16.msra.mxu0 0
      %997 = vmatprep.mubr.bf16.mxu0 0
      %998 = vmatmul.mubr.bf16.gmra.mxu0 %v939
      %v999 = vpop.f32.mrf.mxu0
      %v1000 = vadd.f32 %v836, %v999
      %v1001 = vpop.f32.mrf.mxu0
      %v1002 = vpop.f32.mrf.mxu0
      %v1003 = vadd.f32 %v839, %v1002
      %v1004 = vpop.f32.mrf.mxu0
      %1005 = vmatprep.mubr.bf16.mxu0 0
      %1006 = vmatmul.mubr.bf16.gmra.mxu0 %v942
      %v1007 = vpop.f32.mrf.mxu0
      %v1008 = vadd.f32 %v844, %v1007
      %v1009 = vpop.f32.mrf.mxu0
      %v1010 = vpop.f32.mrf.mxu0
      %v1011 = vadd.f32 %v847, %v1010
      %v1012 = vpop.f32.mrf.mxu0
      %1013 = vmatprep.mubr.bf16.mxu0 0
      %1014 = vmatmul.mubr.bf16.gmra.mxu0 %v945
      %v1015 = vpop.f32.mrf.mxu0
      %v1016 = vadd.f32 %v852, %v1015
      %v1017 = vpop.f32.mrf.mxu0
      %v1018 = vpop.f32.mrf.mxu0
      %v1019 = vadd.f32 %v855, %v1018
      %v1020 = vpop.f32.mrf.mxu0
      %1021 = vmatprep.mubr.bf16.mxu0 0
      %1022 = vmatmul.mubr.bf16.gmra.mxu0 %v948
      %v1023 = vpop.f32.mrf.mxu0
      %v1024 = vadd.f32 %v860, %v1023
      %v1025 = vpop.f32.mrf.mxu0
      %v1026 = vpop.f32.mrf.mxu0
      %v1027 = vadd.f32 %v863, %v1026
      %v1028 = vpop.f32.mrf.mxu0
      %1029 = vmatprep.mubr.bf16.mxu0 0
      %1030 = vmatmul.mubr.bf16.gmra.mxu0 %v951
      %v1031 = vpop.f32.mrf.mxu0
      %v1032 = vadd.f32 %v868, %v1031
      %v1033 = vpop.f32.mrf.mxu0
      %v1034 = vpop.f32.mrf.mxu0
      %v1035 = vadd.f32 %v871, %v1034
      %v1036 = vpop.f32.mrf.mxu0
      %1037 = vmatprep.mubr.bf16.mxu0 0
      %1038 = vmatmul.mubr.bf16.gmra.mxu0 %v954
      %v1039 = vpop.f32.mrf.mxu0
      %v1040 = vadd.f32 %v876, %v1039
      %v1041 = vpop.f32.mrf.mxu0
      %v1042 = vpop.f32.mrf.mxu0
      %v1043 = vadd.f32 %v879, %v1042
      %v1044 = vpop.f32.mrf.mxu0
      %1045 = vmatprep.mubr.bf16.mxu0 0
      %1046 = vmatmul.mubr.bf16.gmra.mxu0 %v957
      %v1047 = vpop.f32.mrf.mxu0
      %v1048 = vadd.f32 %v884, %v1047
      %v1049 = vpop.f32.mrf.mxu0
      %v1050 = vpop.f32.mrf.mxu0
      %v1051 = vadd.f32 %v887, %v1050
      %v1052 = vpop.f32.mrf.mxu0
      %1053 = vmatprep.mubr.bf16.mxu0 0
      %1054 = vmatmul.mubr.bf16.gmra.mxu0 %v960
      %v1055 = vpop.f32.mrf.mxu0
      %v1056 = vadd.f32 %v892, %v1055
      %v1057 = vpop.f32.mrf.mxu0
      %v1058 = vpop.f32.mrf.mxu0
      %v1059 = vadd.f32 %v895, %v1058
      %v1060 = vpop.f32.mrf.mxu0
      %1061 = vdwg.mxu0
      %v1062 = vld [vmem:[#allocation2] sm:$0xe]
      %v1063 = vld [vmem:[#allocation2 + $0xc] sm:$0xe]
      %v1064 = vld [vmem:[#allocation2 + $0x18] sm:$0xe]
      %v1065 = vld [vmem:[#allocation2 + $0x24] sm:$0xe]
      %v1066 = vld [vmem:[#allocation2 + $0x30] sm:$0xe]
      %v1067 = vld [vmem:[#allocation2 + $0x3c] sm:$0xe]
      %v1068 = vld [vmem:[#allocation2 + $0x48] sm:$0xe]
      %v1069 = vld [vmem:[#allocation2 + $0x54] sm:$0xe]
      %vm1086 = vcmask 1042432
      %vm1087 = vcmask 1046532
      %vm1088 = vmor %vm1086, %vm1087
      %v1089 = vrot.slane %v1062, 5
      %v1090 = vrot.slane %v1089, 4
      %v1091 = vrot.slane %v527, 5
      %v1092 = vsel %vm1088, %v1090, %v1091
      %v1093 = vrot.slane %v1091, 4
      %v1094 = vrot.slane %v543, 5
      %v1095 = vsel %vm1088, %v1093, %v1094
      %v1096 = vrot.slane %v1063, 5
      %v1097 = vrot.slane %v1096, 4
      %v1098 = vrot.slane %v529, 5
      %v1099 = vsel %vm1088, %v1097, %v1098
      %v1100 = vrot.slane %v1098, 4
      %v1101 = vrot.slane %v544, 5
      %v1102 = vsel %vm1088, %v1100, %v1101
      %v1103 = vrot.slane %v1064, 5
      %v1104 = vrot.slane %v1103, 4
      %v1105 = vrot.slane %v531, 5
      %v1106 = vsel %vm1088, %v1104, %v1105
      %v1107 = vrot.slane %v1105, 4
      %v1108 = vrot.slane %v545, 5
      %v1109 = vsel %vm1088, %v1107, %v1108
      %v1110 = vrot.slane %v1065, 5
      %v1111 = vrot.slane %v1110, 4
      %v1112 = vrot.slane %v533, 5
      %v1113 = vsel %vm1088, %v1111, %v1112
      %v1114 = vrot.slane %v1112, 4
      %v1115 = vrot.slane %v546, 5
      %v1116 = vsel %vm1088, %v1114, %v1115
      %v1117 = vrot.slane %v1066, 5
      %v1118 = vrot.slane %v1117, 4
      %v1119 = vrot.slane %v535, 5
      %v1120 = vsel %vm1088, %v1118, %v1119
      %v1121 = vrot.slane %v1119, 4
      %v1122 = vrot.slane %v547, 5
      %v1123 = vsel %vm1088, %v1121, %v1122
      %v1124 = vrot.slane %v1067, 5
      %v1125 = vrot.slane %v1124, 4
      %v1126 = vrot.slane %v537, 5
      %v1127 = vsel %vm1088, %v1125, %v1126
      %v1128 = vrot.slane %v1126, 4
      %v1129 = vrot.slane %v548, 5
      %v1130 = vsel %vm1088, %v1128, %v1129
      %v1131 = vrot.slane %v1068, 5
      %v1132 = vrot.slane %v1131, 4
      %v1133 = vrot.slane %v539, 5
      %v1134 = vsel %vm1088, %v1132, %v1133
      %v1135 = vrot.slane %v1133, 4
      %v1136 = vrot.slane %v549, 5
      %v1137 = vsel %vm1088, %v1135, %v1136
      %v1138 = vrot.slane %v1069, 5
      %v1139 = vrot.slane %v1138, 4
      %v1140 = vrot.slane %v541, 5
      %v1141 = vsel %vm1088, %v1139, %v1140
      %v1142 = vrot.slane %v1140, 4
      %v1143 = vrot.slane %v550, 5
      %v1144 = vsel %vm1088, %v1142, %v1143
      %s1145 = scalar_lea.vmem %s3, 4
      %v1146 = vld [vmem:[%s1145] sm:$0x3]
      %v1147 = vunpack.c.l.b16 %v1092
      %v1148 = vunpack.c.l.b16 %v1095
      %v1149 = vunpack.c.l.b16 %v1099
      %v1150 = vunpack.c.l.b16 %v1102
      %v1151 = vunpack.c.l.b16 %v1106
      %v1152 = vunpack.c.l.b16 %v1109
      %v1153 = vunpack.c.l.b16 %v1113
      %v1154 = vunpack.c.l.b16 %v1116
      %v1155 = vunpack.c.l.b16 %v1120
      %v1156 = vunpack.c.l.b16 %v1123
      %v1157 = vunpack.c.l.b16 %v1127
      %v1158 = vunpack.c.l.b16 %v1130
      %v1159 = vunpack.c.l.b16 %v1134
      %v1160 = vunpack.c.l.b16 %v1137
      %v1161 = vunpack.c.l.b16 %v1141
      %v1162 = vunpack.c.l.b16 %v1144
      %v1163 = vpack.c.b16 %v1148, %v1147
      %v1164 = vpack.c.b16 %v1150, %v1149
      %v1165 = vpack.c.b16 %v1152, %v1151
      %v1166 = vpack.c.b16 %v1154, %v1153
      %v1167 = vpack.c.b16 %v1156, %v1155
      %v1168 = vpack.c.b16 %v1158, %v1157
      %v1169 = vpack.c.b16 %v1160, %v1159
      %v1170 = vpack.c.b16 %v1162, %v1161
      %v1172 = vsel %vm772, %v1163, 0
      %v1175 = vsel %vm772, %v1164, 0
      %v1178 = vsel %vm772, %v1165, 0
      %v1181 = vsel %vm772, %v1166, 0
      %v1184 = vsel %vm772, %v1167, 0
      %v1187 = vsel %vm772, %v1168, 0
      %v1190 = vsel %vm772, %v1169, 0
      %v1193 = vsel %vm772, %v1170, 0
      %v1196 = vsel %vm797, %v1146, 0
      %1198 = vmatprep.subr.bf16.mxu0 0
      %1199 = vmatpush1.bf16.msra.mxu0 0
      %1200 = vmatprep.subr.bf16.mxu0 0
      %1201 = vmatpush1.bf16.msra.mxu0 0
      %1202 = vmatprep.subr.bf16.mxu0 0
      %1203 = vmatpush1.bf16.msra.mxu0 0
      %1204 = vmatprep.subr.bf16.mxu0 0
      %1205 = vmatpush1.bf16.msra.mxu0 0
      %1206 = vmatprep.subr.bf16.mxu0 0
      %1207 = vmatpush1.bf16.msra.mxu0 0
      %1208 = vmatprep.subr.bf16.mxu0 0
      %1209 = vmatpush1.bf16.msra.mxu0 0
      %1210 = vmatprep.subr.bf16.mxu0 0
      %1211 = vmatpush1.bf16.msra.mxu0 0
      %1212 = vmatprep.subr.bf16.mxu0 0
      %1213 = vmatpush1.bf16.msra.mxu0 %v1196
      %1214 = vmatprep.subr.bf16.mxu0 0
      %1215 = vmatpush2.bf16.msra.mxu0 0
      %1216 = vmatprep.subr.bf16.mxu0 0
      %1217 = vmatpush2.bf16.msra.mxu0 0
      %1218 = vmatprep.subr.bf16.mxu0 0
      %1219 = vmatpush2.bf16.msra.mxu0 0
      %1220 = vmatprep.subr.bf16.mxu0 0
      %1221 = vmatpush2.bf16.msra.mxu0 0
      %1222 = vmatprep.subr.bf16.mxu0 0
      %1223 = vmatpush2.bf16.msra.mxu0 0
      %1224 = vmatprep.subr.bf16.mxu0 0
      %1225 = vmatpush2.bf16.msra.mxu0 0
      %1226 = vmatprep.subr.bf16.mxu0 0
      %1227 = vmatpush2.bf16.msra.mxu0 0
      %1228 = vmatprep.subr.bf16.mxu0 0
      %1229 = vmatpush2.bf16.msra.mxu0 0
      %1230 = vmatprep.mubr.bf16.mxu0 0
      %1231 = vmatmul.mubr.bf16.gmra.mxu0 %v1172
      %v1232 = vpop.f32.mrf.mxu0
      %v1233 = vadd.f32 0.0, %v1232
      %v1234 = vpop.f32.mrf.mxu0
      %v1235 = vpop.f32.mrf.mxu0
      %v1236 = vadd.f32 0.0, %v1235
      %v1237 = vpop.f32.mrf.mxu0
      %1238 = vmatprep.mubr.bf16.mxu0 0
      %1239 = vmatmul.mubr.bf16.gmra.mxu0 %v1175
      %v1240 = vpop.f32.mrf.mxu0
      %v1241 = vadd.f32 0.0, %v1240
      %v1242 = vpop.f32.mrf.mxu0
      %v1243 = vpop.f32.mrf.mxu0
      %v1244 = vadd.f32 0.0, %v1243
      %v1245 = vpop.f32.mrf.mxu0
      %1246 = vmatprep.mubr.bf16.mxu0 0
      %1247 = vmatmul.mubr.bf16.gmra.mxu0 %v1178
      %v1248 = vpop.f32.mrf.mxu0
      %v1249 = vadd.f32 0.0, %v1248
      %v1250 = vpop.f32.mrf.mxu0
      %v1251 = vpop.f32.mrf.mxu0
      %v1252 = vadd.f32 0.0, %v1251
      %v1253 = vpop.f32.mrf.mxu0
      %1254 = vmatprep.mubr.bf16.mxu0 0
      %1255 = vmatmul.mubr.bf16.gmra.mxu0 %v1181
      %v1256 = vpop.f32.mrf.mxu0
      %v1257 = vadd.f32 0.0, %v1256
      %v1258 = vpop.f32.mrf.mxu0
      %v1259 = vpop.f32.mrf.mxu0
      %v1260 = vadd.f32 0.0, %v1259
      %v1261 = vpop.f32.mrf.mxu0
      %1262 = vmatprep.mubr.bf16.mxu0 0
      %1263 = vmatmul.mubr.bf16.gmra.mxu0 %v1184
      %v1264 = vpop.f32.mrf.mxu0
      %v1265 = vadd.f32 0.0, %v1264
      %v1266 = vpop.f32.mrf.mxu0
      %v1267 = vpop.f32.mrf.mxu0
      %v1268 = vadd.f32 0.0, %v1267
      %v1269 = vpop.f32.mrf.mxu0
      %1270 = vmatprep.mubr.bf16.mxu0 0
      %1271 = vmatmul.mubr.bf16.gmra.mxu0 %v1187
      %v1272 = vpop.f32.mrf.mxu0
      %v1273 = vadd.f32 0.0, %v1272
      %v1274 = vpop.f32.mrf.mxu0
      %v1275 = vpop.f32.mrf.mxu0
      %v1276 = vadd.f32 0.0, %v1275
      %v1277 = vpop.f32.mrf.mxu0
      %1278 = vmatprep.mubr.bf16.mxu0 0
      %1279 = vmatmul.mubr.bf16.gmra.mxu0 %v1190
      %v1280 = vpop.f32.mrf.mxu0
      %v1281 = vadd.f32 0.0, %v1280
      %v1282 = vpop.f32.mrf.mxu0
      %v1283 = vpop.f32.mrf.mxu0
      %v1284 = vadd.f32 0.0, %v1283
      %v1285 = vpop.f32.mrf.mxu0
      %1286 = vmatprep.mubr.bf16.mxu0 0
      %1287 = vmatmul.mubr.bf16.gmra.mxu0 %v1193
      %v1288 = vpop.f32.mrf.mxu0
      %v1289 = vadd.f32 0.0, %v1288
      %v1290 = vpop.f32.mrf.mxu0
      %v1291 = vpop.f32.mrf.mxu0
      %v1292 = vadd.f32 0.0, %v1291
      %v1293 = vpop.f32.mrf.mxu0
      %1294 = vdwg.mxu0
      %v1295 = vadd.f32 %v1000, %v1233
      %v1296 = vadd.f32 %v1003, %v1236
      %v1297 = vadd.f32 %v1008, %v1241
      %v1298 = vadd.f32 %v1011, %v1244
      %v1299 = vadd.f32 %v1016, %v1249
      %v1300 = vadd.f32 %v1019, %v1252
      %v1301 = vadd.f32 %v1024, %v1257
      %v1302 = vadd.f32 %v1027, %v1260
      %v1303 = vadd.f32 %v1032, %v1265
      %v1304 = vadd.f32 %v1035, %v1268
      %v1305 = vadd.f32 %v1040, %v1273
      %v1306 = vadd.f32 %v1043, %v1276
      %v1307 = vadd.f32 %v1048, %v1281
      %v1308 = vadd.f32 %v1051, %v1284
      %v1309 = vadd.f32 %v1056, %v1289
      %v1310 = vadd.f32 %v1059, %v1292
      %s1311 = scalar_lea.vmem [#allocation2], 12
      %v1312 = vld [vmem:[%s1311] sm:$0xf]
      %v1313 = vld [vmem:[%s1311 + $0x4] sm:$0xf]
      %v1314 = vld [vmem:[%s1311 + $0xc] sm:$0xf]
      %v1315 = vld [vmem:[%s1311 + $0x10] sm:$0xf]
      %v1316 = vld [vmem:[%s1311 + $0x18] sm:$0xf]
      %v1317 = vld [vmem:[%s1311 + $0x1c] sm:$0xf]
      %v1318 = vld [vmem:[%s1311 + $0x24] sm:$0xf]
      %v1319 = vld [vmem:[%s1311 + $0x28] sm:$0xf]
      %v1320 = vld [vmem:[%s1311 + $0x30] sm:$0xf]
      %v1321 = vld [vmem:[%s1311 + $0x34] sm:$0xf]
      %v1322 = vld [vmem:[%s1311 + $0x3c] sm:$0xf]
      %v1323 = vld [vmem:[%s1311 + $0x40] sm:$0xf]
      %v1324 = vld [vmem:[%s1311 + $0x48] sm:$0xf]
      %v1325 = vld [vmem:[%s1311 + $0x4c] sm:$0xf]
      %v1326 = vld [vmem:[%s1311 + $0x54] sm:$0xf]
      %v1327 = vld [vmem:[%s1311 + $0x58] sm:$0xf]
      %s1328 = scalar_lea.vmem %s3, 6
      %v1329 = vld [vmem:[%s1328] sm:$0x3]
      %v1346 = vunpack.c.l.b16 %v1312
      %v1347 = vunpack.c.l.b16 %v1313
      %v1348 = vunpack.c.l.b16 %v1314
      %v1349 = vunpack.c.l.b16 %v1315
      %v1350 = vunpack.c.l.b16 %v1316
      %v1351 = vunpack.c.l.b16 %v1317
      %v1352 = vunpack.c.l.b16 %v1318
      %v1353 = vunpack.c.l.b16 %v1319
      %v1354 = vunpack.c.l.b16 %v1320
      %v1355 = vunpack.c.l.b16 %v1321
      %v1356 = vunpack.c.l.b16 %v1322
      %v1357 = vunpack.c.l.b16 %v1323
      %v1358 = vunpack.c.l.b16 %v1324
      %v1359 = vunpack.c.l.b16 %v1325
      %v1360 = vunpack.c.l.b16 %v1326
      %v1361 = vunpack.c.l.b16 %v1327
      %v1362 = vpack.c.b16 %v1347, %v1346
      %v1363 = vpack.c.b16 %v1349, %v1348
      %v1364 = vpack.c.b16 %v1351, %v1350
      %v1365 = vpack.c.b16 %v1353, %v1352
      %v1366 = vpack.c.b16 %v1355, %v1354
      %v1367 = vpack.c.b16 %v1357, %v1356
      %v1368 = vpack.c.b16 %v1359, %v1358
      %v1369 = vpack.c.b16 %v1361, %v1360
      %v1371 = vsel %vm772, %v1362, 0
      %v1374 = vsel %vm772, %v1363, 0
      %v1377 = vsel %vm772, %v1364, 0
      %v1380 = vsel %vm772, %v1365, 0
      %v1383 = vsel %vm772, %v1366, 0
      %v1386 = vsel %vm772, %v1367, 0
      %v1389 = vsel %vm772, %v1368, 0
      %v1392 = vsel %vm772, %v1369, 0
      %v1395 = vsel %vm797, %v1329, 0
      %1397 = vmatprep.subr.bf16.mxu0 0
      %1398 = vmatpush1.bf16.msra.mxu0 0
      %1399 = vmatprep.subr.bf16.mxu0 0
      %1400 = vmatpush1.bf16.msra.mxu0 0
      %1401 = vmatprep.subr.bf16.mxu0 0
      %1402 = vmatpush1.bf16.msra.mxu0 0
      %1403 = vmatprep.subr.bf16.mxu0 0
      %1404 = vmatpush1.bf16.msra.mxu0 0
      %1405 = vmatprep.subr.bf16.mxu0 0
      %1406 = vmatpush1.bf16.msra.mxu0 0
      %1407 = vmatprep.subr.bf16.mxu0 0
      %1408 = vmatpush1.bf16.msra.mxu0 0
      %1409 = vmatprep.subr.bf16.mxu0 0
      %1410 = vmatpush1.bf16.msra.mxu0 0
      %1411 = vmatprep.subr.bf16.mxu0 0
      %1412 = vmatpush1.bf16.msra.mxu0 %v1395
      %1413 = vmatprep.subr.bf16.mxu0 0
      %1414 = vmatpush2.bf16.msra.mxu0 0
      %1415 = vmatprep.subr.bf16.mxu0 0
      %1416 = vmatpush2.bf16.msra.mxu0 0
      %1417 = vmatprep.subr.bf16.mxu0 0
      %1418 = vmatpush2.bf16.msra.mxu0 0
      %1419 = vmatprep.subr.bf16.mxu0 0
      %1420 = vmatpush2.bf16.msra.mxu0 0
      %1421 = vmatprep.subr.bf16.mxu0 0
      %1422 = vmatpush2.bf16.msra.mxu0 0
      %1423 = vmatprep.subr.bf16.mxu0 0
      %1424 = vmatpush2.bf16.msra.mxu0 0
      %1425 = vmatprep.subr.bf16.mxu0 0
      %1426 = vmatpush2.bf16.msra.mxu0 0
      %1427 = vmatprep.subr.bf16.mxu0 0
      %1428 = vmatpush2.bf16.msra.mxu0 0
      %1429 = vmatprep.mubr.bf16.mxu0 0
      %1430 = vmatmul.mubr.bf16.gmra.mxu0 %v1371
      %v1431 = vpop.f32.mrf.mxu0
      %v1432 = vadd.f32 0.0, %v1431
      %v1433 = vpop.f32.mrf.mxu0
      %v1434 = vpop.f32.mrf.mxu0
      %v1435 = vadd.f32 0.0, %v1434
      %v1436 = vpop.f32.mrf.mxu0
      %1437 = vmatprep.mubr.bf16.mxu0 0
      %1438 = vmatmul.mubr.bf16.gmra.mxu0 %v1374
      %v1439 = vpop.f32.mrf.mxu0
      %v1440 = vadd.f32 0.0, %v1439
      %v1441 = vpop.f32.mrf.mxu0
      %v1442 = vpop.f32.mrf.mxu0
      %v1443 = vadd.f32 0.0, %v1442
      %v1444 = vpop.f32.mrf.mxu0
      %1445 = vmatprep.mubr.bf16.mxu0 0
      %1446 = vmatmul.mubr.bf16.gmra.mxu0 %v1377
      %v1447 = vpop.f32.mrf.mxu0
      %v1448 = vadd.f32 0.0, %v1447
      %v1449 = vpop.f32.mrf.mxu0
      %v1450 = vpop.f32.mrf.mxu0
      %v1451 = vadd.f32 0.0, %v1450
      %v1452 = vpop.f32.mrf.mxu0
      %1453 = vmatprep.mubr.bf16.mxu0 0
      %1454 = vmatmul.mubr.bf16.gmra.mxu0 %v1380
      %v1455 = vpop.f32.mrf.mxu0
      %v1456 = vadd.f32 0.0, %v1455
      %v1457 = vpop.f32.mrf.mxu0
      %v1458 = vpop.f32.mrf.mxu0
      %v1459 = vadd.f32 0.0, %v1458
      %v1460 = vpop.f32.mrf.mxu0
      %1461 = vmatprep.mubr.bf16.mxu0 0
      %1462 = vmatmul.mubr.bf16.gmra.mxu0 %v1383
      %v1463 = vpop.f32.mrf.mxu0
      %v1464 = vadd.f32 0.0, %v1463
      %v1465 = vpop.f32.mrf.mxu0
      %v1466 = vpop.f32.mrf.mxu0
      %v1467 = vadd.f32 0.0, %v1466
      %v1468 = vpop.f32.mrf.mxu0
      %1469 = vmatprep.mubr.bf16.mxu0 0
      %1470 = vmatmul.mubr.bf16.gmra.mxu0 %v1386
      %v1471 = vpop.f32.mrf.mxu0
      %v1472 = vadd.f32 0.0, %v1471
      %v1473 = vpop.f32.mrf.mxu0
      %v1474 = vpop.f32.mrf.mxu0
      %v1475 = vadd.f32 0.0, %v1474
      %v1476 = vpop.f32.mrf.mxu0
      %1477 = vmatprep.mubr.bf16.mxu0 0
      %1478 = vmatmul.mubr.bf16.gmra.mxu0 %v1389
      %v1479 = vpop.f32.mrf.mxu0
      %v1480 = vadd.f32 0.0, %v1479
      %v1481 = vpop.f32.mrf.mxu0
      %v1482 = vpop.f32.mrf.mxu0
      %v1483 = vadd.f32 0.0, %v1482
      %v1484 = vpop.f32.mrf.mxu0
      %1485 = vmatprep.mubr.bf16.mxu0 0
      %1486 = vmatmul.mubr.bf16.gmra.mxu0 %v1392
      %v1487 = vpop.f32.mrf.mxu0
      %v1488 = vadd.f32 0.0, %v1487
      %v1489 = vpop.f32.mrf.mxu0
      %v1490 = vpop.f32.mrf.mxu0
      %v1491 = vadd.f32 0.0, %v1490
      %v1492 = vpop.f32.mrf.mxu0
      %1493 = vdwg.mxu0
      %v1494 = vadd.f32 %v1295, %v1432
      %v1495 = vadd.f32 %v1296, %v1435
      %v1496 = vadd.f32 %v1297, %v1440
      %v1497 = vadd.f32 %v1298, %v1443
      %v1498 = vadd.f32 %v1299, %v1448
      %v1499 = vadd.f32 %v1300, %v1451
      %v1500 = vadd.f32 %v1301, %v1456
      %v1501 = vadd.f32 %v1302, %v1459
      %v1502 = vadd.f32 %v1303, %v1464
      %v1503 = vadd.f32 %v1304, %v1467
      %v1504 = vadd.f32 %v1305, %v1472
      %v1505 = vadd.f32 %v1306, %v1475
      %v1506 = vadd.f32 %v1307, %v1480
      %v1507 = vadd.f32 %v1308, %v1483
      %v1508 = vadd.f32 %v1309, %v1488
      %v1509 = vadd.f32 %v1310, %v1491
      %v1510 = vld [vmem:[%s1311] sm:$0xf]
      %v1511 = vld [vmem:[%s1311 + $0x4] sm:$0xf]
      %v1512 = vld [vmem:[%s1311 + $0x8] sm:$0x1]
      %v1513 = vld [vmem:[%s1311 + $0xc] sm:$0xf]
      %v1514 = vld [vmem:[%s1311 + $0x10] sm:$0xf]
      %v1515 = vld [vmem:[%s1311 + $0x14] sm:$0x1]
      %v1516 = vld [vmem:[%s1311 + $0x18] sm:$0xf]
      %v1517 = vld [vmem:[%s1311 + $0x1c] sm:$0xf]
      %v1518 = vld [vmem:[%s1311 + $0x20] sm:$0x1]
      %v1519 = vld [vmem:[%s1311 + $0x24] sm:$0xf]
      %v1520 = vld [vmem:[%s1311 + $0x28] sm:$0xf]
      %v1521 = vld [vmem:[%s1311 + $0x2c] sm:$0x1]
      %v1522 = vld [vmem:[%s1311 + $0x30] sm:$0xf]
      %v1523 = vld [vmem:[%s1311 + $0x34] sm:$0xf]
      %v1524 = vld [vmem:[%s1311 + $0x38] sm:$0x1]
      %v1525 = vld [vmem:[%s1311 + $0x3c] sm:$0xf]
      %v1526 = vld [vmem:[%s1311 + $0x40] sm:$0xf]
      %v1527 = vld [vmem:[%s1311 + $0x44] sm:$0x1]
      %v1528 = vld [vmem:[%s1311 + $0x48] sm:$0xf]
      %v1529 = vld [vmem:[%s1311 + $0x4c] sm:$0xf]
      %v1530 = vld [vmem:[%s1311 + $0x50] sm:$0x1]
      %v1531 = vld [vmem:[%s1311 + $0x54] sm:$0xf]
      %v1532 = vld [vmem:[%s1311 + $0x58] sm:$0xf]
      %v1533 = vld [vmem:[%s1311 + $0x5c] sm:$0x1]
      %v1535 = vshrl.u32 %v1510, 16
      %v1537 = vrot.slane %v1535, 4
      %v1538 = vshll.u32 %v1510, 16
      %v1540 = vrot.slane %v1538, 5
      %v1541 = vor.u32 %v1537, %v1540
      %v1542 = vrot.slane %v1541, 4
      %v1544 = vshll.u32 %v1511, 16
      %v1546 = vrot.slane %v1544, 5
      %v1547 = vsel %vm553, %v1542, %v1546
      %v1548 = vshrl.u32 %v1511, 16
      %v1550 = vrot.slane %v1548, 4
      %v1551 = vor.u32 %v1550, %v1546
      %v1552 = vrot.slane %v1551, 4
      %v1554 = vshll.u32 %v1512, 16
      %v1556 = vrot.slane %v1554, 5
      %v1557 = vsel %vm553, %v1552, %v1556
      %v1559 = vshrl.u32 %v1513, 16
      %v1561 = vrot.slane %v1559, 4
      %v1562 = vshll.u32 %v1513, 16
      %v1564 = vrot.slane %v1562, 5
      %v1565 = vor.u32 %v1561, %v1564
      %v1566 = vrot.slane %v1565, 4
      %v1568 = vshll.u32 %v1514, 16
      %v1570 = vrot.slane %v1568, 5
      %v1571 = vsel %vm553, %v1566, %v1570
      %v1572 = vshrl.u32 %v1514, 16
      %v1574 = vrot.slane %v1572, 4
      %v1575 = vor.u32 %v1574, %v1570
      %v1576 = vrot.slane %v1575, 4
      %v1578 = vshll.u32 %v1515, 16
      %v1580 = vrot.slane %v1578, 5
      %v1581 = vsel %vm553, %v1576, %v1580
      %v1583 = vshrl.u32 %v1516, 16
      %v1585 = vrot.slane %v1583, 4
      %v1586 = vshll.u32 %v1516, 16
      %v1588 = vrot.slane %v1586, 5
      %v1589 = vor.u32 %v1585, %v1588
      %v1590 = vrot.slane %v1589, 4
      %v1592 = vshll.u32 %v1517, 16
      %v1594 = vrot.slane %v1592, 5
      %v1595 = vsel %vm553, %v1590, %v1594
      %v1596 = vshrl.u32 %v1517, 16
      %v1598 = vrot.slane %v1596, 4
      %v1599 = vor.u32 %v1598, %v1594
      %v1600 = vrot.slane %v1599, 4
      %v1602 = vshll.u32 %v1518, 16
      %v1604 = vrot.slane %v1602, 5
      %v1605 = vsel %vm553, %v1600, %v1604
      %v1607 = vshrl.u32 %v1519, 16
      %v1609 = vrot.slane %v1607, 4
      %v1610 = vshll.u32 %v1519, 16
      %v1612 = vrot.slane %v1610, 5
      %v1613 = vor.u32 %v1609, %v1612
      %v1614 = vrot.slane %v1613, 4
      %v1616 = vshll.u32 %v1520, 16
      %v1618 = vrot.slane %v1616, 5
      %v1619 = vsel %vm553, %v1614, %v1618
      %v1620 = vshrl.u32 %v1520, 16
      %v1622 = vrot.slane %v1620, 4
      %v1623 = vor.u32 %v1622, %v1618
      %v1624 = vrot.slane %v1623, 4
      %v1626 = vshll.u32 %v1521, 16
      %v1628 = vrot.slane %v1626, 5
      %v1629 = vsel %vm553, %v1624, %v1628
      %v1631 = vshrl.u32 %v1522, 16
      %v1633 = vrot.slane %v1631, 4
      %v1634 = vshll.u32 %v1522, 16
      %v1636 = vrot.slane %v1634, 5
      %v1637 = vor.u32 %v1633, %v1636
      %v1638 = vrot.slane %v1637, 4
      %v1640 = vshll.u32 %v1523, 16
      %v1642 = vrot.slane %v1640, 5
      %v1643 = vsel %vm553, %v1638, %v1642
      %v1644 = vshrl.u32 %v1523, 16
      %v1646 = vrot.slane %v1644, 4
      %v1647 = vor.u32 %v1646, %v1642
      %v1648 = vrot.slane %v1647, 4
      %v1650 = vshll.u32 %v1524, 16
      %v1652 = vrot.slane %v1650, 5
      %v1653 = vsel %vm553, %v1648, %v1652
      %v1655 = vshrl.u32 %v1525, 16
      %v1657 = vrot.slane %v1655, 4
      %v1658 = vshll.u32 %v1525, 16
      %v1660 = vrot.slane %v1658, 5
      %v1661 = vor.u32 %v1657, %v1660
      %v1662 = vrot.slane %v1661, 4
      %v1664 = vshll.u32 %v1526, 16
      %v1666 = vrot.slane %v1664, 5
      %v1667 = vsel %vm553, %v1662, %v1666
      %v1668 = vshrl.u32 %v1526, 16
      %v1670 = vrot.slane %v1668, 4
      %v1671 = vor.u32 %v1670, %v1666
      %v1672 = vrot.slane %v1671, 4
      %v1674 = vshll.u32 %v1527, 16
      %v1676 = vrot.slane %v1674, 5
      %v1677 = vsel %vm553, %v1672, %v1676
      %v1679 = vshrl.u32 %v1528, 16
      %v1681 = vrot.slane %v1679, 4
      %v1682 = vshll.u32 %v1528, 16
      %v1684 = vrot.slane %v1682, 5
      %v1685 = vor.u32 %v1681, %v1684
      %v1686 = vrot.slane %v1685, 4
      %v1688 = vshll.u32 %v1529, 16
      %v1690 = vrot.slane %v1688, 5
      %v1691 = vsel %vm553, %v1686, %v1690
      %v1692 = vshrl.u32 %v1529, 16
      %v1694 = vrot.slane %v1692, 4
      %v1695 = vor.u32 %v1694, %v1690
      %v1696 = vrot.slane %v1695, 4
      %v1698 = vshll.u32 %v1530, 16
      %v1700 = vrot.slane %v1698, 5
      %v1701 = vsel %vm553, %v1696, %v1700
      %v1703 = vshrl.u32 %v1531, 16
      %v1705 = vrot.slane %v1703, 4
      %v1706 = vshll.u32 %v1531, 16
      %v1708 = vrot.slane %v1706, 5
      %v1709 = vor.u32 %v1705, %v1708
      %v1710 = vrot.slane %v1709, 4
      %v1712 = vshll.u32 %v1532, 16
      %v1714 = vrot.slane %v1712, 5
      %v1715 = vsel %vm553, %v1710, %v1714
      %v1716 = vshrl.u32 %v1532, 16
      %v1718 = vrot.slane %v1716, 4
      %v1719 = vor.u32 %v1718, %v1714
      %v1720 = vrot.slane %v1719, 4
      %v1722 = vshll.u32 %v1533, 16
      %v1724 = vrot.slane %v1722, 5
      %v1725 = vsel %vm553, %v1720, %v1724
      %s1726 = scalar_lea.vmem %s3, 8
      %v1727 = vld [vmem:[%s1726] sm:$0x3]
      %v1728 = vunpack.c.l.b16 %v1547
      %v1729 = vunpack.c.l.b16 %v1557
      %v1730 = vunpack.c.l.b16 %v1571
      %v1731 = vunpack.c.l.b16 %v1581
      %v1732 = vunpack.c.l.b16 %v1595
      %v1733 = vunpack.c.l.b16 %v1605
      %v1734 = vunpack.c.l.b16 %v1619
      %v1735 = vunpack.c.l.b16 %v1629
      %v1736 = vunpack.c.l.b16 %v1643
      %v1737 = vunpack.c.l.b16 %v1653
      %v1738 = vunpack.c.l.b16 %v1667
      %v1739 = vunpack.c.l.b16 %v1677
      %v1740 = vunpack.c.l.b16 %v1691
      %v1741 = vunpack.c.l.b16 %v1701
      %v1742 = vunpack.c.l.b16 %v1715
      %v1743 = vunpack.c.l.b16 %v1725
      %v1744 = vpack.c.b16 %v1729, %v1728
      %v1745 = vpack.c.b16 %v1731, %v1730
      %v1746 = vpack.c.b16 %v1733, %v1732
      %v1747 = vpack.c.b16 %v1735, %v1734
      %v1748 = vpack.c.b16 %v1737, %v1736
      %v1749 = vpack.c.b16 %v1739, %v1738
      %v1750 = vpack.c.b16 %v1741, %v1740
      %v1751 = vpack.c.b16 %v1743, %v1742
      %v1753 = vsel %vm772, %v1744, 0
      %v1756 = vsel %vm772, %v1745, 0
      %v1759 = vsel %vm772, %v1746, 0
      %v1762 = vsel %vm772, %v1747, 0
      %v1765 = vsel %vm772, %v1748, 0
      %v1768 = vsel %vm772, %v1749, 0
      %v1771 = vsel %vm772, %v1750, 0
      %v1774 = vsel %vm772, %v1751, 0
      %v1777 = vsel %vm797, %v1727, 0
      %1779 = vmatprep.subr.bf16.mxu0 0
      %1780 = vmatpush1.bf16.msra.mxu0 0
      %1781 = vmatprep.subr.bf16.mxu0 0
      %1782 = vmatpush1.bf16.msra.mxu0 0
      %1783 = vmatprep.subr.bf16.mxu0 0
      %1784 = vmatpush1.bf16.msra.mxu0 0
      %1785 = vmatprep.subr.bf16.mxu0 0
      %1786 = vmatpush1.bf16.msra.mxu0 0
      %1787 = vmatprep.subr.bf16.mxu0 0
      %1788 = vmatpush1.bf16.msra.mxu0 0
      %1789 = vmatprep.subr.bf16.mxu0 0
      %1790 = vmatpush1.bf16.msra.mxu0 0
      %1791 = vmatprep.subr.bf16.mxu0 0
      %1792 = vmatpush1.bf16.msra.mxu0 0
      %1793 = vmatprep.subr.bf16.mxu0 0
      %1794 = vmatpush1.bf16.msra.mxu0 %v1777
      %1795 = vmatprep.subr.bf16.mxu0 0
      %1796 = vmatpush2.bf16.msra.mxu0 0
      %1797 = vmatprep.subr.bf16.mxu0 0
      %1798 = vmatpush2.bf16.msra.mxu0 0
      %1799 = vmatprep.subr.bf16.mxu0 0
      %1800 = vmatpush2.bf16.msra.mxu0 0
      %1801 = vmatprep.subr.bf16.mxu0 0
      %1802 = vmatpush2.bf16.msra.mxu0 0
      %1803 = vmatprep.subr.bf16.mxu0 0
      %1804 = vmatpush2.bf16.msra.mxu0 0
      %1805 = vmatprep.subr.bf16.mxu0 0
      %1806 = vmatpush2.bf16.msra.mxu0 0
      %1807 = vmatprep.subr.bf16.mxu0 0
      %1808 = vmatpush2.bf16.msra.mxu0 0
      %1809 = vmatprep.subr.bf16.mxu0 0
      %1810 = vmatpush2.bf16.msra.mxu0 0
      %1811 = vmatprep.mubr.bf16.mxu0 0
      %1812 = vmatmul.mubr.bf16.gmra.mxu0 %v1753
      %v1813 = vpop.f32.mrf.mxu0
      %v1814 = vadd.f32 0.0, %v1813
      %v1815 = vpop.f32.mrf.mxu0
      %v1816 = vpop.f32.mrf.mxu0
      %v1817 = vadd.f32 0.0, %v1816
      %v1818 = vpop.f32.mrf.mxu0
      %1819 = vmatprep.mubr.bf16.mxu0 0
      %1820 = vmatmul.mubr.bf16.gmra.mxu0 %v1756
      %v1821 = vpop.f32.mrf.mxu0
      %v1822 = vadd.f32 0.0, %v1821
      %v1823 = vpop.f32.mrf.mxu0
      %v1824 = vpop.f32.mrf.mxu0
      %v1825 = vadd.f32 0.0, %v1824
      %v1826 = vpop.f32.mrf.mxu0
      %1827 = vmatprep.mubr.bf16.mxu0 0
      %1828 = vmatmul.mubr.bf16.gmra.mxu0 %v1759
      %v1829 = vpop.f32.mrf.mxu0
      %v1830 = vadd.f32 0.0, %v1829
      %v1831 = vpop.f32.mrf.mxu0
      %v1832 = vpop.f32.mrf.mxu0
      %v1833 = vadd.f32 0.0, %v1832
      %v1834 = vpop.f32.mrf.mxu0
      %1835 = vmatprep.mubr.bf16.mxu0 0
      %1836 = vmatmul.mubr.bf16.gmra.mxu0 %v1762
      %v1837 = vpop.f32.mrf.mxu0
      %v1838 = vadd.f32 0.0, %v1837
      %v1839 = vpop.f32.mrf.mxu0
      %v1840 = vpop.f32.mrf.mxu0
      %v1841 = vadd.f32 0.0, %v1840
      %v1842 = vpop.f32.mrf.mxu0
      %1843 = vmatprep.mubr.bf16.mxu0 0
      %1844 = vmatmul.mubr.bf16.gmra.mxu0 %v1765
      %v1845 = vpop.f32.mrf.mxu0
      %v1846 = vadd.f32 0.0, %v1845
      %v1847 = vpop.f32.mrf.mxu0
      %v1848 = vpop.f32.mrf.mxu0
      %v1849 = vadd.f32 0.0, %v1848
      %v1850 = vpop.f32.mrf.mxu0
      %1851 = vmatprep.mubr.bf16.mxu0 0
      %1852 = vmatmul.mubr.bf16.gmra.mxu0 %v1768
      %v1853 = vpop.f32.mrf.mxu0
      %v1854 = vadd.f32 0.0, %v1853
      %v1855 = vpop.f32.mrf.mxu0
      %v1856 = vpop.f32.mrf.mxu0
      %v1857 = vadd.f32 0.0, %v1856
      %v1858 = vpop.f32.mrf.mxu0
      %1859 = vmatprep.mubr.bf16.mxu0 0
      %1860 = vmatmul.mubr.bf16.gmra.mxu0 %v1771
      %v1861 = vpop.f32.mrf.mxu0
      %v1862 = vadd.f32 0.0, %v1861
      %v1863 = vpop.f32.mrf.mxu0
      %v1864 = vpop.f32.mrf.mxu0
      %v1865 = vadd.f32 0.0, %v1864
      %v1866 = vpop.f32.mrf.mxu0
      %1867 = vmatprep.mubr.bf16.mxu0 0
      %1868 = vmatmul.mubr.bf16.gmra.mxu0 %v1774
      %v1869 = vpop.f32.mrf.mxu0
      %v1870 = vadd.f32 0.0, %v1869
      %v1871 = vpop.f32.mrf.mxu0
      %v1872 = vpop.f32.mrf.mxu0
      %v1873 = vadd.f32 0.0, %v1872
      %v1874 = vpop.f32.mrf.mxu0
      %1875 = vdwg.mxu0
      %v1876 = vadd.f32 %v1494, %v1814
      %v1877 = vadd.f32 %v1495, %v1817
      %v1878 = vadd.f32 %v1496, %v1822
      %v1879 = vadd.f32 %v1497, %v1825
      %v1880 = vadd.f32 %v1498, %v1830
      %v1881 = vadd.f32 %v1499, %v1833
      %v1882 = vadd.f32 %v1500, %v1838
      %v1883 = vadd.f32 %v1501, %v1841
      %v1884 = vadd.f32 %v1502, %v1846
      %v1885 = vadd.f32 %v1503, %v1849
      %v1886 = vadd.f32 %v1504, %v1854
      %v1887 = vadd.f32 %v1505, %v1857
      %v1888 = vadd.f32 %v1506, %v1862
      %v1889 = vadd.f32 %v1507, %v1865
      %v1890 = vadd.f32 %v1508, %v1870
      %v1891 = vadd.f32 %v1509, %v1873
      %v1892 = vld [vmem:[%s1311] sm:$0xe]
      %v1893 = vld [vmem:[%s1311 + $0xc] sm:$0xe]
      %v1894 = vld [vmem:[%s1311 + $0x18] sm:$0xe]
      %v1895 = vld [vmem:[%s1311 + $0x24] sm:$0xe]
      %v1896 = vld [vmem:[%s1311 + $0x30] sm:$0xe]
      %v1897 = vld [vmem:[%s1311 + $0x3c] sm:$0xe]
      %v1898 = vld [vmem:[%s1311 + $0x48] sm:$0xe]
      %v1899 = vld [vmem:[%s1311 + $0x54] sm:$0xe]
      %v1924 = vrot.slane %v1892, 5
      %v1925 = vrot.slane %v1924, 4
      %v1926 = vrot.slane %v1511, 5
      %v1927 = vsel %vm1088, %v1925, %v1926
      %v1928 = vrot.slane %v1926, 4
      %v1929 = vrot.slane %v1512, 5
      %v1930 = vsel %vm1088, %v1928, %v1929
      %v1931 = vrot.slane %v1893, 5
      %v1932 = vrot.slane %v1931, 4
      %v1933 = vrot.slane %v1514, 5
      %v1934 = vsel %vm1088, %v1932, %v1933
      %v1935 = vrot.slane %v1933, 4
      %v1936 = vrot.slane %v1515, 5
      %v1937 = vsel %vm1088, %v1935, %v1936
      %v1938 = vrot.slane %v1894, 5
      %v1939 = vrot.slane %v1938, 4
      %v1940 = vrot.slane %v1517, 5
      %v1941 = vsel %vm1088, %v1939, %v1940
      %v1942 = vrot.slane %v1940, 4
      %v1943 = vrot.slane %v1518, 5
      %v1944 = vsel %vm1088, %v1942, %v1943
      %v1945 = vrot.slane %v1895, 5
      %v1946 = vrot.slane %v1945, 4
      %v1947 = vrot.slane %v1520, 5
      %v1948 = vsel %vm1088, %v1946, %v1947
      %v1949 = vrot.slane %v1947, 4
      %v1950 = vrot.slane %v1521, 5
      %v1951 = vsel %vm1088, %v1949, %v1950
      %v1952 = vrot.slane %v1896, 5
      %v1953 = vrot.slane %v1952, 4
      %v1954 = vrot.slane %v1523, 5
      %v1955 = vsel %vm1088, %v1953, %v1954
      %v1956 = vrot.slane %v1954, 4
      %v1957 = vrot.slane %v1524, 5
      %v1958 = vsel %vm1088, %v1956, %v1957
      %v1959 = vrot.slane %v1897, 5
      %v1960 = vrot.slane %v1959, 4
      %v1961 = vrot.slane %v1526, 5
      %v1962 = vsel %vm1088, %v1960, %v1961
      %v1963 = vrot.slane %v1961, 4
      %v1964 = vrot.slane %v1527, 5
      %v1965 = vsel %vm1088, %v1963, %v1964
      %v1966 = vrot.slane %v1898, 5
      %v1967 = vrot.slane %v1966, 4
      %v1968 = vrot.slane %v1529, 5
      %v1969 = vsel %vm1088, %v1967, %v1968
      %v1970 = vrot.slane %v1968, 4
      %v1971 = vrot.slane %v1530, 5
      %v1972 = vsel %vm1088, %v1970, %v1971
      %v1973 = vrot.slane %v1899, 5
      %v1974 = vrot.slane %v1973, 4
      %v1975 = vrot.slane %v1532, 5
      %v1976 = vsel %vm1088, %v1974, %v1975
      %v1977 = vrot.slane %v1975, 4
      %v1978 = vrot.slane %v1533, 5
      %v1979 = vsel %vm1088, %v1977, %v1978
      %s1980 = scalar_lea.vmem %s3, 10
      %v1981 = vld [vmem:[%s1980] sm:$0x3]
      %v1982 = vunpack.c.l.b16 %v1927
      %v1983 = vunpack.c.l.b16 %v1930
      %v1984 = vunpack.c.l.b16 %v1934
      %v1985 = vunpack.c.l.b16 %v1937
      %v1986 = vunpack.c.l.b16 %v1941
      %v1987 = vunpack.c.l.b16 %v1944
      %v1988 = vunpack.c.l.b16 %v1948
      %v1989 = vunpack.c.l.b16 %v1951
      %v1990 = vunpack.c.l.b16 %v1955
      %v1991 = vunpack.c.l.b16 %v1958
      %v1992 = vunpack.c.l.b16 %v1962
      %v1993 = vunpack.c.l.b16 %v1965
      %v1994 = vunpack.c.l.b16 %v1969
      %v1995 = vunpack.c.l.b16 %v1972
      %v1996 = vunpack.c.l.b16 %v1976
      %v1997 = vunpack.c.l.b16 %v1979
      %v1998 = vpack.c.b16 %v1983, %v1982
      %v1999 = vpack.c.b16 %v1985, %v1984
      %v2000 = vpack.c.b16 %v1987, %v1986
      %v2001 = vpack.c.b16 %v1989, %v1988
      %v2002 = vpack.c.b16 %v1991, %v1990
      %v2003 = vpack.c.b16 %v1993, %v1992
      %v2004 = vpack.c.b16 %v1995, %v1994
      %v2005 = vpack.c.b16 %v1997, %v1996
      %v2007 = vsel %vm772, %v1998, 0
      %v2010 = vsel %vm772, %v1999, 0
      %v2013 = vsel %vm772, %v2000, 0
      %v2016 = vsel %vm772, %v2001, 0
      %v2019 = vsel %vm772, %v2002, 0
      %v2022 = vsel %vm772, %v2003, 0
      %v2025 = vsel %vm772, %v2004, 0
      %v2028 = vsel %vm772, %v2005, 0
      %v2031 = vsel %vm797, %v1981, 0
      %2033 = vmatprep.subr.bf16.mxu0 0
      %2034 = vmatpush1.bf16.msra.mxu0 0
      %2035 = vmatprep.subr.bf16.mxu0 0
      %2036 = vmatpush1.bf16.msra.mxu0 0
      %2037 = vmatprep.subr.bf16.mxu0 0
      %2038 = vmatpush1.bf16.msra.mxu0 0
      %2039 = vmatprep.subr.bf16.mxu0 0
      %2040 = vmatpush1.bf16.msra.mxu0 0
      %2041 = vmatprep.subr.bf16.mxu0 0
      %2042 = vmatpush1.bf16.msra.mxu0 0
      %2043 = vmatprep.subr.bf16.mxu0 0
      %2044 = vmatpush1.bf16.msra.mxu0 0
      %2045 = vmatprep.subr.bf16.mxu0 0
      %2046 = vmatpush1.bf16.msra.mxu0 0
      %2047 = vmatprep.subr.bf16.mxu0 0
      %2048 = vmatpush1.bf16.msra.mxu0 %v2031
      %2049 = vmatprep.subr.bf16.mxu0 0
      %2050 = vmatpush2.bf16.msra.mxu0 0
      %2051 = vmatprep.subr.bf16.mxu0 0
      %2052 = vmatpush2.bf16.msra.mxu0 0
      %2053 = vmatprep.subr.bf16.mxu0 0
      %2054 = vmatpush2.bf16.msra.mxu0 0
      %2055 = vmatprep.subr.bf16.mxu0 0
      %2056 = vmatpush2.bf16.msra.mxu0 0
      %2057 = vmatprep.subr.bf16.mxu0 0
      %2058 = vmatpush2.bf16.msra.mxu0 0
      %2059 = vmatprep.subr.bf16.mxu0 0
      %2060 = vmatpush2.bf16.msra.mxu0 0
      %2061 = vmatprep.subr.bf16.mxu0 0
      %2062 = vmatpush2.bf16.msra.mxu0 0
      %2063 = vmatprep.subr.bf16.mxu0 0
      %2064 = vmatpush2.bf16.msra.mxu0 0
      %2065 = vmatprep.mubr.bf16.mxu0 0
      %2066 = vmatmul.mubr.bf16.gmra.mxu0 %v2007
      %v2067 = vpop.f32.mrf.mxu0
      %v2068 = vadd.f32 0.0, %v2067
      %v2069 = vpop.f32.mrf.mxu0
      %v2070 = vpop.f32.mrf.mxu0
      %v2071 = vadd.f32 0.0, %v2070
      %v2072 = vpop.f32.mrf.mxu0
      %2073 = vmatprep.mubr.bf16.mxu0 0
      %2074 = vmatmul.mubr.bf16.gmra.mxu0 %v2010
      %v2075 = vpop.f32.mrf.mxu0
      %v2076 = vadd.f32 0.0, %v2075
      %v2077 = vpop.f32.mrf.mxu0
      %v2078 = vpop.f32.mrf.mxu0
      %v2079 = vadd.f32 0.0, %v2078
      %v2080 = vpop.f32.mrf.mxu0
      %2081 = vmatprep.mubr.bf16.mxu0 0
      %2082 = vmatmul.mubr.bf16.gmra.mxu0 %v2013
      %v2083 = vpop.f32.mrf.mxu0
      %v2084 = vadd.f32 0.0, %v2083
      %v2085 = vpop.f32.mrf.mxu0
      %v2086 = vpop.f32.mrf.mxu0
      %v2087 = vadd.f32 0.0, %v2086
      %v2088 = vpop.f32.mrf.mxu0
      %2089 = vmatprep.mubr.bf16.mxu0 0
      %2090 = vmatmul.mubr.bf16.gmra.mxu0 %v2016
      %v2091 = vpop.f32.mrf.mxu0
      %v2092 = vadd.f32 0.0, %v2091
      %v2093 = vpop.f32.mrf.mxu0
      %v2094 = vpop.f32.mrf.mxu0
      %v2095 = vadd.f32 0.0, %v2094
      %v2096 = vpop.f32.mrf.mxu0
      %2097 = vmatprep.mubr.bf16.mxu0 0
      %2098 = vmatmul.mubr.bf16.gmra.mxu0 %v2019
      %v2099 = vpop.f32.mrf.mxu0
      %v2100 = vadd.f32 0.0, %v2099
      %v2101 = vpop.f32.mrf.mxu0
      %v2102 = vpop.f32.mrf.mxu0
      %v2103 = vadd.f32 0.0, %v2102
      %v2104 = vpop.f32.mrf.mxu0
      %2105 = vmatprep.mubr.bf16.mxu0 0
      %2106 = vmatmul.mubr.bf16.gmra.mxu0 %v2022
      %v2107 = vpop.f32.mrf.mxu0
      %v2108 = vadd.f32 0.0, %v2107
      %v2109 = vpop.f32.mrf.mxu0
      %v2110 = vpop.f32.mrf.mxu0
      %v2111 = vadd.f32 0.0, %v2110
      %v2112 = vpop.f32.mrf.mxu0
      %2113 = vmatprep.mubr.bf16.mxu0 0
      %2114 = vmatmul.mubr.bf16.gmra.mxu0 %v2025
      %v2115 = vpop.f32.mrf.mxu0
      %v2116 = vadd.f32 0.0, %v2115
      %v2117 = vpop.f32.mrf.mxu0
      %v2118 = vpop.f32.mrf.mxu0
      %v2119 = vadd.f32 0.0, %v2118
      %v2120 = vpop.f32.mrf.mxu0
      %2121 = vmatprep.mubr.bf16.mxu0 0
      %2122 = vmatmul.mubr.bf16.gmra.mxu0 %v2028
      %v2123 = vpop.f32.mrf.mxu0
      %v2124 = vadd.f32 0.0, %v2123
      %v2125 = vpop.f32.mrf.mxu0
      %v2126 = vpop.f32.mrf.mxu0
      %v2127 = vadd.f32 0.0, %v2126
      %v2128 = vpop.f32.mrf.mxu0
      %2129 = vdwg.mxu0
      %v2130 = vadd.f32 %v1876, %v2068
      %v2131 = vadd.f32 %v1877, %v2071
      %v2132 = vadd.f32 %v1878, %v2076
      %v2133 = vadd.f32 %v1879, %v2079
      %v2134 = vadd.f32 %v1880, %v2084
      %v2135 = vadd.f32 %v1881, %v2087
      %v2136 = vadd.f32 %v1882, %v2092
      %v2137 = vadd.f32 %v1883, %v2095
      %v2138 = vadd.f32 %v1884, %v2100
      %v2139 = vadd.f32 %v1885, %v2103
      %v2140 = vadd.f32 %v1886, %v2108
      %v2141 = vadd.f32 %v1887, %v2111
      %v2142 = vadd.f32 %v1888, %v2116
      %v2143 = vadd.f32 %v1889, %v2119
      %v2144 = vadd.f32 %v1890, %v2124
      %v2145 = vadd.f32 %v1891, %v2127
      %s2146 = scalar_lea.vmem [#allocation2], 24
      %v2147 = vld [vmem:[%s2146] sm:$0xf]
      %v2148 = vld [vmem:[%s2146 + $0x4] sm:$0xf]
      %v2149 = vld [vmem:[%s2146 + $0xc] sm:$0xf]
      %v2150 = vld [vmem:[%s2146 + $0x10] sm:$0xf]
      %v2151 = vld [vmem:[%s2146 + $0x18] sm:$0xf]
      %v2152 = vld [vmem:[%s2146 + $0x1c] sm:$0xf]
      %v2153 = vld [vmem:[%s2146 + $0x24] sm:$0xf]
      %v2154 = vld [vmem:[%s2146 + $0x28] sm:$0xf]
      %v2155 = vld [vmem:[%s2146 + $0x30] sm:$0xf]
      %v2156 = vld [vmem:[%s2146 + $0x34] sm:$0xf]
      %v2157 = vld [vmem:[%s2146 + $0x3c] sm:$0xf]
      %v2158 = vld [vmem:[%s2146 + $0x40] sm:$0xf]
      %v2159 = vld [vmem:[%s2146 + $0x48] sm:$0xf]
      %v2160 = vld [vmem:[%s2146 + $0x4c] sm:$0xf]
      %v2161 = vld [vmem:[%s2146 + $0x54] sm:$0xf]
      %v2162 = vld [vmem:[%s2146 + $0x58] sm:$0xf]
      %s2163 = scalar_lea.vmem %s3, 12
      %v2164 = vld [vmem:[%s2163] sm:$0x3]
      %v2181 = vunpack.c.l.b16 %v2147
      %v2182 = vunpack.c.l.b16 %v2148
      %v2183 = vunpack.c.l.b16 %v2149
      %v2184 = vunpack.c.l.b16 %v2150
      %v2185 = vunpack.c.l.b16 %v2151
      %v2186 = vunpack.c.l.b16 %v2152
      %v2187 = vunpack.c.l.b16 %v2153
      %v2188 = vunpack.c.l.b16 %v2154
      %v2189 = vunpack.c.l.b16 %v2155
      %v2190 = vunpack.c.l.b16 %v2156
      %v2191 = vunpack.c.l.b16 %v2157
      %v2192 = vunpack.c.l.b16 %v2158
      %v2193 = vunpack.c.l.b16 %v2159
      %v2194 = vunpack.c.l.b16 %v2160
      %v2195 = vunpack.c.l.b16 %v2161
      %v2196 = vunpack.c.l.b16 %v2162
      %v2197 = vpack.c.b16 %v2182, %v2181
      %v2198 = vpack.c.b16 %v2184, %v2183
      %v2199 = vpack.c.b16 %v2186, %v2185
      %v2200 = vpack.c.b16 %v2188, %v2187
      %v2201 = vpack.c.b16 %v2190, %v2189
      %v2202 = vpack.c.b16 %v2192, %v2191
      %v2203 = vpack.c.b16 %v2194, %v2193
      %v2204 = vpack.c.b16 %v2196, %v2195
      %v2206 = vsel %vm772, %v2197, 0
      %v2209 = vsel %vm772, %v2198, 0
      %v2212 = vsel %vm772, %v2199, 0
      %v2215 = vsel %vm772, %v2200, 0
      %v2218 = vsel %vm772, %v2201, 0
      %v2221 = vsel %vm772, %v2202, 0
      %v2224 = vsel %vm772, %v2203, 0
      %v2227 = vsel %vm772, %v2204, 0
      %v2230 = vsel %vm797, %v2164, 0
      %2232 = vmatprep.subr.bf16.mxu0 0
      %2233 = vmatpush1.bf16.msra.mxu0 0
      %2234 = vmatprep.subr.bf16.mxu0 0
      %2235 = vmatpush1.bf16.msra.mxu0 0
      %2236 = vmatprep.subr.bf16.mxu0 0
      %2237 = vmatpush1.bf16.msra.mxu0 0
      %2238 = vmatprep.subr.bf16.mxu0 0
      %2239 = vmatpush1.bf16.msra.mxu0 0
      %2240 = vmatprep.subr.bf16.mxu0 0
      %2241 = vmatpush1.bf16.msra.mxu0 0
      %2242 = vmatprep.subr.bf16.mxu0 0
      %2243 = vmatpush1.bf16.msra.mxu0 0
      %2244 = vmatprep.subr.bf16.mxu0 0
      %2245 = vmatpush1.bf16.msra.mxu0 0
      %2246 = vmatprep.subr.bf16.mxu0 0
      %2247 = vmatpush1.bf16.msra.mxu0 %v2230
      %2248 = vmatprep.subr.bf16.mxu0 0
      %2249 = vmatpush2.bf16.msra.mxu0 0
      %2250 = vmatprep.subr.bf16.mxu0 0
      %2251 = vmatpush2.bf16.msra.mxu0 0
      %2252 = vmatprep.subr.bf16.mxu0 0
      %2253 = vmatpush2.bf16.msra.mxu0 0
      %2254 = vmatprep.subr.bf16.mxu0 0
      %2255 = vmatpush2.bf16.msra.mxu0 0
      %2256 = vmatprep.subr.bf16.mxu0 0
      %2257 = vmatpush2.bf16.msra.mxu0 0
      %2258 = vmatprep.subr.bf16.mxu0 0
      %2259 = vmatpush2.bf16.msra.mxu0 0
      %2260 = vmatprep.subr.bf16.mxu0 0
      %2261 = vmatpush2.bf16.msra.mxu0 0
      %2262 = vmatprep.subr.bf16.mxu0 0
      %2263 = vmatpush2.bf16.msra.mxu0 0
      %2264 = vmatprep.mubr.bf16.mxu0 0
      %2265 = vmatmul.mubr.bf16.gmra.mxu0 %v2206
      %v2266 = vpop.f32.mrf.mxu0
      %v2267 = vadd.f32 0.0, %v2266
      %v2268 = vpop.f32.mrf.mxu0
      %v2269 = vpop.f32.mrf.mxu0
      %v2270 = vadd.f32 0.0, %v2269
      %v2271 = vpop.f32.mrf.mxu0
      %2272 = vmatprep.mubr.bf16.mxu0 0
      %2273 = vmatmul.mubr.bf16.gmra.mxu0 %v2209
      %v2274 = vpop.f32.mrf.mxu0
      %v2275 = vadd.f32 0.0, %v2274
      %v2276 = vpop.f32.mrf.mxu0
      %v2277 = vpop.f32.mrf.mxu0
      %v2278 = vadd.f32 0.0, %v2277
      %v2279 = vpop.f32.mrf.mxu0
      %2280 = vmatprep.mubr.bf16.mxu0 0
      %2281 = vmatmul.mubr.bf16.gmra.mxu0 %v2212
      %v2282 = vpop.f32.mrf.mxu0
      %v2283 = vadd.f32 0.0, %v2282
      %v2284 = vpop.f32.mrf.mxu0
      %v2285 = vpop.f32.mrf.mxu0
      %v2286 = vadd.f32 0.0, %v2285
      %v2287 = vpop.f32.mrf.mxu0
      %2288 = vmatprep.mubr.bf16.mxu0 0
      %2289 = vmatmul.mubr.bf16.gmra.mxu0 %v2215
      %v2290 = vpop.f32.mrf.mxu0
      %v2291 = vadd.f32 0.0, %v2290
      %v2292 = vpop.f32.mrf.mxu0
      %v2293 = vpop.f32.mrf.mxu0
      %v2294 = vadd.f32 0.0, %v2293
      %v2295 = vpop.f32.mrf.mxu0
      %2296 = vmatprep.mubr.bf16.mxu0 0
      %2297 = vmatmul.mubr.bf16.gmra.mxu0 %v2218
      %v2298 = vpop.f32.mrf.mxu0
      %v2299 = vadd.f32 0.0, %v2298
      %v2300 = vpop.f32.mrf.mxu0
      %v2301 = vpop.f32.mrf.mxu0
      %v2302 = vadd.f32 0.0, %v2301
      %v2303 = vpop.f32.mrf.mxu0
      %2304 = vmatprep.mubr.bf16.mxu0 0
      %2305 = vmatmul.mubr.bf16.gmra.mxu0 %v2221
      %v2306 = vpop.f32.mrf.mxu0
      %v2307 = vadd.f32 0.0, %v2306
      %v2308 = vpop.f32.mrf.mxu0
      %v2309 = vpop.f32.mrf.mxu0
      %v2310 = vadd.f32 0.0, %v2309
      %v2311 = vpop.f32.mrf.mxu0
      %2312 = vmatprep.mubr.bf16.mxu0 0
      %2313 = vmatmul.mubr.bf16.gmra.mxu0 %v2224
      %v2314 = vpop.f32.mrf.mxu0
      %v2315 = vadd.f32 0.0, %v2314
      %v2316 = vpop.f32.mrf.mxu0
      %v2317 = vpop.f32.mrf.mxu0
      %v2318 = vadd.f32 0.0, %v2317
      %v2319 = vpop.f32.mrf.mxu0
      %2320 = vmatprep.mubr.bf16.mxu0 0
      %2321 = vmatmul.mubr.bf16.gmra.mxu0 %v2227
      %v2322 = vpop.f32.mrf.mxu0
      %v2323 = vadd.f32 0.0, %v2322
      %v2324 = vpop.f32.mrf.mxu0
      %v2325 = vpop.f32.mrf.mxu0
      %v2326 = vadd.f32 0.0, %v2325
      %v2327 = vpop.f32.mrf.mxu0
      %2328 = vdwg.mxu0
      %v2329 = vadd.f32 %v2130, %v2267
      %v2330 = vadd.f32 %v2131, %v2270
      %v2331 = vadd.f32 %v2132, %v2275
      %v2332 = vadd.f32 %v2133, %v2278
      %v2333 = vadd.f32 %v2134, %v2283
      %v2334 = vadd.f32 %v2135, %v2286
      %v2335 = vadd.f32 %v2136, %v2291
      %v2336 = vadd.f32 %v2137, %v2294
      %v2337 = vadd.f32 %v2138, %v2299
      %v2338 = vadd.f32 %v2139, %v2302
      %v2339 = vadd.f32 %v2140, %v2307
      %v2340 = vadd.f32 %v2141, %v2310
      %v2341 = vadd.f32 %v2142, %v2315
      %v2342 = vadd.f32 %v2143, %v2318
      %v2343 = vadd.f32 %v2144, %v2323
      %v2344 = vadd.f32 %v2145, %v2326
      %v2345 = vld [vmem:[%s2146] sm:$0xf]
      %v2346 = vld [vmem:[%s2146 + $0x4] sm:$0xf]
      %v2347 = vld [vmem:[%s2146 + $0x8] sm:$0x1]
      %v2348 = vld [vmem:[%s2146 + $0xc] sm:$0xf]
      %v2349 = vld [vmem:[%s2146 + $0x10] sm:$0xf]
      %v2350 = vld [vmem:[%s2146 + $0x14] sm:$0x1]
      %v2351 = vld [vmem:[%s2146 + $0x18] sm:$0xf]
      %v2352 = vld [vmem:[%s2146 + $0x1c] sm:$0xf]
      %v2353 = vld [vmem:[%s2146 + $0x20] sm:$0x1]
      %v2354 = vld [vmem:[%s2146 + $0x24] sm:$0xf]
      %v2355 = vld [vmem:[%s2146 + $0x28] sm:$0xf]
      %v2356 = vld [vmem:[%s2146 + $0x2c] sm:$0x1]
      %v2357 = vld [vmem:[%s2146 + $0x30] sm:$0xf]
      %v2358 = vld [vmem:[%s2146 + $0x34] sm:$0xf]
      %v2359 = vld [vmem:[%s2146 + $0x38] sm:$0x1]
      %v2360 = vld [vmem:[%s2146 + $0x3c] sm:$0xf]
      %v2361 = vld [vmem:[%s2146 + $0x40] sm:$0xf]
      %v2362 = vld [vmem:[%s2146 + $0x44] sm:$0x1]
      %v2363 = vld [vmem:[%s2146 + $0x48] sm:$0xf]
      %v2364 = vld [vmem:[%s2146 + $0x4c] sm:$0xf]
      %v2365 = vld [vmem:[%s2146 + $0x50] sm:$0x1]
      %v2366 = vld [vmem:[%s2146 + $0x54] sm:$0xf]
      %v2367 = vld [vmem:[%s2146 + $0x58] sm:$0xf]
      %v2368 = vld [vmem:[%s2146 + $0x5c] sm:$0x1]
      %v2370 = vshrl.u32 %v2345, 16
      %v2372 = vrot.slane %v2370, 4
      %v2373 = vshll.u32 %v2345, 16
      %v2375 = vrot.slane %v2373, 5
      %v2376 = vor.u32 %v2372, %v2375
      %v2377 = vrot.slane %v2376, 4
      %v2379 = vshll.u32 %v2346, 16
      %v2381 = vrot.slane %v2379, 5
      %v2382 = vsel %vm553, %v2377, %v2381
      %v2383 = vshrl.u32 %v2346, 16
      %v2385 = vrot.slane %v2383, 4
      %v2386 = vor.u32 %v2385, %v2381
      %v2387 = vrot.slane %v2386, 4
      %v2389 = vshll.u32 %v2347, 16
      %v2391 = vrot.slane %v2389, 5
      %v2392 = vsel %vm553, %v2387, %v2391
      %v2394 = vshrl.u32 %v2348, 16
      %v2396 = vrot.slane %v2394, 4
      %v2397 = vshll.u32 %v2348, 16
      %v2399 = vrot.slane %v2397, 5
      %v2400 = vor.u32 %v2396, %v2399
      %v2401 = vrot.slane %v2400, 4
      %v2403 = vshll.u32 %v2349, 16
      %v2405 = vrot.slane %v2403, 5
      %v2406 = vsel %vm553, %v2401, %v2405
      %v2407 = vshrl.u32 %v2349, 16
      %v2409 = vrot.slane %v2407, 4
      %v2410 = vor.u32 %v2409, %v2405
      %v2411 = vrot.slane %v2410, 4
      %v2413 = vshll.u32 %v2350, 16
      %v2415 = vrot.slane %v2413, 5
      %v2416 = vsel %vm553, %v2411, %v2415
      %v2418 = vshrl.u32 %v2351, 16
      %v2420 = vrot.slane %v2418, 4
      %v2421 = vshll.u32 %v2351, 16
      %v2423 = vrot.slane %v2421, 5
      %v2424 = vor.u32 %v2420, %v2423
      %v2425 = vrot.slane %v2424, 4
      %v2427 = vshll.u32 %v2352, 16
      %v2429 = vrot.slane %v2427, 5
      %v2430 = vsel %vm553, %v2425, %v2429
      %v2431 = vshrl.u32 %v2352, 16
      %v2433 = vrot.slane %v2431, 4
      %v2434 = vor.u32 %v2433, %v2429
      %v2435 = vrot.slane %v2434, 4
      %v2437 = vshll.u32 %v2353, 16
      %v2439 = vrot.slane %v2437, 5
      %v2440 = vsel %vm553, %v2435, %v2439
      %v2442 = vshrl.u32 %v2354, 16
      %v2444 = vrot.slane %v2442, 4
      %v2445 = vshll.u32 %v2354, 16
      %v2447 = vrot.slane %v2445, 5
      %v2448 = vor.u32 %v2444, %v2447
      %v2449 = vrot.slane %v2448, 4
      %v2451 = vshll.u32 %v2355, 16
      %v2453 = vrot.slane %v2451, 5
      %v2454 = vsel %vm553, %v2449, %v2453
      %v2455 = vshrl.u32 %v2355, 16
      %v2457 = vrot.slane %v2455, 4
      %v2458 = vor.u32 %v2457, %v2453
      %v2459 = vrot.slane %v2458, 4
      %v2461 = vshll.u32 %v2356, 16
      %v2463 = vrot.slane %v2461, 5
      %v2464 = vsel %vm553, %v2459, %v2463
      %v2466 = vshrl.u32 %v2357, 16
      %v2468 = vrot.slane %v2466, 4
      %v2469 = vshll.u32 %v2357, 16
      %v2471 = vrot.slane %v2469, 5
      %v2472 = vor.u32 %v2468, %v2471
      %v2473 = vrot.slane %v2472, 4
      %v2475 = vshll.u32 %v2358, 16
      %v2477 = vrot.slane %v2475, 5
      %v2478 = vsel %vm553, %v2473, %v2477
      %v2479 = vshrl.u32 %v2358, 16
      %v2481 = vrot.slane %v2479, 4
      %v2482 = vor.u32 %v2481, %v2477
      %v2483 = vrot.slane %v2482, 4
      %v2485 = vshll.u32 %v2359, 16
      %v2487 = vrot.slane %v2485, 5
      %v2488 = vsel %vm553, %v2483, %v2487
      %v2490 = vshrl.u32 %v2360, 16
      %v2492 = vrot.slane %v2490, 4
      %v2493 = vshll.u32 %v2360, 16
      %v2495 = vrot.slane %v2493, 5
      %v2496 = vor.u32 %v2492, %v2495
      %v2497 = vrot.slane %v2496, 4
      %v2499 = vshll.u32 %v2361, 16
      %v2501 = vrot.slane %v2499, 5
      %v2502 = vsel %vm553, %v2497, %v2501
      %v2503 = vshrl.u32 %v2361, 16
      %v2505 = vrot.slane %v2503, 4
      %v2506 = vor.u32 %v2505, %v2501
      %v2507 = vrot.slane %v2506, 4
      %v2509 = vshll.u32 %v2362, 16
      %v2511 = vrot.slane %v2509, 5
      %v2512 = vsel %vm553, %v2507, %v2511
      %v2514 = vshrl.u32 %v2363, 16
      %v2516 = vrot.slane %v2514, 4
      %v2517 = vshll.u32 %v2363, 16
      %v2519 = vrot.slane %v2517, 5
      %v2520 = vor.u32 %v2516, %v2519
      %v2521 = vrot.slane %v2520, 4
      %v2523 = vshll.u32 %v2364, 16
      %v2525 = vrot.slane %v2523, 5
      %v2526 = vsel %vm553, %v2521, %v2525
      %v2527 = vshrl.u32 %v2364, 16
      %v2529 = vrot.slane %v2527, 4
      %v2530 = vor.u32 %v2529, %v2525
      %v2531 = vrot.slane %v2530, 4
      %v2533 = vshll.u32 %v2365, 16
      %v2535 = vrot.slane %v2533, 5
      %v2536 = vsel %vm553, %v2531, %v2535
      %v2538 = vshrl.u32 %v2366, 16
      %v2540 = vrot.slane %v2538, 4
      %v2541 = vshll.u32 %v2366, 16
      %v2543 = vrot.slane %v2541, 5
      %v2544 = vor.u32 %v2540, %v2543
      %v2545 = vrot.slane %v2544, 4
      %v2547 = vshll.u32 %v2367, 16
      %v2549 = vrot.slane %v2547, 5
      %v2550 = vsel %vm553, %v2545, %v2549
      %v2551 = vshrl.u32 %v2367, 16
      %v2553 = vrot.slane %v2551, 4
      %v2554 = vor.u32 %v2553, %v2549
      %v2555 = vrot.slane %v2554, 4
      %v2557 = vshll.u32 %v2368, 16
      %v2559 = vrot.slane %v2557, 5
      %v2560 = vsel %vm553, %v2555, %v2559
      %s2561 = scalar_lea.vmem %s3, 14
      %v2562 = vld [vmem:[%s2561] sm:$0x3]
      %v2563 = vunpack.c.l.b16 %v2382
      %v2564 = vunpack.c.l.b16 %v2392
      %v2565 = vunpack.c.l.b16 %v2406
      %v2566 = vunpack.c.l.b16 %v2416
      %v2567 = vunpack.c.l.b16 %v2430
      %v2568 = vunpack.c.l.b16 %v2440
      %v2569 = vunpack.c.l.b16 %v2454
      %v2570 = vunpack.c.l.b16 %v2464
      %v2571 = vunpack.c.l.b16 %v2478
      %v2572 = vunpack.c.l.b16 %v2488
      %v2573 = vunpack.c.l.b16 %v2502
      %v2574 = vunpack.c.l.b16 %v2512
      %v2575 = vunpack.c.l.b16 %v2526
      %v2576 = vunpack.c.l.b16 %v2536
      %v2577 = vunpack.c.l.b16 %v2550
      %v2578 = vunpack.c.l.b16 %v2560
      %v2579 = vpack.c.b16 %v2564, %v2563
      %v2580 = vpack.c.b16 %v2566, %v2565
      %v2581 = vpack.c.b16 %v2568, %v2567
      %v2582 = vpack.c.b16 %v2570, %v2569
      %v2583 = vpack.c.b16 %v2572, %v2571
      %v2584 = vpack.c.b16 %v2574, %v2573
      %v2585 = vpack.c.b16 %v2576, %v2575
      %v2586 = vpack.c.b16 %v2578, %v2577
      %v2588 = vsel %vm772, %v2579, 0
      %v2591 = vsel %vm772, %v2580, 0
      %v2594 = vsel %vm772, %v2581, 0
      %v2597 = vsel %vm772, %v2582, 0
      %v2600 = vsel %vm772, %v2583, 0
      %v2603 = vsel %vm772, %v2584, 0
      %v2606 = vsel %vm772, %v2585, 0
      %v2609 = vsel %vm772, %v2586, 0
      %v2612 = vsel %vm797, %v2562, 0
      %2614 = vmatprep.subr.bf16.mxu0 0
      %2615 = vmatpush1.bf16.msra.mxu0 0
      %2616 = vmatprep.subr.bf16.mxu0 0
      %2617 = vmatpush1.bf16.msra.mxu0 0
      %2618 = vmatprep.subr.bf16.mxu0 0
      %2619 = vmatpush1.bf16.msra.mxu0 0
      %2620 = vmatprep.subr.bf16.mxu0 0
      %2621 = vmatpush1.bf16.msra.mxu0 0
      %2622 = vmatprep.subr.bf16.mxu0 0
      %2623 = vmatpush1.bf16.msra.mxu0 0
      %2624 = vmatprep.subr.bf16.mxu0 0
      %2625 = vmatpush1.bf16.msra.mxu0 0
      %2626 = vmatprep.subr.bf16.mxu0 0
      %2627 = vmatpush1.bf16.msra.mxu0 0
      %2628 = vmatprep.subr.bf16.mxu0 0
      %2629 = vmatpush1.bf16.msra.mxu0 %v2612
      %2630 = vmatprep.subr.bf16.mxu0 0
      %2631 = vmatpush2.bf16.msra.mxu0 0
      %2632 = vmatprep.subr.bf16.mxu0 0
      %2633 = vmatpush2.bf16.msra.mxu0 0
      %2634 = vmatprep.subr.bf16.mxu0 0
      %2635 = vmatpush2.bf16.msra.mxu0 0
      %2636 = vmatprep.subr.bf16.mxu0 0
      %2637 = vmatpush2.bf16.msra.mxu0 0
      %2638 = vmatprep.subr.bf16.mxu0 0
      %2639 = vmatpush2.bf16.msra.mxu0 0
      %2640 = vmatprep.subr.bf16.mxu0 0
      %2641 = vmatpush2.bf16.msra.mxu0 0
      %2642 = vmatprep.subr.bf16.mxu0 0
      %2643 = vmatpush2.bf16.msra.mxu0 0
      %2644 = vmatprep.subr.bf16.mxu0 0
      %2645 = vmatpush2.bf16.msra.mxu0 0
      %2646 = vmatprep.mubr.bf16.mxu0 0
      %2647 = vmatmul.mubr.bf16.gmra.mxu0 %v2588
      %v2648 = vpop.f32.mrf.mxu0
      %v2649 = vadd.f32 0.0, %v2648
      %v2650 = vpop.f32.mrf.mxu0
      %v2651 = vpop.f32.mrf.mxu0
      %v2652 = vadd.f32 0.0, %v2651
      %v2653 = vpop.f32.mrf.mxu0
      %2654 = vmatprep.mubr.bf16.mxu0 0
      %2655 = vmatmul.mubr.bf16.gmra.mxu0 %v2591
      %v2656 = vpop.f32.mrf.mxu0
      %v2657 = vadd.f32 0.0, %v2656
      %v2658 = vpop.f32.mrf.mxu0
      %v2659 = vpop.f32.mrf.mxu0
      %v2660 = vadd.f32 0.0, %v2659
      %v2661 = vpop.f32.mrf.mxu0
      %2662 = vmatprep.mubr.bf16.mxu0 0
      %2663 = vmatmul.mubr.bf16.gmra.mxu0 %v2594
      %v2664 = vpop.f32.mrf.mxu0
      %v2665 = vadd.f32 0.0, %v2664
      %v2666 = vpop.f32.mrf.mxu0
      %v2667 = vpop.f32.mrf.mxu0
      %v2668 = vadd.f32 0.0, %v2667
      %v2669 = vpop.f32.mrf.mxu0
      %2670 = vmatprep.mubr.bf16.mxu0 0
      %2671 = vmatmul.mubr.bf16.gmra.mxu0 %v2597
      %v2672 = vpop.f32.mrf.mxu0
      %v2673 = vadd.f32 0.0, %v2672
      %v2674 = vpop.f32.mrf.mxu0
      %v2675 = vpop.f32.mrf.mxu0
      %v2676 = vadd.f32 0.0, %v2675
      %v2677 = vpop.f32.mrf.mxu0
      %2678 = vmatprep.mubr.bf16.mxu0 0
      %2679 = vmatmul.mubr.bf16.gmra.mxu0 %v2600
      %v2680 = vpop.f32.mrf.mxu0
      %v2681 = vadd.f32 0.0, %v2680
      %v2682 = vpop.f32.mrf.mxu0
      %v2683 = vpop.f32.mrf.mxu0
      %v2684 = vadd.f32 0.0, %v2683
      %v2685 = vpop.f32.mrf.mxu0
      %2686 = vmatprep.mubr.bf16.mxu0 0
      %2687 = vmatmul.mubr.bf16.gmra.mxu0 %v2603
      %v2688 = vpop.f32.mrf.mxu0
      %v2689 = vadd.f32 0.0, %v2688
      %v2690 = vpop.f32.mrf.mxu0
      %v2691 = vpop.f32.mrf.mxu0
      %v2692 = vadd.f32 0.0, %v2691
      %v2693 = vpop.f32.mrf.mxu0
      %2694 = vmatprep.mubr.bf16.mxu0 0
      %2695 = vmatmul.mubr.bf16.gmra.mxu0 %v2606
      %v2696 = vpop.f32.mrf.mxu0
      %v2697 = vadd.f32 0.0, %v2696
      %v2698 = vpop.f32.mrf.mxu0
      %v2699 = vpop.f32.mrf.mxu0
      %v2700 = vadd.f32 0.0, %v2699
      %v2701 = vpop.f32.mrf.mxu0
      %2702 = vmatprep.mubr.bf16.mxu0 0
      %2703 = vmatmul.mubr.bf16.gmra.mxu0 %v2609
      %v2704 = vpop.f32.mrf.mxu0
      %v2705 = vadd.f32 0.0, %v2704
      %v2706 = vpop.f32.mrf.mxu0
      %v2707 = vpop.f32.mrf.mxu0
      %v2708 = vadd.f32 0.0, %v2707
      %v2709 = vpop.f32.mrf.mxu0
      %2710 = vdwg.mxu0
      %v2711 = vadd.f32 %v2329, %v2649
      %v2712 = vadd.f32 %v2330, %v2652
      %v2713 = vadd.f32 %v2331, %v2657
      %v2714 = vadd.f32 %v2332, %v2660
      %v2715 = vadd.f32 %v2333, %v2665
      %v2716 = vadd.f32 %v2334, %v2668
      %v2717 = vadd.f32 %v2335, %v2673
      %v2718 = vadd.f32 %v2336, %v2676
      %v2719 = vadd.f32 %v2337, %v2681
      %v2720 = vadd.f32 %v2338, %v2684
      %v2721 = vadd.f32 %v2339, %v2689
      %v2722 = vadd.f32 %v2340, %v2692
      %v2723 = vadd.f32 %v2341, %v2697
      %v2724 = vadd.f32 %v2342, %v2700
      %v2725 = vadd.f32 %v2343, %v2705
      %v2726 = vadd.f32 %v2344, %v2708
      %v2727 = vld [vmem:[%s2146] sm:$0xe]
      %v2728 = vld [vmem:[%s2146 + $0xc] sm:$0xe]
      %v2729 = vld [vmem:[%s2146 + $0x18] sm:$0xe]
      %v2730 = vld [vmem:[%s2146 + $0x24] sm:$0xe]
      %v2731 = vld [vmem:[%s2146 + $0x30] sm:$0xe]
      %v2732 = vld [vmem:[%s2146 + $0x3c] sm:$0xe]
      %v2733 = vld [vmem:[%s2146 + $0x48] sm:$0xe]
      %v2734 = vld [vmem:[%s2146 + $0x54] sm:$0xe]
      %v2759 = vrot.slane %v2727, 5
      %v2760 = vrot.slane %v2759, 4
      %v2761 = vrot.slane %v2346, 5
      %v2762 = vsel %vm1088, %v2760, %v2761
      %v2763 = vrot.slane %v2761, 4
      %v2764 = vrot.slane %v2347, 5
      %v2765 = vsel %vm1088, %v2763, %v2764
      %v2766 = vrot.slane %v2728, 5
      %v2767 = vrot.slane %v2766, 4
      %v2768 = vrot.slane %v2349, 5
      %v2769 = vsel %vm1088, %v2767, %v2768
      %v2770 = vrot.slane %v2768, 4
      %v2771 = vrot.slane %v2350, 5
      %v2772 = vsel %vm1088, %v2770, %v2771
      %v2773 = vrot.slane %v2729, 5
      %v2774 = vrot.slane %v2773, 4
      %v2775 = vrot.slane %v2352, 5
      %v2776 = vsel %vm1088, %v2774, %v2775
      %v2777 = vrot.slane %v2775, 4
      %v2778 = vrot.slane %v2353, 5
      %v2779 = vsel %vm1088, %v2777, %v2778
      %v2780 = vrot.slane %v2730, 5
      %v2781 = vrot.slane %v2780, 4
      %v2782 = vrot.slane %v2355, 5
      %v2783 = vsel %vm1088, %v2781, %v2782
      %v2784 = vrot.slane %v2782, 4
      %v2785 = vrot.slane %v2356, 5
      %v2786 = vsel %vm1088, %v2784, %v2785
      %v2787 = vrot.slane %v2731, 5
      %v2788 = vrot.slane %v2787, 4
      %v2789 = vrot.slane %v2358, 5
      %v2790 = vsel %vm1088, %v2788, %v2789
      %v2791 = vrot.slane %v2789, 4
      %v2792 = vrot.slane %v2359, 5
      %v2793 = vsel %vm1088, %v2791, %v2792
      %v2794 = vrot.slane %v2732, 5
      %v2795 = vrot.slane %v2794, 4
      %v2796 = vrot.slane %v2361, 5
      %v2797 = vsel %vm1088, %v2795, %v2796
      %v2798 = vrot.slane %v2796, 4
      %v2799 = vrot.slane %v2362, 5
      %v2800 = vsel %vm1088, %v2798, %v2799
      %v2801 = vrot.slane %v2733, 5
      %v2802 = vrot.slane %v2801, 4
      %v2803 = vrot.slane %v2364, 5
      %v2804 = vsel %vm1088, %v2802, %v2803
      %v2805 = vrot.slane %v2803, 4
      %v2806 = vrot.slane %v2365, 5
      %v2807 = vsel %vm1088, %v2805, %v2806
      %v2808 = vrot.slane %v2734, 5
      %v2809 = vrot.slane %v2808, 4
      %v2810 = vrot.slane %v2367, 5
      %v2811 = vsel %vm1088, %v2809, %v2810
      %v2812 = vrot.slane %v2810, 4
      %v2813 = vrot.slane %v2368, 5
      %v2814 = vsel %vm1088, %v2812, %v2813
      %s2815 = scalar_lea.vmem %s3, 16
      %v2816 = vld [vmem:[%s2815] sm:$0x3]
      %v2817 = vunpack.c.l.b16 %v2762
      %v2818 = vunpack.c.l.b16 %v2765
      %v2819 = vunpack.c.l.b16 %v2769
      %v2820 = vunpack.c.l.b16 %v2772
      %v2821 = vunpack.c.l.b16 %v2776
      %v2822 = vunpack.c.l.b16 %v2779
      %v2823 = vunpack.c.l.b16 %v2783
      %v2824 = vunpack.c.l.b16 %v2786
      %v2825 = vunpack.c.l.b16 %v2790
      %v2826 = vunpack.c.l.b16 %v2793
      %v2827 = vunpack.c.l.b16 %v2797
      %v2828 = vunpack.c.l.b16 %v2800
      %v2829 = vunpack.c.l.b16 %v2804
      %v2830 = vunpack.c.l.b16 %v2807
      %v2831 = vunpack.c.l.b16 %v2811
      %v2832 = vunpack.c.l.b16 %v2814
      %v2833 = vpack.c.b16 %v2818, %v2817
      %v2834 = vpack.c.b16 %v2820, %v2819
      %v2835 = vpack.c.b16 %v2822, %v2821
      %v2836 = vpack.c.b16 %v2824, %v2823
      %v2837 = vpack.c.b16 %v2826, %v2825
      %v2838 = vpack.c.b16 %v2828, %v2827
      %v2839 = vpack.c.b16 %v2830, %v2829
      %v2840 = vpack.c.b16 %v2832, %v2831
      %v2842 = vsel %vm772, %v2833, 0
      %v2845 = vsel %vm772, %v2834, 0
      %v2848 = vsel %vm772, %v2835, 0
      %v2851 = vsel %vm772, %v2836, 0
      %v2854 = vsel %vm772, %v2837, 0
      %v2857 = vsel %vm772, %v2838, 0
      %v2860 = vsel %vm772, %v2839, 0
      %v2863 = vsel %vm772, %v2840, 0
      %v2866 = vsel %vm797, %v2816, 0
      %2868 = vmatprep.subr.bf16.mxu0 0
      %2869 = vmatpush1.bf16.msra.mxu0 0
      %2870 = vmatprep.subr.bf16.mxu0 0
      %2871 = vmatpush1.bf16.msra.mxu0 0
      %2872 = vmatprep.subr.bf16.mxu0 0
      %2873 = vmatpush1.bf16.msra.mxu0 0
      %2874 = vmatprep.subr.bf16.mxu0 0
      %2875 = vmatpush1.bf16.msra.mxu0 0
      %2876 = vmatprep.subr.bf16.mxu0 0
      %2877 = vmatpush1.bf16.msra.mxu0 0
      %2878 = vmatprep.subr.bf16.mxu0 0
      %2879 = vmatpush1.bf16.msra.mxu0 0
      %2880 = vmatprep.subr.bf16.mxu0 0
      %2881 = vmatpush1.bf16.msra.mxu0 0
      %2882 = vmatprep.subr.bf16.mxu0 0
      %2883 = vmatpush1.bf16.msra.mxu0 %v2866
      %2884 = vmatprep.subr.bf16.mxu0 0
      %2885 = vmatpush2.bf16.msra.mxu0 0
      %2886 = vmatprep.subr.bf16.mxu0 0
      %2887 = vmatpush2.bf16.msra.mxu0 0
      %2888 = vmatprep.subr.bf16.mxu0 0
      %2889 = vmatpush2.bf16.msra.mxu0 0
      %2890 = vmatprep.subr.bf16.mxu0 0
      %2891 = vmatpush2.bf16.msra.mxu0 0
      %2892 = vmatprep.subr.bf16.mxu0 0
      %2893 = vmatpush2.bf16.msra.mxu0 0
      %2894 = vmatprep.subr.bf16.mxu0 0
      %2895 = vmatpush2.bf16.msra.mxu0 0
      %2896 = vmatprep.subr.bf16.mxu0 0
      %2897 = vmatpush2.bf16.msra.mxu0 0
      %2898 = vmatprep.subr.bf16.mxu0 0
      %2899 = vmatpush2.bf16.msra.mxu0 0
      %2900 = vmatprep.mubr.bf16.mxu0 0
      %2901 = vmatmul.mubr.bf16.gmra.mxu0 %v2842
      %v2902 = vpop.f32.mrf.mxu0
      %v2903 = vadd.f32 0.0, %v2902
      %v2904 = vpop.f32.mrf.mxu0
      %v2905 = vpop.f32.mrf.mxu0
      %v2906 = vadd.f32 0.0, %v2905
      %v2907 = vpop.f32.mrf.mxu0
      %2908 = vmatprep.mubr.bf16.mxu0 0
      %2909 = vmatmul.mubr.bf16.gmra.mxu0 %v2845
      %v2910 = vpop.f32.mrf.mxu0
      %v2911 = vadd.f32 0.0, %v2910
      %v2912 = vpop.f32.mrf.mxu0
      %v2913 = vpop.f32.mrf.mxu0
      %v2914 = vadd.f32 0.0, %v2913
      %v2915 = vpop.f32.mrf.mxu0
      %2916 = vmatprep.mubr.bf16.mxu0 0
      %2917 = vmatmul.mubr.bf16.gmra.mxu0 %v2848
      %v2918 = vpop.f32.mrf.mxu0
      %v2919 = vadd.f32 0.0, %v2918
      %v2920 = vpop.f32.mrf.mxu0
      %v2921 = vpop.f32.mrf.mxu0
      %v2922 = vadd.f32 0.0, %v2921
      %v2923 = vpop.f32.mrf.mxu0
      %2924 = vmatprep.mubr.bf16.mxu0 0
      %2925 = vmatmul.mubr.bf16.gmra.mxu0 %v2851
      %v2926 = vpop.f32.mrf.mxu0
      %v2927 = vadd.f32 0.0, %v2926
      %v2928 = vpop.f32.mrf.mxu0
      %v2929 = vpop.f32.mrf.mxu0
      %v2930 = vadd.f32 0.0, %v2929
      %v2931 = vpop.f32.mrf.mxu0
      %2932 = vmatprep.mubr.bf16.mxu0 0
      %2933 = vmatmul.mubr.bf16.gmra.mxu0 %v2854
      %v2934 = vpop.f32.mrf.mxu0
      %v2935 = vadd.f32 0.0, %v2934
      %v2936 = vpop.f32.mrf.mxu0
      %v2937 = vpop.f32.mrf.mxu0
      %v2938 = vadd.f32 0.0, %v2937
      %v2939 = vpop.f32.mrf.mxu0
      %2940 = vmatprep.mubr.bf16.mxu0 0
      %2941 = vmatmul.mubr.bf16.gmra.mxu0 %v2857
      %v2942 = vpop.f32.mrf.mxu0
      %v2943 = vadd.f32 0.0, %v2942
      %v2944 = vpop.f32.mrf.mxu0
      %v2945 = vpop.f32.mrf.mxu0
      %v2946 = vadd.f32 0.0, %v2945
      %v2947 = vpop.f32.mrf.mxu0
      %2948 = vmatprep.mubr.bf16.mxu0 0
      %2949 = vmatmul.mubr.bf16.gmra.mxu0 %v2860
      %v2950 = vpop.f32.mrf.mxu0
      %v2951 = vadd.f32 0.0, %v2950
      %v2952 = vpop.f32.mrf.mxu0
      %v2953 = vpop.f32.mrf.mxu0
      %v2954 = vadd.f32 0.0, %v2953
      %v2955 = vpop.f32.mrf.mxu0
      %2956 = vmatprep.mubr.bf16.mxu0 0
      %2957 = vmatmul.mubr.bf16.gmra.mxu0 %v2863
      %v2958 = vpop.f32.mrf.mxu0
      %v2959 = vadd.f32 0.0, %v2958
      %v2960 = vpop.f32.mrf.mxu0
      %v2961 = vpop.f32.mrf.mxu0
      %v2962 = vadd.f32 0.0, %v2961
      %v2963 = vpop.f32.mrf.mxu0
      %2964 = vdwg.mxu0
      %v2965 = vadd.f32 %v2711, %v2903
      %v2966 = vadd.f32 %v2712, %v2906
      %v2967 = vadd.f32 %v2713, %v2911
      %v2968 = vadd.f32 %v2714, %v2914
      %v2969 = vadd.f32 %v2715, %v2919
      %v2970 = vadd.f32 %v2716, %v2922
      %v2971 = vadd.f32 %v2717, %v2927
      %v2972 = vadd.f32 %v2718, %v2930
      %v2973 = vadd.f32 %v2719, %v2935
      %v2974 = vadd.f32 %v2720, %v2938
      %v2975 = vadd.f32 %v2721, %v2943
      %v2976 = vadd.f32 %v2722, %v2946
      %v2977 = vadd.f32 %v2723, %v2951
      %v2978 = vadd.f32 %v2724, %v2954
      %v2979 = vadd.f32 %v2725, %v2959
      %v2980 = vadd.f32 %v2726, %v2962
      %vm2981 = vcmask 261120
      %2982 = vst.msk [vmem:[%s445] sm:$0xff] %vm2981, %v2965
      %2983 = vst.msk [vmem:[%s445 + $0x8] sm:$0xff] %vm2981, %v2966
      %2984 = vst.msk [vmem:[%s445 + $0x10] sm:$0xff] %vm2981, %v2967
      %2985 = vst.msk [vmem:[%s445 + $0x18] sm:$0xff] %vm2981, %v2968
      %2986 = vst.msk [vmem:[%s445 + $0x20] sm:$0xff] %vm2981, %v2969
      %2987 = vst.msk [vmem:[%s445 + $0x28] sm:$0xff] %vm2981, %v2970
      %2988 = vst.msk [vmem:[%s445 + $0x30] sm:$0xff] %vm2981, %v2971
      %2989 = vst.msk [vmem:[%s445 + $0x38] sm:$0xff] %vm2981, %v2972
      %2990 = vst.msk [vmem:[%s445 + $0x40] sm:$0xff] %vm2981, %v2973
      %2991 = vst.msk [vmem:[%s445 + $0x48] sm:$0xff] %vm2981, %v2974
      %2992 = vst.msk [vmem:[%s445 + $0x50] sm:$0xff] %vm2981, %v2975
      %2993 = vst.msk [vmem:[%s445 + $0x58] sm:$0xff] %vm2981, %v2976
      %2994 = vst.msk [vmem:[%s445 + $0x60] sm:$0xff] %vm2981, %v2977
      %2995 = vst.msk [vmem:[%s445 + $0x68] sm:$0xff] %vm2981, %v2978
      %2996 = vst.msk [vmem:[%s445 + $0x70] sm:$0xff] %vm2981, %v2979
      %2997 = vst.msk [vmem:[%s445 + $0x78] sm:$0xff] %vm2981, %v2980
      %v2998 = vsel %vm2981, %v2965, 0.0
      %v2999 = vsel %vm2981, %v2966, 0.0
      %v3000 = vadd.f32 %v2998, %v2999
      %v3001 = vsel %vm2981, %v2967, 0.0
      %v3002 = vadd.f32 %v3000, %v3001
      %v3003 = vsel %vm2981, %v2968, 0.0
      %v3004 = vadd.f32 %v3002, %v3003
      %v3005 = vsel %vm2981, %v2969, 0.0
      %v3006 = vadd.f32 %v3004, %v3005
      %v3007 = vsel %vm2981, %v2970, 0.0
      %v3008 = vadd.f32 %v3006, %v3007
      %v3009 = vsel %vm2981, %v2971, 0.0
      %v3010 = vadd.f32 %v3008, %v3009
      %v3011 = vsel %vm2981, %v2972, 0.0
      %v3012 = vadd.f32 %v3010, %v3011
      %v3013 = vsel %vm2981, %v2973, 0.0
      %v3014 = vadd.f32 %v3012, %v3013
      %v3015 = vsel %vm2981, %v2974, 0.0
      %v3016 = vadd.f32 %v3014, %v3015
      %v3017 = vsel %vm2981, %v2975, 0.0
      %v3018 = vadd.f32 %v3016, %v3017
      %v3019 = vsel %vm2981, %v2976, 0.0
      %v3020 = vadd.f32 %v3018, %v3019
      %v3021 = vsel %vm2981, %v2977, 0.0
      %v3022 = vadd.f32 %v3020, %v3021
      %v3023 = vsel %vm2981, %v2978, 0.0
      %v3024 = vadd.f32 %v3022, %v3023
      %v3025 = vsel %vm2981, %v2979, 0.0
      %v3026 = vadd.f32 %v3024, %v3025
      %v3027 = vsel %vm2981, %v2980, 0.0
      %v3028 = vadd.f32 %v3026, %v3027
      %v3029 = vrot.slane %v3028, 4
      %v3030 = vadd.f32 %v3028, %v3029
      %v3031 = vrot.slane %v3030, 2
      %v3032 = vadd.f32 %v3030, %v3031
      %v3033 = vrot.slane %v3032, 1
      %v3034 = vadd.f32 %v3032, %v3033
      %vm3035 = vcmask 253952
      %3036 = vst.msk [vmem:[%s453] sm:$0x1] %vm3035, %v3034
      %v3037 = vmul.f32 %v2965, %v2965
      %v3038 = vmul.f32 %v2966, %v2966
      %v3039 = vmul.f32 %v2967, %v2967
      %v3040 = vmul.f32 %v2968, %v2968
      %v3041 = vmul.f32 %v2969, %v2969
      %v3042 = vmul.f32 %v2970, %v2970
      %v3043 = vmul.f32 %v2971, %v2971
      %v3044 = vmul.f32 %v2972, %v2972
      %v3045 = vmul.f32 %v2973, %v2973
      %v3046 = vmul.f32 %v2974, %v2974
      %v3047 = vmul.f32 %v2975, %v2975
      %v3048 = vmul.f32 %v2976, %v2976
      %v3049 = vmul.f32 %v2977, %v2977
      %v3050 = vmul.f32 %v2978, %v2978
      %v3051 = vmul.f32 %v2979, %v2979
      %v3052 = vmul.f32 %v2980, %v2980
      %v3053 = vsel %vm2981, %v3037, 0.0
      %v3054 = vsel %vm2981, %v3038, 0.0
      %v3055 = vadd.f32 %v3053, %v3054
      %v3056 = vsel %vm2981, %v3039, 0.0
      %v3057 = vadd.f32 %v3055, %v3056
      %v3058 = vsel %vm2981, %v3040, 0.0
      %v3059 = vadd.f32 %v3057, %v3058
      %v3060 = vsel %vm2981, %v3041, 0.0
      %v3061 = vadd.f32 %v3059, %v3060
      %v3062 = vsel %vm2981, %v3042, 0.0
      %v3063 = vadd.f32 %v3061, %v3062
      %v3064 = vsel %vm2981, %v3043, 0.0
      %v3065 = vadd.f32 %v3063, %v3064
      %v3066 = vsel %vm2981, %v3044, 0.0
      %v3067 = vadd.f32 %v3065, %v3066
      %v3068 = vsel %vm2981, %v3045, 0.0
      %v3069 = vadd.f32 %v3067, %v3068
      %v3070 = vsel %vm2981, %v3046, 0.0
      %v3071 = vadd.f32 %v3069, %v3070
      %v3072 = vsel %vm2981, %v3047, 0.0
      %v3073 = vadd.f32 %v3071, %v3072
      %v3074 = vsel %vm2981, %v3048, 0.0
      %v3075 = vadd.f32 %v3073, %v3074
      %v3076 = vsel %vm2981, %v3049, 0.0
      %v3077 = vadd.f32 %v3075, %v3076
      %v3078 = vsel %vm2981, %v3050, 0.0
      %v3079 = vadd.f32 %v3077, %v3078
      %v3080 = vsel %vm2981, %v3051, 0.0
      %v3081 = vadd.f32 %v3079, %v3080
      %v3082 = vsel %vm2981, %v3052, 0.0
      %v3083 = vadd.f32 %v3081, %v3082
      %v3084 = vrot.slane %v3083, 4
      %v3085 = vadd.f32 %v3083, %v3084
      %v3086 = vrot.slane %v3085, 2
      %v3087 = vadd.f32 %v3085, %v3086
      %v3088 = vrot.slane %v3087, 1
      %v3089 = vadd.f32 %v3087, %v3088
      %3090 = vst.msk [vmem:[%s460] sm:$0x1] %vm3035, %v3089
      %s3091 = smul.u32 8, %s23
      %p3092 = scmp.lt.s32.totalorder %s22, 1
      %s3093 = scalar_select %p3092, %s22, 1
      %p3094 = scmp.lt.s32.totalorder %s3091, 15
      %s3095 = scalar_select %p3094, %s3091, 15
      %s3096 = smul.addr %s3095, 2
      %s3097 = smul.addr %s3093, 32
      %s3098 = sadd.s32 %s3096, %s3097
      %s3099 = smul.addr %s3098, 8
      %s3100 = scalar_lea.vmem %s4, %s3099
      %p3101 = scmp.lt.s32.totalorder %s22, 1
      %s3102 = scalar_select %p3101, %s22, 1
      %p3103 = scmp.lt.s32.totalorder %s23, 1
      %s3104 = scalar_select %p3103, %s23, 1
      %s3105 = smul.addr %s3102, 2
      %s3106 = sadd.s32 %s3104, %s3105
      %s3107 = scalar_lea.vmem %s5, %s3106
      %p3108 = scmp.lt.s32.totalorder %s22, 1
      %s3109 = scalar_select %p3108, %s22, 1
      %p3110 = scmp.lt.s32.totalorder %s23, 1
      %s3111 = scalar_select %p3110, %s23, 1
      %s3112 = smul.addr %s3109, 2
      %s3113 = sadd.s32 %s3111, %s3112
      %s3114 = scalar_lea.vmem %s6, %s3113
      // Predicated region
      $region37: #{single_conv_forward.2} parent=35 // pred_check
        %p3115 = pneg %p165
      $region38: #{single_conv_forward.2} parent=35 // pred_check_branch
        %3117 = sbr.rel (%p3115) target = $region40
      $region39: #{single_conv_forward.2} parent=35 // pred_region
        %s3118 = smul.u32 8, %s23
      $region40: #{single_conv_forward.2} parent=35 // pred_fallthru
        _
      // Predicated region
      $region41: #{single_conv_forward.2} parent=35 // pred_check
        %p3119 = pneg %p193
      $region42: #{single_conv_forward.2} parent=35 // pred_check_branch
        %3121 = sbr.rel (%p3119) target = $region44
      $region43: #{single_conv_forward.2} parent=35 // pred_region
        _
      $region44: #{single_conv_forward.2} parent=35 // pred_fallthru
        _
      // Predicated region
      $region45: #{single_conv_forward.2} parent=35 // pred_check
        %p3122 = pneg %p221
      $region46: #{single_conv_forward.2} parent=35 // pred_check_branch
        %3124 = sbr.rel (%p3122) target = $region48
      $region47: #{single_conv_forward.2} parent=35 // pred_region
        _
      $region48: #{single_conv_forward.2} parent=35 // pred_fallthru
        _
    $region36: #{single_conv_forward.2} parent=5 // pred_fallthru
      _
    %p3125 = scmp.le.s32.totalorder 2, %s13
    // Predicated region
    $region49: #{single_conv_forward.2} parent=5 // pred_check
      %p3126 = pneg %p3125
    $region50: #{single_conv_forward.2} parent=5 // pred_check_branch
      %3128 = sbr.rel (%p3126) target = $region52
    $region51: #{single_conv_forward.2} parent=5 // pred_region
      %s3129 = ssub.s32 %s13, 2
      // Predicated region
      $region53: #{single_conv_forward.2} parent=51 // pred_check
        %p3130 = pneg %p171
      $region54: #{single_conv_forward.2} parent=51 // pred_check_branch
        %3132 = sbr.rel (%p3130) target = $region56
      $region55: #{single_conv_forward.2} parent=51 // pred_region
        %s3133 = smul.u32 8, %s25
        %p3134 = scmp.lt.s32.totalorder %s24, 1
        %s3135 = scalar_select %p3134, %s24, 1
        %p3136 = scmp.lt.s32.totalorder %s3133, 15
        %s3137 = scalar_select %p3136, %s3133, 15
        %s3138 = smul.addr %s3137, 2
        %s3139 = smul.addr %s3135, 32
        %s3140 = sadd.s32 %s3138, %s3139
        %s3141 = smul.addr %s3140, 8
        %s3142 = scalar_lea.vmem %s4, %s3141
      $region56: #{single_conv_forward.2} parent=51 // pred_fallthru
        _
      // Predicated region
      $region57: #{single_conv_forward.2} parent=51 // pred_check
        %p3143 = pneg %p199
      $region58: #{single_conv_forward.2} parent=51 // pred_check_branch
        %3145 = sbr.rel (%p3143) target = $region60
      $region59: #{single_conv_forward.2} parent=51 // pred_region
        %p3146 = scmp.lt.s32.totalorder %s24, 1
        %s3147 = scalar_select %p3146, %s24, 1
        %p3148 = scmp.lt.s32.totalorder %s25, 1
        %s3149 = scalar_select %p3148, %s25, 1
        %s3150 = smul.addr %s3147, 2
        %s3151 = sadd.s32 %s3149, %s3150
        %s3152 = scalar_lea.vmem %s5, %s3151
      $region60: #{single_conv_forward.2} parent=51 // pred_fallthru
        _
      // Predicated region
      $region61: #{single_conv_forward.2} parent=51 // pred_check
        %p3153 = pneg %p227
      $region62: #{single_conv_forward.2} parent=51 // pred_check_branch
        %3155 = sbr.rel (%p3153) target = $region64
      $region63: #{single_conv_forward.2} parent=51 // pred_region
        %p3156 = scmp.lt.s32.totalorder %s24, 1
        %s3157 = scalar_select %p3156, %s24, 1
        %p3158 = scmp.lt.s32.totalorder %s25, 1
        %s3159 = scalar_select %p3158, %s25, 1
        %s3160 = smul.addr %s3157, 2
        %s3161 = sadd.s32 %s3159, %s3160
        %s3162 = scalar_lea.vmem %s6, %s3161
      $region64: #{single_conv_forward.2} parent=51 // pred_fallthru
        _
    $region52: #{single_conv_forward.2} parent=5 // pred_fallthru
      _
  $region6: #{single_conv_forward.2} parent=0 // loop_footer
    %s17 = sadd.s32 1, %s13
  $region7: #{single_conv_forward.2} parent=0 // loop_footer_branch
    %12 = sbr.rel target = $region3
  $region8: #{single_conv_forward.2} parent=0 // loop_exit
    _

</llo_original>
